<compile_context>
chip_gen: v7x
topology: tpu7x:2x2x1
jax: 0.10.0
libtpu: 0.0.40
codegen_flags: <defaults>
</compile_context>

<pallas_src>
import functools
import math

import numpy as np
import jax
import jax.numpy as jnp
from jax import lax
from jax.experimental import pallas as pl
from jax.experimental.pallas import tpu as pltpu


# ------------------------------- hardware-aware knobs -------------------------------

_MIB = 1024 * 1024


def _vmem_capacity_bytes():
    try:
        return int(pltpu.get_tpu_info().vmem_capacity_bytes)
    except Exception:
        return 64 * _MIB          # conservative (v7x-sized) fallback


_VMEM_CAP = _vmem_capacity_bytes()
# 512-row slabs reach ~85% of HBM roofline on the 128-MiB-VMEM parts (v5e/v6e); keep 256 on v7x.
ROW_TILE = 512 if _VMEM_CAP >= 96 * _MIB else 256
VMEM_LIMIT = int(min(_VMEM_CAP - 12 * _MIB, 100 * _MIB))


def _round_up(n, m):
    return -(-n // m) * m


# ------------------------- relative-shift (Toeplitz gather) support -------------------------
# We need out[r, c] = band[r, c + (L-1-r)]  (a per-row lane shift; never wraps since Wb >= 2L-1).
# Preferred: one strided lane-rotate.  Fallback: log2(L) static rolls + per-row selects.

_STRIDED_PARAMS = {
    # tag -> (shift, stride) achieving per-row amount == r - (L-1) under that op convention
    "jnp":     lambda n, w: ((w - (n - 1)) % w, 1),
    "inv_mod": lambda n, w: ((n - 1) % w, w - 1),
    "inv_neg": lambda n, w: ((n - 1) % w, -1),
}

_ROLL_CFG = {"plain": "roll+", "strided": None, "probed": False}


def _probe_rolls():
    """Tiny eager pallas_calls that (a) learn pltpu.roll's shift convention and (b) check whether
    the strided per-row rotate is supported and matches the needed semantics.  Must run outside jit;
    on any failure we fall back to the always-supported select network."""
    if _ROLL_CFG["probed"]:
        return
    _ROLL_CFG["probed"] = True
    R, W = 16, 256
    x = np.arange(R * W, dtype=np.float32).reshape(R, W)
    xj = jnp.asarray(x)

    def run(kern):
        out = pl.pallas_call(kern, out_shape=jax.ShapeDtypeStruct((R, W), jnp.float32))(xj)
        return np.asarray(jax.block_until_ready(out))

    try:
        def k_plain(x_ref, o_ref):
            o_ref[...] = pltpu.roll(x_ref[...], 3, axis=1)
        y = run(k_plain)
        if np.array_equal(y, np.roll(x, 3, axis=1)):
            _ROLL_CFG["plain"] = "roll+"
        elif np.array_equal(y, np.roll(x, -3, axis=1)):
            _ROLL_CFG["plain"] = "roll-"
        else:
            _ROLL_CFG["plain"] = "concat"
    except Exception:
        _ROLL_CFG["plain"] = "concat"

    want = np.stack([np.roll(x[r], -(R - 1 - r)) for r in range(R)])
    for tag, pfn in _STRIDED_PARAMS.items():
        shift, stride = pfn(R, W)

        def k_str(x_ref, o_ref, shift=shift, stride=stride):
            o_ref[...] = pltpu.roll(x_ref[...], shift, axis=1, stride=stride, stride_axis=0)

        try:
            y = run(k_str)
        except Exception:
            continue
        if np.array_equal(y, want):
            _ROLL_CFG["strided"] = tag
            break


def _rel_shift(band, seq_len, roll_mode):
    """band: (L, Wb) f32, Wb a lane multiple >= 2L-1.  Returns (L, L): out[r,c] = band[r, c+(L-1-r)]."""
    strided_tag, plain_mode = roll_mode
    L = seq_len
    wb = band.shape[-1]
    if strided_tag is not None:
        shift, stride = _STRIDED_PARAMS[strided_tag](L, wb)
        return pltpu.roll(band, shift, axis=1, stride=stride, stride_axis=0)[:, :L]
    # fallback: binary-decomposed per-row left shift (static rolls on the XLU + selects on the VPU)
    r = lax.broadcasted_iota(jnp.int32, (L, 1), 0)
    s = (L - 1) - r
    x = band
    for t in range(max(1, (L - 1).bit_length())):
        a = 1 << t
        if plain_mode == "roll+":
            rolled = pltpu.roll(x, (wb - a) % wb, axis=1)
        elif plain_mode == "roll-":
            rolled = pltpu.roll(x, a, axis=1)
        else:
            rolled = jnp.concatenate([x[:, a:], x[:, :a]], axis=1)
        x = jnp.where((s & a) != 0, rolled, x)
    return x[:, :L]


# ----------------------------- small math helpers (in-kernel) -----------------------------

def _layer_norm(x, eps):
    mu = jnp.mean(x, axis=-1, keepdims=True)
    xc = x - mu
    var = jnp.mean(xc * xc, axis=-1, keepdims=True)
    return xc * lax.rsqrt(var + eps)


def _gelu_new(x):
    return 0.5 * x * (1.0 + jnp.tanh(math.sqrt(2.0 / math.pi) * (x + 0.044715 * x * x * x)))


# --------------------------------------------- kernels ---------------------------------------------

def qkv_kernel(x_ref, wq_ref, bq_ref, wk_ref, bk_ref, wv_ref, bv_ref, q_ref, k_ref, v_ref,
               *, eps, scale):
    """Pre-LayerNorm (no affine) + in_proj_qk / in_proj_v on one (TM, H) row tile of the (B*L, H)
    activation stream.  q is pre-scaled by 1/sqrt(3*head_dim): this covers the content and c2p
    score terms (the p2c term gets its scale folded into the position table outside)."""
    ln = _layer_norm(x_ref[...], eps).astype(jnp.bfloat16)
    q = jnp.dot(ln, wq_ref[...], preferred_element_type=jnp.float32) + bq_ref[...]
    k = jnp.dot(ln, wk_ref[...], preferred_element_type=jnp.float32) + bk_ref[...]
    v = jnp.dot(ln, wv_ref[...], preferred_element_type=jnp.float32) + bv_ref[...]
    q_ref[...] = (q * scale).astype(q_ref.dtype)
    k_ref[...] = k.astype(k_ref.dtype)
    v_ref[...] = v.astype(v_ref.dtype)


def attn_kernel(q_ref, k_ref, v_ref, krel_ref, qrel_ref, mask_ref, ctx_ref, *probs_refs,
                heads, hd, seq_len, roll_mode, with_probs):
    """One (batch, head-group) step.  q/k/v/ctx blocks are (L, heads*hd) (128-lane dense for hd=64
    head pairs); krel/qrel are the per-delta expanded relative position tables (Wb, heads*hd).

    Per head: content + c2p + p2c scores (all MXU), the Toeplitz gather done as band matmuls +
    a per-row relative shift, masked softmax, context.  The ctx block is stored once, full width."""
    L = seq_len
    mask_row = mask_ref[...] > 0.5                          # (1, L), True = padded key position
    q = q_ref[...]
    k = k_ref[...]
    v = v_ref[...]
    krel = krel_ref[...]
    qrel = qrel_ref[...]
    dn = (((1,), (1,)), ((), ()))                           # contract feature dim: A @ B.T

    ctx_parts = []
    for h in range(heads):
        sl = slice(h * hd, (h + 1) * hd)
        q_h, k_h, v_h = q[:, sl], k[:, sl], v[:, sl]
        s = lax.dot_general(q_h, k_h, dn, preferred_element_type=jnp.float32)             # (L, L)
        band_cp = lax.dot_general(q_h, krel[:, sl], dn, preferred_element_type=jnp.float32)  # (L, Wb)
        band_pc = lax.dot_general(k_h, qrel[:, sl], dn, preferred_element_type=jnp.float32)  # (L, Wb)
        rel_cp = _rel_shift(band_cp, L, roll_mode)          # [query, key]
        rel_pc = _rel_shift(band_pc, L, roll_mode).T        # rows were keys -> transpose to [query, key]
        scores = s + rel_cp + rel_pc
        scores = jnp.where(mask_row, -jnp.inf, scores)
        m = jnp.maximum(jnp.max(scores, axis=-1, keepdims=True), -1e30)   # NaN-safe for all-masked rows
        e = jnp.exp(scores - m)                             # exactly 0 at masked key positions
        denom = jnp.sum(e, axis=-1, keepdims=True)
        probs = e / jnp.maximum(denom, 1e-30)               # exact softmax (no approx reciprocal)
        ctx_parts.append(jnp.dot(probs.astype(jnp.bfloat16), v_h,
                                 preferred_element_type=jnp.float32))
        if with_probs:
            probs_refs[0][h] = probs
    # single lane-dense full-width store (128-wide for hd=64 head pairs)
    ctx_ref[...] = jnp.concatenate(ctx_parts, axis=-1).astype(ctx_ref.dtype)


def out_ffn_kernel(ctx_ref, x_ref, w_out_ref, b_out_ref, g_ref, beta_ref, w1a_ref, w1b_ref, w2_ref,
                   o_ref, *, eps):
    """Fused: out_proj + affine post-LN + residual, then FFN (LN -> Linear -> GeGLU -> LN -> Linear)
    + residual, on one (TM, H) row tile.  w1 is split into value/gate halves to halve the live
    (TM, 2I) intermediate."""
    y = jnp.dot(ctx_ref[...], w_out_ref[...], preferred_element_type=jnp.float32) + b_out_ref[...]
    x1 = x_ref[...] + _layer_norm(y, eps) * g_ref[...] + beta_ref[...]
    ln1 = _layer_norm(x1, eps).astype(jnp.bfloat16)
    hv = jnp.dot(ln1, w1a_ref[...], preferred_element_type=jnp.float32)   # value half
    hg = jnp.dot(ln1, w1b_ref[...], preferred_element_type=jnp.float32)   # gate half
    gl = _layer_norm(hv * _gelu_new(hg), eps).astype(jnp.bfloat16)
    o_ref[...] = x1 + jnp.dot(gl, w2_ref[...], preferred_element_type=jnp.float32)


# --------------------------------------------- wrappers ---------------------------------------------

def pallas_qkv(x, wq, bq, wk, bk, wv, bv, *, eps, scale):
    N, H = x.shape
    tm = min(N, ROW_TILE)
    # NOTE: if N % tm != 0, the padded tail rows of the last tile run LN/matmul on stale buffer
    # contents; those rows are never written back so this is benign.
    row = pl.BlockSpec((tm, H), lambda i: (i, 0))
    # TODO(synk): on v7x these constant weight blocks would ideally be single-buffered
    #             (pipeline_mode=pl.Buffered(1)) to save VMEM; left default for portability.
    const = lambda shape: pl.BlockSpec(shape, lambda i: (0, 0))
    out = jax.ShapeDtypeStruct((N, H), jnp.bfloat16)
    return pl.pallas_call(
        functools.partial(qkv_kernel, eps=eps, scale=scale),
        grid=(pl.cdiv(N, tm),),
        in_specs=[row, const((H, H)), const((1, H)), const((H, H)), const((1, H)),
                  const((H, H)), const((1, H))],
        out_specs=(row, row, row),
        out_shape=(out, out, out),
        compiler_params=pltpu.CompilerParams(
            dimension_semantics=("parallel",), vmem_limit_bytes=VMEM_LIMIT),
    )(x, wq, bq, wk, bk, wv, bv)


def pallas_attention(q, k, v, krel, qrel, mask_f, *, nh, hd, roll_mode, with_probs):
    B, L, H = q.shape
    wb = krel.shape[0]
    heads = max(1, min(nh, 128 // hd)) if hd <= 128 else 1      # head pairs at hd=64 -> 128-lane blocks
    while nh % heads:
        heads -= 1
    wg = heads * hd
    act = pl.BlockSpec((None, L, wg), lambda b, g: (b, 0, g))
    rel = pl.BlockSpec((wb, wg), lambda b, g: (0, g))
    msk = pl.BlockSpec((None, 1, L), lambda b, g: (b, 0, 0))
    ctx_spec = pl.BlockSpec((None, L, wg), lambda b, g: (b, 0, g))
    ctx_shape = jax.ShapeDtypeStruct((B, L, H), jnp.bfloat16)
    if with_probs:
        out_specs = (ctx_spec, pl.BlockSpec((None, heads, L, L), lambda b, g: (b, g, 0, 0)))
        out_shape = (ctx_shape, jax.ShapeDtypeStruct((B, nh, L, L), jnp.float32))
    else:
        out_specs, out_shape = ctx_spec, ctx_shape
    res = pl.pallas_call(
        functools.partial(attn_kernel, heads=heads, hd=hd, seq_len=L,
                          roll_mode=roll_mode, with_probs=with_probs),
        grid=(B, nh // heads),
        in_specs=[act, act, act, rel, rel, msk],
        out_specs=out_specs,
        out_shape=out_shape,
        compiler_params=pltpu.CompilerParams(
            dimension_semantics=("parallel", "parallel"), vmem_limit_bytes=VMEM_LIMIT),
    )(q, k, v, krel, qrel, mask_f)
    if with_probs:
        return res
    return res, None


def pallas_out_ffn(ctx, x, w_out, b_out, ln_g, ln_b, w1a, w1b, w2, *, eps):
    N, H = x.shape
    inter = w1a.shape[1]
    tm = min(N, ROW_TILE)
    row = pl.BlockSpec((tm, H), lambda i: (i, 0))
    const = lambda shape: pl.BlockSpec(shape, lambda i: (0, 0))
    return pl.pallas_call(
        functools.partial(out_ffn_kernel, eps=eps),
        grid=(pl.cdiv(N, tm),),
        in_specs=[row, row, const((H, H)), const((1, H)), const((1, H)), const((1, H)),
                  const((H, inter)), const((H, inter)), const((inter, H))],
        out_specs=row,
        out_shape=jax.ShapeDtypeStruct((N, H), jnp.float32),
        compiler_params=pltpu.CompilerParams(
            dimension_semantics=("parallel",), vmem_limit_bytes=VMEM_LIMIT),
    )(ctx, x, w_out, b_out, ln_g, ln_b, w1a, w1b, w2)


# ------------------------------------ relative position buckets -------------------------------------

def make_log_bucket_position(relative_pos, bucket_size, max_position):
    sign = np.sign(relative_pos)
    mid = bucket_size // 2
    abs_pos = np.where((relative_pos < mid) & (relative_pos > -mid),
                       mid - 1,
                       np.minimum(np.abs(relative_pos), max_position - 1))
    log_pos = np.ceil(np.log(abs_pos.astype(np.float64) / mid)
                      / math.log((max_position - 1) / mid) * (mid - 1)).astype(np.int64) + mid
    bucket_pos = np.where(abs_pos <= mid, relative_pos, log_pos * sign)
    return bucket_pos.astype(np.int64)


def build_relative_shift_tables(seq_len, bucket_size, max_position):
    """Bucket index per band column for the c2p / p2c Toeplitz bands.
    Band column d corresponds to delta = (L-1) - d for c2p and delta = d - (L-1) for p2c, so both
    bands use the same per-row relative shift inside the kernel."""
    # TODO(synk): torch rebuilds position_indices with max_position=512 when seq_len exceeds
    #             max_position_embeddings; here tables assume seq_len <= max_position_embeddings.
    L = seq_len
    deltas = np.arange(-(L - 1), L)
    f = (bucket_size - 1 + make_log_bucket_position(deltas, bucket_size, max_position)).astype(np.int32)
    wb = _round_up(2 * L - 1, 128)
    idx_pc = np.zeros((wb,), np.int32)
    idx_pc[:2 * L - 1] = f                       # delta = d - (L-1)
    idx_cp = np.zeros((wb,), np.int32)
    idx_cp[:2 * L - 1] = f[::-1]                 # delta = (L-1) - d
    return jnp.asarray(idx_cp), jnp.asarray(idx_pc)


# ----------------------------------------- full Encoder fwd -----------------------------------------

def encoder_forward(params, hidden_states, attention_mask, relative_embedding, idx_cp, idx_pc,
                    cfg, with_probs=False):
    """hidden_states: (L, B, H); attention_mask: (B, 1, 1, L) bool (True = masked key);
    relative_embedding: (2*bucket-1, H); idx_cp / idx_pc: (Wb,) int32 band-column -> bucket tables.
    Returns ([num_layers+1 hidden states of shape (L, B, H)], [per-layer probs if requested])."""
    L, B, H = hidden_states.shape
    nh = cfg["num_attention_heads"]
    hd = H // nh
    inter = cfg["intermediate_size"]
    eps = cfg["layer_norm_eps"]
    scale = 1.0 / math.sqrt(3 * hd)
    roll_mode = (_ROLL_CFG["strided"], _ROLL_CFG["plain"])

    mask_f = attention_mask.reshape(B, 1, L).astype(jnp.float32)
    # one-time layout change to batch-major; per-layer kernels consume (B*L, H) row slabs and the
    # attention core per-batch (L, 128)-wide head-group slabs — no per-layer transposes.
    x_flat = hidden_states.transpose(1, 0, 2).reshape(B * L, H).astype(jnp.float32)

    internal_hidden, probs_list = [], []
    for lp in params["layers"]:
        w_qk, b_qk = lp["w_qk"], lp["b_qk"]
        # relative-embedding projection + per-delta band tables: tiny & activation-independent -> XLA
        rel_proj = relative_embedding @ w_qk + b_qk                   # (Kp, 2H)
        qpos, kpos = rel_proj[:, :H], rel_proj[:, H:]
        krel = jnp.take(kpos, idx_cp, axis=0).astype(jnp.bfloat16)    # (Wb, H)
        qrel = (jnp.take(qpos, idx_pc, axis=0) * scale).astype(jnp.bfloat16)

        q, k, v = pallas_qkv(
            x_flat,
            w_qk[:, :H].astype(jnp.bfloat16), b_qk[:, :H],
            w_qk[:, H:].astype(jnp.bfloat16), b_qk[:, H:],
            lp["w_v"].astype(jnp.bfloat16), lp["b_v"],
            eps=eps, scale=scale)

        ctx, probs = pallas_attention(
            q.reshape(B, L, H), k.reshape(B, L, H), v.reshape(B, L, H),
            krel, qrel, mask_f, nh=nh, hd=hd, roll_mode=roll_mode, with_probs=with_probs)

        x_flat = pallas_out_ffn(
            ctx.reshape(B * L, H), x_flat,
            lp["w_out"].astype(jnp.bfloat16), lp["b_out"], lp["ln_g"], lp["ln_b"],
            lp["w1"][:, :inter].astype(jnp.bfloat16), lp["w1"][:, inter:].astype(jnp.bfloat16),
            lp["w2"].astype(jnp.bfloat16), eps=eps)

        internal_hidden.append(x_flat.reshape(B, L, H))
        if with_probs:
            probs_list.append(probs)

    hidden_list = [hidden_states] + [h.transpose(1, 0, 2) for h in internal_hidden]
    return hidden_list, probs_list


# ----------------------------------- pure-JAX reference (for tests) -----------------------------------

def reference_forward(params, hidden_states, attention_mask, relative_embedding, cfg):
    L, B, H = hidden_states.shape
    nh = cfg["num_attention_heads"]
    hd = H // nh
    inter = cfg["intermediate_size"]
    eps = cfg["layer_norm_eps"]
    scale = 1.0 / math.sqrt(3 * hd)
    bucket, maxpos = cfg["position_bucket_size"], cfg["max_position_embeddings"]

    pos = np.arange(maxpos, dtype=np.int64)
    pidx = bucket - 1 + make_log_bucket_position(pos[:, None] - pos[None, :], bucket, maxpos)
    pidx = jnp.asarray(pidx[:L, :L], dtype=jnp.int32)
    mask = attention_mask.reshape(B, 1, 1, L)

    x = hidden_states
    hiddens, probs_all = [x], []
    for lp in params["layers"]:
        hs = _layer_norm(x, eps)
        qk = hs @ lp["w_qk"] + lp["b_qk"]
        q, k = qk[..., :H], qk[..., H:]
        v = hs @ lp["w_v"] + lp["b_v"]
        split = lambda t: t.reshape(L, B, nh, hd).transpose(1, 2, 0, 3)       # (B, nh, L, hd)
        qh, kh, vh = split(q), split(k), split(v)
        scores = jnp.einsum("bhqd,bhkd->bhqk", qh, kh) * scale
        relp = relative_embedding @ lp["w_qk"] + lp["b_qk"]
        qpos = relp[:, :H].reshape(-1, nh, hd)
        kpos = relp[:, H:].reshape(-1, nh, hd)
        c_p = jnp.einsum("bhqd,phd->bhqp", qh, kpos) * scale
        p_c = jnp.einsum("bhkd,phd->bhpk", kh, qpos) * scale
        idxb = jnp.broadcast_to(pidx[None, None], (B, nh, L, L))
        scores = scores + jnp.take_along_axis(c_p, idxb, axis=3) + jnp.take_along_axis(p_c, idxb, axis=2)
        scores = jnp.where(mask, -jnp.inf, scores)
        probs = jax.nn.softmax(scores, axis=-1)
        probs = jnp.where(mask, 0.0, probs)
        probs = jnp.where(jnp.isnan(probs), 0.0, probs)
        ctx = jnp.einsum("bhqk,bhkd->bhqd", probs, vh).transpose(2, 0, 1, 3).reshape(L, B, H)
        out = ctx @ lp["w_out"] + lp["b_out"]
        x = x + _layer_norm(out, eps) * lp["ln_g"] + lp["ln_b"]
        h1 = _layer_norm(x, eps) @ lp["w1"]
        gl = _layer_norm(h1[..., :inter] * _gelu_new(h1[..., inter:]), eps)
        x = x + gl @ lp["w2"]
        hiddens.append(x)
        probs_all.append(probs)
    return hiddens, probs_all


# ------------------------------------------ parameter init ------------------------------------------

def init_params(key, cfg):
    H = cfg["hidden_size"]
    inter = cfg["intermediate_size"]
    layers = []
    for i in range(cfg["num_hidden_layers"]):
        key, *ks = jax.random.split(key, 9)
        ffn_scale = math.sqrt(1.0 / (2.0 * (1 + i)))  # Encoder.__init__ rescaling of mlp weights
        layers.append({
            "w_qk": jax.random.normal(ks[0], (H, 2 * H), jnp.float32) * 0.02,
            "b_qk": jax.random.normal(ks[1], (1, 2 * H), jnp.float32) * 0.02,
            "w_v": jax.random.normal(ks[2], (H, H), jnp.float32) * 0.02,
            "b_v": jax.random.normal(ks[3], (1, H), jnp.float32) * 0.02,
            "w_out": jax.random.normal(ks[4], (H, H), jnp.float32) * 0.02,
            "b_out": jax.random.normal(ks[5], (1, H), jnp.float32) * 0.02,
            "ln_g": jnp.ones((1, H), jnp.float32),
            "ln_b": jnp.zeros((1, H), jnp.float32),
            "w1": jax.random.normal(ks[6], (H, 2 * inter), jnp.float32) * 0.02 * ffn_scale,
            "w2": jax.random.normal(ks[7], (inter, H), jnp.float32) * 0.02 * ffn_scale,
        })
    return {"layers": layers}


# ------------------------------------------------ main ------------------------------------------------

if __name__ == "__main__":
    cfg = {
        "hidden_size": 32,
        "num_attention_heads": 4,
        "intermediate_size": 64,
        "num_hidden_layers": 2,
        "max_position_embeddings": 64,
        "position_bucket_size": 8,
        "layer_norm_eps": 1e-7,
    }
    L, B, H = 8, 2, cfg["hidden_size"]
    Kp = 2 * cfg["position_bucket_size"] - 1

    key = jax.random.PRNGKey(0)
    k_param, k_h, k_rel = jax.random.split(key, 3)
    params = init_params(k_param, cfg)

    hidden_states = jax.random.normal(k_h, (L, B, H), jnp.float32)          # (seq, batch, hidden)
    relative_embedding = jax.random.normal(k_rel, (Kp, H), jnp.float32)     # (2*bucket-1, hidden)
    lengths = np.array([L, L - 2])                                          # batch 1 has 2 padded keys
    attention_mask = jnp.asarray(
        (np.arange(L)[None, :] >= lengths[:, None]).reshape(B, 1, 1, L))    # bool, True = masked

    _probe_rolls()                                                          # pick shift implementation
    idx_cp, idx_pc = build_relative_shift_tables(
        L, cfg["position_bucket_size"], cfg["max_position_embeddings"])

    # perf path (no quadratic attention-probs output)
    fwd = jax.jit(functools.partial(encoder_forward, cfg=cfg))
    hidden_list, _ = fwd(params, hidden_states, attention_mask, relative_embedding, idx_cp, idx_pc)
    jax.block_until_ready(hidden_list[-1])

    # probs-enabled path + check against the pure-JAX reference
    fwd_p = jax.jit(functools.partial(encoder_forward, cfg=cfg, with_probs=True))
    hidden_list_p, probs_list = fwd_p(params, hidden_states, attention_mask, relative_embedding,
                                      idx_cp, idx_pc)
    jax.block_until_ready(probs_list[-1])

    ref_hidden, ref_probs = reference_forward(params, hidden_states, attention_mask,
                                              relative_embedding, cfg)

    out = np.asarray(hidden_list_p[-1])
    probs = np.asarray(probs_list[-1])
    assert out.shape == (L, B, H) and probs.shape == (B, cfg["num_attention_heads"], L, L)
    assert np.isfinite(out).all() and np.isfinite(probs).all()
    assert np.all(probs[1, :, :, L - 2:] == 0.0)                            # masked keys -> zero prob
    assert np.max(np.abs(probs - np.asarray(ref_probs[-1]))) < 2e-2         # attention math vs reference
    assert np.max(np.abs(out - np.asarray(ref_hidden[-1]))) < 0.25          # bf16-MXU tolerance
    assert np.isfinite(np.asarray(hidden_list[-1])).all()
    # TODO(synk): dropout layers are identity here (eval-mode forward); training-mode dropout not modeled.
    print("KERNEL_OK")
</pallas_src>

<mosaic_0001>
module attributes {stable_mosaic.version = 11 : i64} {
  func.func @k_plain(%arg0: memref<16x256xf32, #tpu.memory_space<vmem>>, %arg1: memref<16x256xf32, #tpu.memory_space<vmem>>) attributes {dimension_semantics = [], scalar_prefetch = 0 : i64, scratch_operands = 0 : i64, tpu.core_type = #tpu.core_type<tc>} {
    %c0 = arith.constant 0 : index
    %c0_0 = arith.constant 0 : index
    %0 = vector.load %arg0[%c0, %c0_0] : memref<16x256xf32, #tpu.memory_space<vmem>>, vector<16x256xf32>
    %c3_i32 = arith.constant 3 : i32
    %1 = tpu.dynamic_rotate %0 by %c3_i32 dim 1 : vector<16x256xf32>, i32 -> vector<16x256xf32>
    %c0_1 = arith.constant 0 : index
    %c0_2 = arith.constant 0 : index
    %2 = vector.load %arg1[%c0_1, %c0_2] : memref<16x256xf32, #tpu.memory_space<vmem>>, vector<16x256xf32>
    tpu.vector_store %arg1[%c0_1, %c0_2], %1 {strides = array<i32>} : memref<16x256xf32, #tpu.memory_space<vmem>>, vector<16x256xf32>,
    return
  }
}

module attributes {stable_mosaic.version = 11 : i64} {
  func.func @k_str(%arg0: memref<16x256xf32, #tpu.memory_space<vmem>>, %arg1: memref<16x256xf32, #tpu.memory_space<vmem>>) attributes {dimension_semantics = [], scalar_prefetch = 0 : i64, scratch_operands = 0 : i64, tpu.core_type = #tpu.core_type<tc>} {
    %c0 = arith.constant 0 : index
    %c0_0 = arith.constant 0 : index
    %0 = vector.load %arg0[%c0, %c0_0] : memref<16x256xf32, #tpu.memory_space<vmem>>, vector<16x256xf32>
    %c241_i32 = arith.constant 241 : i32
    %1 = tpu.dynamic_rotate %0 by %c241_i32 dim 1 {stride = 1 : si32, stride_dimension = 0 : si32} : vector<16x256xf32>, i32 -> vector<16x256xf32>
    %c0_1 = arith.constant 0 : index
    %c0_2 = arith.constant 0 : index
    %2 = vector.load %arg1[%c0_1, %c0_2] : memref<16x256xf32, #tpu.memory_space<vmem>>, vector<16x256xf32>
    tpu.vector_store %arg1[%c0_1, %c0_2], %1 {strides = array<i32>} : memref<16x256xf32, #tpu.memory_space<vmem>>, vector<16x256xf32>,
    return
  }
}

module attributes {stable_mosaic.version = 11 : i64} {
  func.func @k_str(%arg0: memref<16x256xf32, #tpu.memory_space<vmem>>, %arg1: memref<16x256xf32, #tpu.memory_space<vmem>>) attributes {dimension_semantics = [], scalar_prefetch = 0 : i64, scratch_operands = 0 : i64, tpu.core_type = #tpu.core_type<tc>} {
    %c0 = arith.constant 0 : index
    %c0_0 = arith.constant 0 : index
    %0 = vector.load %arg0[%c0, %c0_0] : memref<16x256xf32, #tpu.memory_space<vmem>>, vector<16x256xf32>
    %c15_i32 = arith.constant 15 : i32
    %1 = tpu.dynamic_rotate %0 by %c15_i32 dim 1 {stride = 255 : si32, stride_dimension = 0 : si32} : vector<16x256xf32>, i32 -> vector<16x256xf32>
    %c0_1 = arith.constant 0 : index
    %c0_2 = arith.constant 0 : index
    %2 = vector.load %arg1[%c0_1, %c0_2] : memref<16x256xf32, #tpu.memory_space<vmem>>, vector<16x256xf32>
    tpu.vector_store %arg1[%c0_1, %c0_2], %1 {strides = array<i32>} : memref<16x256xf32, #tpu.memory_space<vmem>>, vector<16x256xf32>,
    return
  }
}

module attributes {stable_mosaic.version = 11 : i64} {
  func.func @qkv_kernel(%arg0: i32, %arg1: memref<16x32xf32, #tpu.memory_space<vmem>>, %arg2: memref<32x32xbf16, #tpu.memory_space<vmem>>, %arg3: memref<1x32xf32, #tpu.memory_space<vmem>>, %arg4: memref<32x32xbf16, #tpu.memory_space<vmem>>, %arg5: memref<1x32xf32, #tpu.memory_space<vmem>>, %arg6: memref<32x32xbf16, #tpu.memory_space<vmem>>, %arg7: memref<1x32xf32, #tpu.memory_space<vmem>>, %arg8: memref<16x32xbf16, #tpu.memory_space<vmem>>, %arg9: memref<16x32xbf16, #tpu.memory_space<vmem>>, %arg10: memref<16x32xbf16, #tpu.memory_space<vmem>>) attributes {dimension_semantics = [#tpu.dimension_semantics<parallel>], iteration_bounds = array<i64: 1>, scalar_prefetch = 0 : i64, scratch_operands = 0 : i64, tpu.core_type = #tpu.core_type<tc>, window_params = [{transform_indices = @transform_0, window_bounds = array<i64: 16, 32>}, {pipeline_mode = #tpu.pipeline_mode<synchronous>, transform_indices = @transform_1, window_bounds = array<i64: 32, 32>}, {pipeline_mode = #tpu.pipeline_mode<synchronous>, transform_indices = @transform_2, window_bounds = array<i64: 1, 32>}, {pipeline_mode = #tpu.pipeline_mode<synchronous>, transform_indices = @transform_3, window_bounds = array<i64: 32, 32>}, {pipeline_mode = #tpu.pipeline_mode<synchronous>, transform_indices = @transform_4, window_bounds = array<i64: 1, 32>}, {pipeline_mode = #tpu.pipeline_mode<synchronous>, transform_indices = @transform_5, window_bounds = array<i64: 32, 32>}, {pipeline_mode = #tpu.pipeline_mode<synchronous>, transform_indices = @transform_6, window_bounds = array<i64: 1, 32>}, {transform_indices = @transform_7, window_bounds = array<i64: 16, 32>}, {transform_indices = @transform_8, window_bounds = array<i64: 16, 32>}, {transform_indices = @transform_9, window_bounds = array<i64: 16, 32>}]} {
    %c0 = arith.constant 0 : index
    %c0_0 = arith.constant 0 : index
    %0 = vector.load %arg1[%c0, %c0_0] : memref<16x32xf32, #tpu.memory_space<vmem>>, vector<16x32xf32>
    %cst = arith.constant dense<0.000000e+00> : vector<16xf32>
    %1 = vector.multi_reduction <add>, %0, %cst [1] : vector<16x32xf32> to vector<16xf32>
    %2 = vector.shape_cast %1 : vector<16xf32> to vector<16x1xf32>
    %cst_1 = arith.constant 3.200000e+01 : f32
    %3 = vector.broadcast %cst_1 : f32 to vector<16x1xf32>
    %4 = arith.divf %2, %3 : vector<16x1xf32>
    %5 = vector.broadcast %4 : vector<16x1xf32> to vector<16x32xf32>
    %6 = arith.subf %0, %5 : vector<16x32xf32>
    %7 = arith.mulf %6, %6 : vector<16x32xf32>
    %cst_2 = arith.constant dense<0.000000e+00> : vector<16xf32>
    %8 = vector.multi_reduction <add>, %7, %cst_2 [1] : vector<16x32xf32> to vector<16xf32>
    %9 = vector.shape_cast %8 : vector<16xf32> to vector<16x1xf32>
    %cst_3 = arith.constant 3.200000e+01 : f32
    %10 = vector.broadcast %cst_3 : f32 to vector<16x1xf32>
    %11 = arith.divf %9, %10 : vector<16x1xf32>
    %cst_4 = arith.constant 1.000000e-07 : f32
    %12 = vector.broadcast %cst_4 : f32 to vector<16x1xf32>
    %13 = arith.addf %11, %12 : vector<16x1xf32>
    %14 = math.rsqrt %13 : vector<16x1xf32>
    %15 = vector.broadcast %14 : vector<16x1xf32> to vector<16x32xf32>
    %16 = arith.mulf %6, %15 : vector<16x32xf32>
    %17 = arith.truncf %16 : vector<16x32xf32> to vector<16x32xbf16>
    %c0_5 = arith.constant 0 : index
    %c0_6 = arith.constant 0 : index
    %18 = vector.load %arg2[%c0_5, %c0_6] : memref<32x32xbf16, #tpu.memory_space<vmem>>, vector<32x32xbf16>
    %cst_7 = arith.constant dense<0.000000e+00> : vector<16x32xf32>
    %19 = tpu.matmul %17, %18, %cst_7 {dimension_numbers = #tpu.dot_dimension_numbers<[1], [0], [0], [1], [0, 0, 1, 1], [], []>} : vector<16x32xbf16>, vector<32x32xbf16>, vector<16x32xf32> -> vector<16x32xf32>
    %c0_8 = arith.constant 0 : index
    %c0_9 = arith.constant 0 : index
    %20 = vector.load %arg3[%c0_8, %c0_9] : memref<1x32xf32, #tpu.memory_space<vmem>>, vector<1x32xf32>
    %21 = vector.broadcast %20 : vector<1x32xf32> to vector<16x32xf32>
    %22 = arith.addf %19, %21 : vector<16x32xf32>
    %c0_10 = arith.constant 0 : index
    %c0_11 = arith.constant 0 : index
    %23 = vector.load %arg4[%c0_10, %c0_11] : memref<32x32xbf16, #tpu.memory_space<vmem>>, vector<32x32xbf16>
    %cst_12 = arith.constant dense<0.000000e+00> : vector<16x32xf32>
    %24 = tpu.matmul %17, %23, %cst_12 {dimension_numbers = #tpu.dot_dimension_numbers<[1], [0], [0], [1], [0, 0, 1, 1], [], []>} : vector<16x32xbf16>, vector<32x32xbf16>, vector<16x32xf32> -> vector<16x32xf32>
    %c0_13 = arith.constant 0 : index
    %c0_14 = arith.constant 0 : index
    %25 = vector.load %arg5[%c0_13, %c0_14] : memref<1x32xf32, #tpu.memory_space<vmem>>, vector<1x32xf32>
    %26 = vector.broadcast %25 : vector<1x32xf32> to vector<16x32xf32>
    %27 = arith.addf %24, %26 : vector<16x32xf32>
    %c0_15 = arith.constant 0 : index
    %c0_16 = arith.constant 0 : index
    %28 = vector.load %arg6[%c0_15, %c0_16] : memref<32x32xbf16, #tpu.memory_space<vmem>>, vector<32x32xbf16>
    %cst_17 = arith.constant dense<0.000000e+00> : vector<16x32xf32>
    %29 = tpu.matmul %17, %28, %cst_17 {dimension_numbers = #tpu.dot_dimension_numbers<[1], [0], [0], [1], [0, 0, 1, 1], [], []>} : vector<16x32xbf16>, vector<32x32xbf16>, vector<16x32xf32> -> vector<16x32xf32>
    %c0_18 = arith.constant 0 : index
    %c0_19 = arith.constant 0 : index
    %30 = vector.load %arg7[%c0_18, %c0_19] : memref<1x32xf32, #tpu.memory_space<vmem>>, vector<1x32xf32>
    %31 = vector.broadcast %30 : vector<1x32xf32> to vector<16x32xf32>
    %32 = arith.addf %29, %31 : vector<16x32xf32>
    %cst_20 = arith.constant 0.204124153 : f32
    %33 = vector.broadcast %cst_20 : f32 to vector<16x32xf32>
    %34 = arith.mulf %22, %33 : vector<16x32xf32>
    %35 = arith.truncf %34 : vector<16x32xf32> to vector<16x32xbf16>
    %c0_21 = arith.constant 0 : index
    %c0_22 = arith.constant 0 : index
    %36 = vector.load %arg8[%c0_21, %c0_22] : memref<16x32xbf16, #tpu.memory_space<vmem>>, vector<16x32xbf16>
    tpu.vector_store %arg8[%c0_21, %c0_22], %35 {strides = array<i32>} : memref<16x32xbf16, #tpu.memory_space<vmem>>, vector<16x32xbf16>,
    %37 = arith.truncf %27 : vector<16x32xf32> to vector<16x32xbf16>
    %c0_23 = arith.constant 0 : index
    %c0_24 = arith.constant 0 : index
    %38 = vector.load %arg9[%c0_23, %c0_24] : memref<16x32xbf16, #tpu.memory_space<vmem>>, vector<16x32xbf16>
    tpu.vector_store %arg9[%c0_23, %c0_24], %37 {strides = array<i32>} : memref<16x32xbf16, #tpu.memory_space<vmem>>, vector<16x32xbf16>,
    %39 = arith.truncf %32 : vector<16x32xf32> to vector<16x32xbf16>
    %c0_25 = arith.constant 0 : index
    %c0_26 = arith.constant 0 : index
    %40 = vector.load %arg10[%c0_25, %c0_26] : memref<16x32xbf16, #tpu.memory_space<vmem>>, vector<16x32xbf16>
    tpu.vector_store %arg10[%c0_25, %c0_26], %39 {strides = array<i32>} : memref<16x32xbf16, #tpu.memory_space<vmem>>, vector<16x32xbf16>,
    return
  }
  func.func @transform_0(%arg0: i32) -> (i32, i32) {
    %c0_i32 = arith.constant 0 : i32
    %c0_i32_0 = arith.constant 0 : i32
    return %arg0, %c0_i32 : i32, i32
  }
  func.func @transform_1(%arg0: i32) -> (i32, i32) {
    %c0_i32 = arith.constant 0 : i32
    %c0_i32_0 = arith.constant 0 : i32
    %c0_i32_1 = arith.constant 0 : i32
    return %c0_i32, %c0_i32_0 : i32, i32
  }
  func.func @transform_2(%arg0: i32) -> (i32, i32) {
    %c0_i32 = arith.constant 0 : i32
    %c0_i32_0 = arith.constant 0 : i32
    %c0_i32_1 = arith.constant 0 : i32
    return %c0_i32, %c0_i32_0 : i32, i32
  }
  func.func @transform_3(%arg0: i32) -> (i32, i32) {
    %c0_i32 = arith.constant 0 : i32
    %c0_i32_0 = arith.constant 0 : i32
    %c0_i32_1 = arith.constant 0 : i32
    return %c0_i32, %c0_i32_0 : i32, i32
  }
  func.func @transform_4(%arg0: i32) -> (i32, i32) {
    %c0_i32 = arith.constant 0 : i32
    %c0_i32_0 = arith.constant 0 : i32
    %c0_i32_1 = arith.constant 0 : i32
    return %c0_i32, %c0_i32_0 : i32, i32
  }
  func.func @transform_5(%arg0: i32) -> (i32, i32) {
    %c0_i32 = arith.constant 0 : i32
    %c0_i32_0 = arith.constant 0 : i32
    %c0_i32_1 = arith.constant 0 : i32
    return %c0_i32, %c0_i32_0 : i32, i32
  }
  func.func @transform_6(%arg0: i32) -> (i32, i32) {
    %c0_i32 = arith.constant 0 : i32
    %c0_i32_0 = arith.constant 0 : i32
    %c0_i32_1 = arith.constant 0 : i32
    return %c0_i32, %c0_i32_0 : i32, i32
  }
  func.func @transform_7(%arg0: i32) -> (i32, i32) {
    %c0_i32 = arith.constant 0 : i32
    %c0_i32_0 = arith.constant 0 : i32
    return %arg0, %c0_i32 : i32, i32
  }
  func.func @transform_8(%arg0: i32) -> (i32, i32) {
    %c0_i32 = arith.constant 0 : i32
    %c0_i32_0 = arith.constant 0 : i32
    return %arg0, %c0_i32 : i32, i32
  }
  func.func @transform_9(%arg0: i32) -> (i32, i32) {
    %c0_i32 = arith.constant 0 : i32
    %c0_i32_0 = arith.constant 0 : i32
    return %arg0, %c0_i32 : i32, i32
  }
}

module attributes {stable_mosaic.version = 11 : i64} {
  func.func @attn_kernel(%arg0: i32, %arg1: i32, %arg2: memref<1x8x32xbf16, #tpu.memory_space<vmem>>, %arg3: memref<1x8x32xbf16, #tpu.memory_space<vmem>>, %arg4: memref<1x8x32xbf16, #tpu.memory_space<vmem>>, %arg5: memref<128x32xbf16, #tpu.memory_space<vmem>>, %arg6: memref<128x32xbf16, #tpu.memory_space<vmem>>, %arg7: memref<1x1x8xf32, #tpu.memory_space<vmem>>, %arg8: memref<1x8x32xbf16, #tpu.memory_space<vmem>>) attributes {dimension_semantics = [#tpu.dimension_semantics<parallel>, #tpu.dimension_semantics<parallel>], iteration_bounds = array<i64: 2, 1>, scalar_prefetch = 0 : i64, scratch_operands = 0 : i64, tpu.core_type = #tpu.core_type<tc>, window_params = [{transform_indices = @transform_0, window_bounds = array<i64: 1, 8, 32>}, {transform_indices = @transform_1, window_bounds = array<i64: 1, 8, 32>}, {transform_indices = @transform_2, window_bounds = array<i64: 1, 8, 32>}, {transform_indices = @transform_3, window_bounds = array<i64: 128, 32>}, {transform_indices = @transform_4, window_bounds = array<i64: 128, 32>}, {transform_indices = @transform_5, window_bounds = array<i64: 1, 1, 8>}, {transform_indices = @transform_6, window_bounds = array<i64: 1, 8, 32>}]} {
    %c0 = arith.constant 0 : index
    %c0_0 = arith.constant 0 : index
    %c0_1 = arith.constant 0 : index
    %0 = vector.load %arg7[%c0, %c0_0, %c0_1] : memref<1x1x8xf32, #tpu.memory_space<vmem>>, vector<1x1x8xf32>
    %1 = vector.shape_cast %0 : vector<1x1x8xf32> to vector<1x8xf32>
    %cst = arith.constant 5.000000e-01 : f32
    %2 = vector.broadcast %cst : f32 to vector<1x8xf32>
    %3 = arith.cmpf ogt, %1, %2 : vector<1x8xf32>
    %c0_2 = arith.constant 0 : index
    %c0_3 = arith.constant 0 : index
    %c0_4 = arith.constant 0 : index
    %4 = vector.load %arg2[%c0_2, %c0_3, %c0_4] : memref<1x8x32xbf16, #tpu.memory_space<vmem>>, vector<1x8x32xbf16>
    %5 = vector.shape_cast %4 : vector<1x8x32xbf16> to vector<8x32xbf16>
    %c0_5 = arith.constant 0 : index
    %c0_6 = arith.constant 0 : index
    %c0_7 = arith.constant 0 : index
    %6 = vector.load %arg3[%c0_5, %c0_6, %c0_7] : memref<1x8x32xbf16, #tpu.memory_space<vmem>>, vector<1x8x32xbf16>
    %7 = vector.shape_cast %6 : vector<1x8x32xbf16> to vector<8x32xbf16>
    %c0_8 = arith.constant 0 : index
    %c0_9 = arith.constant 0 : index
    %c0_10 = arith.constant 0 : index
    %8 = vector.load %arg4[%c0_8, %c0_9, %c0_10] : memref<1x8x32xbf16, #tpu.memory_space<vmem>>, vector<1x8x32xbf16>
    %9 = vector.shape_cast %8 : vector<1x8x32xbf16> to vector<8x32xbf16>
    %c0_11 = arith.constant 0 : index
    %c0_12 = arith.constant 0 : index
    %10 = vector.load %arg5[%c0_11, %c0_12] : memref<128x32xbf16, #tpu.memory_space<vmem>>, vector<128x32xbf16>
    %c0_13 = arith.constant 0 : index
    %c0_14 = arith.constant 0 : index
    %11 = vector.load %arg6[%c0_13, %c0_14] : memref<128x32xbf16, #tpu.memory_space<vmem>>, vector<128x32xbf16>
    %12 = vector.extract_strided_slice %5 {offsets = [0, 0], sizes = [8, 8], strides = [1, 1]} : vector<8x32xbf16> to vector<8x8xbf16>
    %13 = vector.extract_strided_slice %7 {offsets = [0, 0], sizes = [8, 8], strides = [1, 1]} : vector<8x32xbf16> to vector<8x8xbf16>
    %14 = vector.extract_strided_slice %9 {offsets = [0, 0], sizes = [8, 8], strides = [1, 1]} : vector<8x32xbf16> to vector<8x8xbf16>
    %cst_15 = arith.constant dense<0.000000e+00> : vector<8x8xf32>
    %15 = tpu.matmul %12, %13, %cst_15 {dimension_numbers = #tpu.dot_dimension_numbers<[1], [1], [0], [0], [0, 0, 1, 0], [], []>} : vector<8x8xbf16>, vector<8x8xbf16>, vector<8x8xf32> -> vector<8x8xf32>
    %16 = vector.extract_strided_slice %10 {offsets = [0, 0], sizes = [128, 8], strides = [1, 1]} : vector<128x32xbf16> to vector<128x8xbf16>
    %cst_16 = arith.constant dense<0.000000e+00> : vector<8x128xf32>
    %17 = tpu.matmul %12, %16, %cst_16 {dimension_numbers = #tpu.dot_dimension_numbers<[1], [1], [0], [0], [0, 0, 1, 0], [], []>} : vector<8x8xbf16>, vector<128x8xbf16>, vector<8x128xf32> -> vector<8x128xf32>
    %18 = vector.extract_strided_slice %11 {offsets = [0, 0], sizes = [128, 8], strides = [1, 1]} : vector<128x32xbf16> to vector<128x8xbf16>
    %cst_17 = arith.constant dense<0.000000e+00> : vector<8x128xf32>
    %19 = tpu.matmul %13, %18, %cst_17 {dimension_numbers = #tpu.dot_dimension_numbers<[1], [1], [0], [0], [0, 0, 1, 0], [], []>} : vector<8x8xbf16>, vector<128x8xbf16>, vector<8x128xf32> -> vector<8x128xf32>
    %20 = tpu.iota {dimensions = array<i32: 0>} : vector<8x1xi32>
    %c7_i32 = arith.constant 7 : i32
    %21 = vector.broadcast %c7_i32 : i32 to vector<8x1xi32>
    %22 = arith.subi %21, %20 : vector<8x1xi32>
    %23 = vector.extract_strided_slice %17 {offsets = [0, 1], sizes = [8, 127], strides = [1, 1]} : vector<8x128xf32> to vector<8x127xf32>
    %24 = vector.extract_strided_slice %17 {offsets = [0, 0], sizes = [8, 1], strides = [1, 1]} : vector<8x128xf32> to vector<8x1xf32>
    %25 = tpu.concatenate %23, %24 in 1 : vector<8x127xf32>, vector<8x1xf32> -> vector<8x128xf32>
    %c1_i32 = arith.constant 1 : i32
    %26 = vector.broadcast %c1_i32 : i32 to vector<8x1xi32>
    %27 = arith.andi %22, %26 : vector<8x1xi32>
    %c0_i32 = arith.constant 0 : i32
    %28 = vector.broadcast %c0_i32 : i32 to vector<8x1xi32>
    %29 = arith.cmpi ne, %27, %28 : vector<8x1xi32>
    %30 = vector.shape_cast %29 : vector<8x1xi1> to vector<8x1xi1>
    %31 = vector.broadcast %30 : vector<8x1xi1> to vector<8x128xi1>
    %32 = arith.select %31, %25, %17 : vector<8x128xi1>, vector<8x128xf32>
    %33 = vector.extract_strided_slice %32 {offsets = [0, 2], sizes = [8, 126], strides = [1, 1]} : vector<8x128xf32> to vector<8x126xf32>
    %34 = vector.extract_strided_slice %32 {offsets = [0, 0], sizes = [8, 2], strides = [1, 1]} : vector<8x128xf32> to vector<8x2xf32>
    %35 = tpu.concatenate %33, %34 in 1 : vector<8x126xf32>, vector<8x2xf32> -> vector<8x128xf32>
    %c2_i32 = arith.constant 2 : i32
    %36 = vector.broadcast %c2_i32 : i32 to vector<8x1xi32>
    %37 = arith.andi %22, %36 : vector<8x1xi32>
    %c0_i32_18 = arith.constant 0 : i32
    %38 = vector.broadcast %c0_i32_18 : i32 to vector<8x1xi32>
    %39 = arith.cmpi ne, %37, %38 : vector<8x1xi32>
    %40 = vector.shape_cast %39 : vector<8x1xi1> to vector<8x1xi1>
    %41 = vector.broadcast %40 : vector<8x1xi1> to vector<8x128xi1>
    %42 = arith.select %41, %35, %32 : vector<8x128xi1>, vector<8x128xf32>
    %43 = vector.extract_strided_slice %42 {offsets = [0, 4], sizes = [8, 124], strides = [1, 1]} : vector<8x128xf32> to vector<8x124xf32>
    %44 = vector.extract_strided_slice %42 {offsets = [0, 0], sizes = [8, 4], strides = [1, 1]} : vector<8x128xf32> to vector<8x4xf32>
    %45 = tpu.concatenate %43, %44 in 1 : vector<8x124xf32>, vector<8x4xf32> -> vector<8x128xf32>
    %c4_i32 = arith.constant 4 : i32
    %46 = vector.broadcast %c4_i32 : i32 to vector<8x1xi32>
    %47 = arith.andi %22, %46 : vector<8x1xi32>
    %c0_i32_19 = arith.constant 0 : i32
    %48 = vector.broadcast %c0_i32_19 : i32 to vector<8x1xi32>
    %49 = arith.cmpi ne, %47, %48 : vector<8x1xi32>
    %50 = vector.shape_cast %49 : vector<8x1xi1> to vector<8x1xi1>
    %51 = vector.broadcast %50 : vector<8x1xi1> to vector<8x128xi1>
    %52 = arith.select %51, %45, %42 : vector<8x128xi1>, vector<8x128xf32>
    %53 = vector.extract_strided_slice %52 {offsets = [0, 0], sizes = [8, 8], strides = [1, 1]} : vector<8x128xf32> to vector<8x8xf32>
    %54 = tpu.iota {dimensions = array<i32: 0>} : vector<8x1xi32>
    %c7_i32_20 = arith.constant 7 : i32
    %55 = vector.broadcast %c7_i32_20 : i32 to vector<8x1xi32>
    %56 = arith.subi %55, %54 : vector<8x1xi32>
    %57 = vector.extract_strided_slice %19 {offsets = [0, 1], sizes = [8, 127], strides = [1, 1]} : vector<8x128xf32> to vector<8x127xf32>
    %58 = vector.extract_strided_slice %19 {offsets = [0, 0], sizes = [8, 1], strides = [1, 1]} : vector<8x128xf32> to vector<8x1xf32>
    %59 = tpu.concatenate %57, %58 in 1 : vector<8x127xf32>, vector<8x1xf32> -> vector<8x128xf32>
    %c1_i32_21 = arith.constant 1 : i32
    %60 = vector.broadcast %c1_i32_21 : i32 to vector<8x1xi32>
    %61 = arith.andi %56, %60 : vector<8x1xi32>
    %c0_i32_22 = arith.constant 0 : i32
    %62 = vector.broadcast %c0_i32_22 : i32 to vector<8x1xi32>
    %63 = arith.cmpi ne, %61, %62 : vector<8x1xi32>
    %64 = vector.shape_cast %63 : vector<8x1xi1> to vector<8x1xi1>
    %65 = vector.broadcast %64 : vector<8x1xi1> to vector<8x128xi1>
    %66 = arith.select %65, %59, %19 : vector<8x128xi1>, vector<8x128xf32>
    %67 = vector.extract_strided_slice %66 {offsets = [0, 2], sizes = [8, 126], strides = [1, 1]} : vector<8x128xf32> to vector<8x126xf32>
    %68 = vector.extract_strided_slice %66 {offsets = [0, 0], sizes = [8, 2], strides = [1, 1]} : vector<8x128xf32> to vector<8x2xf32>
    %69 = tpu.concatenate %67, %68 in 1 : vector<8x126xf32>, vector<8x2xf32> -> vector<8x128xf32>
    %c2_i32_23 = arith.constant 2 : i32
    %70 = vector.broadcast %c2_i32_23 : i32 to vector<8x1xi32>
    %71 = arith.andi %56, %70 : vector<8x1xi32>
    %c0_i32_24 = arith.constant 0 : i32
    %72 = vector.broadcast %c0_i32_24 : i32 to vector<8x1xi32>
    %73 = arith.cmpi ne, %71, %72 : vector<8x1xi32>
    %74 = vector.shape_cast %73 : vector<8x1xi1> to vector<8x1xi1>
    %75 = vector.broadcast %74 : vector<8x1xi1> to vector<8x128xi1>
    %76 = arith.select %75, %69, %66 : vector<8x128xi1>, vector<8x128xf32>
    %77 = vector.extract_strided_slice %76 {offsets = [0, 4], sizes = [8, 124], strides = [1, 1]} : vector<8x128xf32> to vector<8x124xf32>
    %78 = vector.extract_strided_slice %76 {offsets = [0, 0], sizes = [8, 4], strides = [1, 1]} : vector<8x128xf32> to vector<8x4xf32>
    %79 = tpu.concatenate %77, %78 in 1 : vector<8x124xf32>, vector<8x4xf32> -> vector<8x128xf32>
    %c4_i32_25 = arith.constant 4 : i32
    %80 = vector.broadcast %c4_i32_25 : i32 to vector<8x1xi32>
    %81 = arith.andi %56, %80 : vector<8x1xi32>
    %c0_i32_26 = arith.constant 0 : i32
    %82 = vector.broadcast %c0_i32_26 : i32 to vector<8x1xi32>
    %83 = arith.cmpi ne, %81, %82 : vector<8x1xi32>
    %84 = vector.shape_cast %83 : vector<8x1xi1> to vector<8x1xi1>
    %85 = vector.broadcast %84 : vector<8x1xi1> to vector<8x128xi1>
    %86 = arith.select %85, %79, %76 : vector<8x128xi1>, vector<8x128xf32>
    %87 = vector.extract_strided_slice %86 {offsets = [0, 0], sizes = [8, 8], strides = [1, 1]} : vector<8x128xf32> to vector<8x8xf32>
    %88 = tpu.transpose %87, [1, 0] : vector<8x8xf32> -> vector<8x8xf32>
    %89 = arith.addf %15, %53 : vector<8x8xf32>
    %90 = arith.addf %89, %88 : vector<8x8xf32>
    %cst_27 = arith.constant 0xFF800000 : f32
    %91 = vector.shape_cast %3 : vector<1x8xi1> to vector<1x8xi1>
    %92 = vector.broadcast %91 : vector<1x8xi1> to vector<8x8xi1>
    %93 = vector.broadcast %cst_27 : f32 to vector<8x8xf32>
    %94 = arith.select %92, %93, %90 : vector<8x8xi1>, vector<8x8xf32>
    %cst_28 = arith.constant dense<0xFF800000> : vector<8xf32>
    %95 = vector.multi_reduction <maximumf>, %94, %cst_28 [1] : vector<8x8xf32> to vector<8xf32>
    %96 = vector.shape_cast %95 : vector<8xf32> to vector<8x1xf32>
    %cst_29 = arith.constant -1.000000e+30 : f32
    %97 = vector.broadcast %cst_29 : f32 to vector<8x1xf32>
    %98 = arith.maximumf %96, %97 : vector<8x1xf32>
    %99 = vector.broadcast %98 : vector<8x1xf32> to vector<8x8xf32>
    %100 = arith.subf %94, %99 : vector<8x8xf32>
    %101 = math.exp %100 : vector<8x8xf32>
    %cst_30 = arith.constant dense<0.000000e+00> : vector<8xf32>
    %102 = vector.multi_reduction <add>, %101, %cst_30 [1] : vector<8x8xf32> to vector<8xf32>
    %103 = vector.shape_cast %102 : vector<8xf32> to vector<8x1xf32>
    %cst_31 = arith.constant 1.000000e-30 : f32
    %104 = vector.broadcast %cst_31 : f32 to vector<8x1xf32>
    %105 = arith.maximumf %103, %104 : vector<8x1xf32>
    %106 = vector.broadcast %105 : vector<8x1xf32> to vector<8x8xf32>
    %107 = arith.divf %101, %106 : vector<8x8xf32>
    %108 = arith.truncf %107 : vector<8x8xf32> to vector<8x8xbf16>
    %cst_32 = arith.constant dense<0.000000e+00> : vector<8x8xf32>
    %109 = tpu.matmul %108, %14, %cst_32 {dimension_numbers = #tpu.dot_dimension_numbers<[1], [0], [0], [1], [0, 0, 1, 1], [], []>} : vector<8x8xbf16>, vector<8x8xbf16>, vector<8x8xf32> -> vector<8x8xf32>
    %110 = vector.extract_strided_slice %5 {offsets = [0, 8], sizes = [8, 8], strides = [1, 1]} : vector<8x32xbf16> to vector<8x8xbf16>
    %111 = vector.extract_strided_slice %7 {offsets = [0, 8], sizes = [8, 8], strides = [1, 1]} : vector<8x32xbf16> to vector<8x8xbf16>
    %112 = vector.extract_strided_slice %9 {offsets = [0, 8], sizes = [8, 8], strides = [1, 1]} : vector<8x32xbf16> to vector<8x8xbf16>
    %cst_33 = arith.constant dense<0.000000e+00> : vector<8x8xf32>
    %113 = tpu.matmul %110, %111, %cst_33 {dimension_numbers = #tpu.dot_dimension_numbers<[1], [1], [0], [0], [0, 0, 1, 0], [], []>} : vector<8x8xbf16>, vector<8x8xbf16>, vector<8x8xf32> -> vector<8x8xf32>
    %114 = vector.extract_strided_slice %10 {offsets = [0, 8], sizes = [128, 8], strides = [1, 1]} : vector<128x32xbf16> to vector<128x8xbf16>
    %cst_34 = arith.constant dense<0.000000e+00> : vector<8x128xf32>
    %115 = tpu.matmul %110, %114, %cst_34 {dimension_numbers = #tpu.dot_dimension_numbers<[1], [1], [0], [0], [0, 0, 1, 0], [], []>} : vector<8x8xbf16>, vector<128x8xbf16>, vector<8x128xf32> -> vector<8x128xf32>
    %116 = vector.extract_strided_slice %11 {offsets = [0, 8], sizes = [128, 8], strides = [1, 1]} : vector<128x32xbf16> to vector<128x8xbf16>
    %cst_35 = arith.constant dense<0.000000e+00> : vector<8x128xf32>
    %117 = tpu.matmul %111, %116, %cst_35 {dimension_numbers = #tpu.dot_dimension_numbers<[1], [1], [0], [0], [0, 0, 1, 0], [], []>} : vector<8x8xbf16>, vector<128x8xbf16>, vector<8x128xf32> -> vector<8x128xf32>
    %118 = tpu.iota {dimensions = array<i32: 0>} : vector<8x1xi32>
    %c7_i32_36 = arith.constant 7 : i32
    %119 = vector.broadcast %c7_i32_36 : i32 to vector<8x1xi32>
    %120 = arith.subi %119, %118 : vector<8x1xi32>
    %121 = vector.extract_strided_slice %115 {offsets = [0, 1], sizes = [8, 127], strides = [1, 1]} : vector<8x128xf32> to vector<8x127xf32>
    %122 = vector.extract_strided_slice %115 {offsets = [0, 0], sizes = [8, 1], strides = [1, 1]} : vector<8x128xf32> to vector<8x1xf32>
    %123 = tpu.concatenate %121, %122 in 1 : vector<8x127xf32>, vector<8x1xf32> -> vector<8x128xf32>
    %c1_i32_37 = arith.constant 1 : i32
    %124 = vector.broadcast %c1_i32_37 : i32 to vector<8x1xi32>
    %125 = arith.andi %120, %124 : vector<8x1xi32>
    %c0_i32_38 = arith.constant 0 : i32
    %126 = vector.broadcast %c0_i32_38 : i32 to vector<8x1xi32>
    %127 = arith.cmpi ne, %125, %126 : vector<8x1xi32>
    %128 = vector.shape_cast %127 : vector<8x1xi1> to vector<8x1xi1>
    %129 = vector.broadcast %128 : vector<8x1xi1> to vector<8x128xi1>
    %130 = arith.select %129, %123, %115 : vector<8x128xi1>, vector<8x128xf32>
    %131 = vector.extract_strided_slice %130 {offsets = [0, 2], sizes = [8, 126], strides = [1, 1]} : vector<8x128xf32> to vector<8x126xf32>
    %132 = vector.extract_strided_slice %130 {offsets = [0, 0], sizes = [8, 2], strides = [1, 1]} : vector<8x128xf32> to vector<8x2xf32>
    %133 = tpu.concatenate %131, %132 in 1 : vector<8x126xf32>, vector<8x2xf32> -> vector<8x128xf32>
    %c2_i32_39 = arith.constant 2 : i32
    %134 = vector.broadcast %c2_i32_39 : i32 to vector<8x1xi32>
    %135 = arith.andi %120, %134 : vector<8x1xi32>
    %c0_i32_40 = arith.constant 0 : i32
    %136 = vector.broadcast %c0_i32_40 : i32 to vector<8x1xi32>
    %137 = arith.cmpi ne, %135, %136 : vector<8x1xi32>
    %138 = vector.shape_cast %137 : vector<8x1xi1> to vector<8x1xi1>
    %139 = vector.broadcast %138 : vector<8x1xi1> to vector<8x128xi1>
    %140 = arith.select %139, %133, %130 : vector<8x128xi1>, vector<8x128xf32>
    %141 = vector.extract_strided_slice %140 {offsets = [0, 4], sizes = [8, 124], strides = [1, 1]} : vector<8x128xf32> to vector<8x124xf32>
    %142 = vector.extract_strided_slice %140 {offsets = [0, 0], sizes = [8, 4], strides = [1, 1]} : vector<8x128xf32> to vector<8x4xf32>
    %143 = tpu.concatenate %141, %142 in 1 : vector<8x124xf32>, vector<8x4xf32> -> vector<8x128xf32>
    %c4_i32_41 = arith.constant 4 : i32
    %144 = vector.broadcast %c4_i32_41 : i32 to vector<8x1xi32>
    %145 = arith.andi %120, %144 : vector<8x1xi32>
    %c0_i32_42 = arith.constant 0 : i32
    %146 = vector.broadcast %c0_i32_42 : i32 to vector<8x1xi32>
    %147 = arith.cmpi ne, %145, %146 : vector<8x1xi32>
    %148 = vector.shape_cast %147 : vector<8x1xi1> to vector<8x1xi1>
    %149 = vector.broadcast %148 : vector<8x1xi1> to vector<8x128xi1>
    %150 = arith.select %149, %143, %140 : vector<8x128xi1>, vector<8x128xf32>
    %151 = vector.extract_strided_slice %150 {offsets = [0, 0], sizes = [8, 8], strides = [1, 1]} : vector<8x128xf32> to vector<8x8xf32>
    %152 = tpu.iota {dimensions = array<i32: 0>} : vector<8x1xi32>
    %c7_i32_43 = arith.constant 7 : i32
    %153 = vector.broadcast %c7_i32_43 : i32 to vector<8x1xi32>
    %154 = arith.subi %153, %152 : vector<8x1xi32>
    %155 = vector.extract_strided_slice %117 {offsets = [0, 1], sizes = [8, 127], strides = [1, 1]} : vector<8x128xf32> to vector<8x127xf32>
    %156 = vector.extract_strided_slice %117 {offsets = [0, 0], sizes = [8, 1], strides = [1, 1]} : vector<8x128xf32> to vector<8x1xf32>
    %157 = tpu.concatenate %155, %156 in 1 : vector<8x127xf32>, vector<8x1xf32> -> vector<8x128xf32>
    %c1_i32_44 = arith.constant 1 : i32
    %158 = vector.broadcast %c1_i32_44 : i32 to vector<8x1xi32>
    %159 = arith.andi %154, %158 : vector<8x1xi32>
    %c0_i32_45 = arith.constant 0 : i32
    %160 = vector.broadcast %c0_i32_45 : i32 to vector<8x1xi32>
    %161 = arith.cmpi ne, %159, %160 : vector<8x1xi32>
    %162 = vector.shape_cast %161 : vector<8x1xi1> to vector<8x1xi1>
    %163 = vector.broadcast %162 : vector<8x1xi1> to vector<8x128xi1>
    %164 = arith.select %163, %157, %117 : vector<8x128xi1>, vector<8x128xf32>
    %165 = vector.extract_strided_slice %164 {offsets = [0, 2], sizes = [8, 126], strides = [1, 1]} : vector<8x128xf32> to vector<8x126xf32>
    %166 = vector.extract_strided_slice %164 {offsets = [0, 0], sizes = [8, 2], strides = [1, 1]} : vector<8x128xf32> to vector<8x2xf32>
    %167 = tpu.concatenate %165, %166 in 1 : vector<8x126xf32>, vector<8x2xf32> -> vector<8x128xf32>
    %c2_i32_46 = arith.constant 2 : i32
    %168 = vector.broadcast %c2_i32_46 : i32 to vector<8x1xi32>
    %169 = arith.andi %154, %168 : vector<8x1xi32>
    %c0_i32_47 = arith.constant 0 : i32
    %170 = vector.broadcast %c0_i32_47 : i32 to vector<8x1xi32>
    %171 = arith.cmpi ne, %169, %170 : vector<8x1xi32>
    %172 = vector.shape_cast %171 : vector<8x1xi1> to vector<8x1xi1>
    %173 = vector.broadcast %172 : vector<8x1xi1> to vector<8x128xi1>
    %174 = arith.select %173, %167, %164 : vector<8x128xi1>, vector<8x128xf32>
    %175 = vector.extract_strided_slice %174 {offsets = [0, 4], sizes = [8, 124], strides = [1, 1]} : vector<8x128xf32> to vector<8x124xf32>
    %176 = vector.extract_strided_slice %174 {offsets = [0, 0], sizes = [8, 4], strides = [1, 1]} : vector<8x128xf32> to vector<8x4xf32>
    %177 = tpu.concatenate %175, %176 in 1 : vector<8x124xf32>, vector<8x4xf32> -> vector<8x128xf32>
    %c4_i32_48 = arith.constant 4 : i32
    %178 = vector.broadcast %c4_i32_48 : i32 to vector<8x1xi32>
    %179 = arith.andi %154, %178 : vector<8x1xi32>
    %c0_i32_49 = arith.constant 0 : i32
    %180 = vector.broadcast %c0_i32_49 : i32 to vector<8x1xi32>
    %181 = arith.cmpi ne, %179, %180 : vector<8x1xi32>
    %182 = vector.shape_cast %181 : vector<8x1xi1> to vector<8x1xi1>
    %183 = vector.broadcast %182 : vector<8x1xi1> to vector<8x128xi1>
    %184 = arith.select %183, %177, %174 : vector<8x128xi1>, vector<8x128xf32>
    %185 = vector.extract_strided_slice %184 {offsets = [0, 0], sizes = [8, 8], strides = [1, 1]} : vector<8x128xf32> to vector<8x8xf32>
    %186 = tpu.transpose %185, [1, 0] : vector<8x8xf32> -> vector<8x8xf32>
    %187 = arith.addf %113, %151 : vector<8x8xf32>
    %188 = arith.addf %187, %186 : vector<8x8xf32>
    %cst_50 = arith.constant 0xFF800000 : f32
    %189 = vector.shape_cast %3 : vector<1x8xi1> to vector<1x8xi1>
    %190 = vector.broadcast %189 : vector<1x8xi1> to vector<8x8xi1>
    %191 = vector.broadcast %cst_50 : f32 to vector<8x8xf32>
    %192 = arith.select %190, %191, %188 : vector<8x8xi1>, vector<8x8xf32>
    %cst_51 = arith.constant dense<0xFF800000> : vector<8xf32>
    %193 = vector.multi_reduction <maximumf>, %192, %cst_51 [1] : vector<8x8xf32> to vector<8xf32>
    %194 = vector.shape_cast %193 : vector<8xf32> to vector<8x1xf32>
    %cst_52 = arith.constant -1.000000e+30 : f32
    %195 = vector.broadcast %cst_52 : f32 to vector<8x1xf32>
    %196 = arith.maximumf %194, %195 : vector<8x1xf32>
    %197 = vector.broadcast %196 : vector<8x1xf32> to vector<8x8xf32>
    %198 = arith.subf %192, %197 : vector<8x8xf32>
    %199 = math.exp %198 : vector<8x8xf32>
    %cst_53 = arith.constant dense<0.000000e+00> : vector<8xf32>
    %200 = vector.multi_reduction <add>, %199, %cst_53 [1] : vector<8x8xf32> to vector<8xf32>
    %201 = vector.shape_cast %200 : vector<8xf32> to vector<8x1xf32>
    %cst_54 = arith.constant 1.000000e-30 : f32
    %202 = vector.broadcast %cst_54 : f32 to vector<8x1xf32>
    %203 = arith.maximumf %201, %202 : vector<8x1xf32>
    %204 = vector.broadcast %203 : vector<8x1xf32> to vector<8x8xf32>
    %205 = arith.divf %199, %204 : vector<8x8xf32>
    %206 = arith.truncf %205 : vector<8x8xf32> to vector<8x8xbf16>
    %cst_55 = arith.constant dense<0.000000e+00> : vector<8x8xf32>
    %207 = tpu.matmul %206, %112, %cst_55 {dimension_numbers = #tpu.dot_dimension_numbers<[1], [0], [0], [1], [0, 0, 1, 1], [], []>} : vector<8x8xbf16>, vector<8x8xbf16>, vector<8x8xf32> -> vector<8x8xf32>
    %208 = vector.extract_strided_slice %5 {offsets = [0, 16], sizes = [8, 8], strides = [1, 1]} : vector<8x32xbf16> to vector<8x8xbf16>
    %209 = vector.extract_strided_slice %7 {offsets = [0, 16], sizes = [8, 8], strides = [1, 1]} : vector<8x32xbf16> to vector<8x8xbf16>
    %210 = vector.extract_strided_slice %9 {offsets = [0, 16], sizes = [8, 8], strides = [1, 1]} : vector<8x32xbf16> to vector<8x8xbf16>
    %cst_56 = arith.constant dense<0.000000e+00> : vector<8x8xf32>
    %211 = tpu.matmul %208, %209, %cst_56 {dimension_numbers = #tpu.dot_dimension_numbers<[1], [1], [0], [0], [0, 0, 1, 0], [], []>} : vector<8x8xbf16>, vector<8x8xbf16>, vector<8x8xf32> -> vector<8x8xf32>
    %212 = vector.extract_strided_slice %10 {offsets = [0, 16], sizes = [128, 8], strides = [1, 1]} : vector<128x32xbf16> to vector<128x8xbf16>
    %cst_57 = arith.constant dense<0.000000e+00> : vector<8x128xf32>
    %213 = tpu.matmul %208, %212, %cst_57 {dimension_numbers = #tpu.dot_dimension_numbers<[1], [1], [0], [0], [0, 0, 1, 0], [], []>} : vector<8x8xbf16>, vector<128x8xbf16>, vector<8x128xf32> -> vector<8x128xf32>
    %214 = vector.extract_strided_slice %11 {offsets = [0, 16], sizes = [128, 8], strides = [1, 1]} : vector<128x32xbf16> to vector<128x8xbf16>
    %cst_58 = arith.constant dense<0.000000e+00> : vector<8x128xf32>
    %215 = tpu.matmul %209, %214, %cst_58 {dimension_numbers = #tpu.dot_dimension_numbers<[1], [1], [0], [0], [0, 0, 1, 0], [], []>} : vector<8x8xbf16>, vector<128x8xbf16>, vector<8x128xf32> -> vector<8x128xf32>
    %216 = tpu.iota {dimensions = array<i32: 0>} : vector<8x1xi32>
    %c7_i32_59 = arith.constant 7 : i32
    %217 = vector.broadcast %c7_i32_59 : i32 to vector<8x1xi32>
    %218 = arith.subi %217, %216 : vector<8x1xi32>
    %219 = vector.extract_strided_slice %213 {offsets = [0, 1], sizes = [8, 127], strides = [1, 1]} : vector<8x128xf32> to vector<8x127xf32>
    %220 = vector.extract_strided_slice %213 {offsets = [0, 0], sizes = [8, 1], strides = [1, 1]} : vector<8x128xf32> to vector<8x1xf32>
    %221 = tpu.concatenate %219, %220 in 1 : vector<8x127xf32>, vector<8x1xf32> -> vector<8x128xf32>
    %c1_i32_60 = arith.constant 1 : i32
    %222 = vector.broadcast %c1_i32_60 : i32 to vector<8x1xi32>
    %223 = arith.andi %218, %222 : vector<8x1xi32>
    %c0_i32_61 = arith.constant 0 : i32
    %224 = vector.broadcast %c0_i32_61 : i32 to vector<8x1xi32>
    %225 = arith.cmpi ne, %223, %224 : vector<8x1xi32>
    %226 = vector.shape_cast %225 : vector<8x1xi1> to vector<8x1xi1>
    %227 = vector.broadcast %226 : vector<8x1xi1> to vector<8x128xi1>
    %228 = arith.select %227, %221, %213 : vector<8x128xi1>, vector<8x128xf32>
    %229 = vector.extract_strided_slice %228 {offsets = [0, 2], sizes = [8, 126], strides = [1, 1]} : vector<8x128xf32> to vector<8x126xf32>
    %230 = vector.extract_strided_slice %228 {offsets = [0, 0], sizes = [8, 2], strides = [1, 1]} : vector<8x128xf32> to vector<8x2xf32>
    %231 = tpu.concatenate %229, %230 in 1 : vector<8x126xf32>, vector<8x2xf32> -> vector<8x128xf32>
    %c2_i32_62 = arith.constant 2 : i32
    %232 = vector.broadcast %c2_i32_62 : i32 to vector<8x1xi32>
    %233 = arith.andi %218, %232 : vector<8x1xi32>
    %c0_i32_63 = arith.constant 0 : i32
    %234 = vector.broadcast %c0_i32_63 : i32 to vector<8x1xi32>
    %235 = arith.cmpi ne, %233, %234 : vector<8x1xi32>
    %236 = vector.shape_cast %235 : vector<8x1xi1> to vector<8x1xi1>
    %237 = vector.broadcast %236 : vector<8x1xi1> to vector<8x128xi1>
    %238 = arith.select %237, %231, %228 : vector<8x128xi1>, vector<8x128xf32>
    %239 = vector.extract_strided_slice %238 {offsets = [0, 4], sizes = [8, 124], strides = [1, 1]} : vector<8x128xf32> to vector<8x124xf32>
    %240 = vector.extract_strided_slice %238 {offsets = [0, 0], sizes = [8, 4], strides = [1, 1]} : vector<8x128xf32> to vector<8x4xf32>
    %241 = tpu.concatenate %239, %240 in 1 : vector<8x124xf32>, vector<8x4xf32> -> vector<8x128xf32>
    %c4_i32_64 = arith.constant 4 : i32
    %242 = vector.broadcast %c4_i32_64 : i32 to vector<8x1xi32>
    %243 = arith.andi %218, %242 : vector<8x1xi32>
    %c0_i32_65 = arith.constant 0 : i32
    %244 = vector.broadcast %c0_i32_65 : i32 to vector<8x1xi32>
    %245 = arith.cmpi ne, %243, %244 : vector<8x1xi32>
    %246 = vector.shape_cast %245 : vector<8x1xi1> to vector<8x1xi1>
    %247 = vector.broadcast %246 : vector<8x1xi1> to vector<8x128xi1>
    %248 = arith.select %247, %241, %238 : vector<8x128xi1>, vector<8x128xf32>
    %249 = vector.extract_strided_slice %248 {offsets = [0, 0], sizes = [8, 8], strides = [1, 1]} : vector<8x128xf32> to vector<8x8xf32>
    %250 = tpu.iota {dimensions = array<i32: 0>} : vector<8x1xi32>
    %c7_i32_66 = arith.constant 7 : i32
    %251 = vector.broadcast %c7_i32_66 : i32 to vector<8x1xi32>
    %252 = arith.subi %251, %250 : vector<8x1xi32>
    %253 = vector.extract_strided_slice %215 {offsets = [0, 1], sizes = [8, 127], strides = [1, 1]} : vector<8x128xf32> to vector<8x127xf32>
    %254 = vector.extract_strided_slice %215 {offsets = [0, 0], sizes = [8, 1], strides = [1, 1]} : vector<8x128xf32> to vector<8x1xf32>
    %255 = tpu.concatenate %253, %254 in 1 : vector<8x127xf32>, vector<8x1xf32> -> vector<8x128xf32>
    %c1_i32_67 = arith.constant 1 : i32
    %256 = vector.broadcast %c1_i32_67 : i32 to vector<8x1xi32>
    %257 = arith.andi %252, %256 : vector<8x1xi32>
    %c0_i32_68 = arith.constant 0 : i32
    %258 = vector.broadcast %c0_i32_68 : i32 to vector<8x1xi32>
    %259 = arith.cmpi ne, %257, %258 : vector<8x1xi32>
    %260 = vector.shape_cast %259 : vector<8x1xi1> to vector<8x1xi1>
    %261 = vector.broadcast %260 : vector<8x1xi1> to vector<8x128xi1>
    %262 = arith.select %261, %255, %215 : vector<8x128xi1>, vector<8x128xf32>
    %263 = vector.extract_strided_slice %262 {offsets = [0, 2], sizes = [8, 126], strides = [1, 1]} : vector<8x128xf32> to vector<8x126xf32>
    %264 = vector.extract_strided_slice %262 {offsets = [0, 0], sizes = [8, 2], strides = [1, 1]} : vector<8x128xf32> to vector<8x2xf32>
    %265 = tpu.concatenate %263, %264 in 1 : vector<8x126xf32>, vector<8x2xf32> -> vector<8x128xf32>
    %c2_i32_69 = arith.constant 2 : i32
    %266 = vector.broadcast %c2_i32_69 : i32 to vector<8x1xi32>
    %267 = arith.andi %252, %266 : vector<8x1xi32>
    %c0_i32_70 = arith.constant 0 : i32
    %268 = vector.broadcast %c0_i32_70 : i32 to vector<8x1xi32>
    %269 = arith.cmpi ne, %267, %268 : vector<8x1xi32>
    %270 = vector.shape_cast %269 : vector<8x1xi1> to vector<8x1xi1>
    %271 = vector.broadcast %270 : vector<8x1xi1> to vector<8x128xi1>
    %272 = arith.select %271, %265, %262 : vector<8x128xi1>, vector<8x128xf32>
    %273 = vector.extract_strided_slice %272 {offsets = [0, 4], sizes = [8, 124], strides = [1, 1]} : vector<8x128xf32> to vector<8x124xf32>
    %274 = vector.extract_strided_slice %272 {offsets = [0, 0], sizes = [8, 4], strides = [1, 1]} : vector<8x128xf32> to vector<8x4xf32>
    %275 = tpu.concatenate %273, %274 in 1 : vector<8x124xf32>, vector<8x4xf32> -> vector<8x128xf32>
    %c4_i32_71 = arith.constant 4 : i32
    %276 = vector.broadcast %c4_i32_71 : i32 to vector<8x1xi32>
    %277 = arith.andi %252, %276 : vector<8x1xi32>
    %c0_i32_72 = arith.constant 0 : i32
    %278 = vector.broadcast %c0_i32_72 : i32 to vector<8x1xi32>
    %279 = arith.cmpi ne, %277, %278 : vector<8x1xi32>
    %280 = vector.shape_cast %279 : vector<8x1xi1> to vector<8x1xi1>
    %281 = vector.broadcast %280 : vector<8x1xi1> to vector<8x128xi1>
    %282 = arith.select %281, %275, %272 : vector<8x128xi1>, vector<8x128xf32>
    %283 = vector.extract_strided_slice %282 {offsets = [0, 0], sizes = [8, 8], strides = [1, 1]} : vector<8x128xf32> to vector<8x8xf32>
    %284 = tpu.transpose %283, [1, 0] : vector<8x8xf32> -> vector<8x8xf32>
    %285 = arith.addf %211, %249 : vector<8x8xf32>
    %286 = arith.addf %285, %284 : vector<8x8xf32>
    %cst_73 = arith.constant 0xFF800000 : f32
    %287 = vector.shape_cast %3 : vector<1x8xi1> to vector<1x8xi1>
    %288 = vector.broadcast %287 : vector<1x8xi1> to vector<8x8xi1>
    %289 = vector.broadcast %cst_73 : f32 to vector<8x8xf32>
    %290 = arith.select %288, %289, %286 : vector<8x8xi1>, vector<8x8xf32>
    %cst_74 = arith.constant dense<0xFF800000> : vector<8xf32>
    %291 = vector.multi_reduction <maximumf>, %290, %cst_74 [1] : vector<8x8xf32> to vector<8xf32>
    %292 = vector.shape_cast %291 : vector<8xf32> to vector<8x1xf32>
    %cst_75 = arith.constant -1.000000e+30 : f32
    %293 = vector.broadcast %cst_75 : f32 to vector<8x1xf32>
    %294 = arith.maximumf %292, %293 : vector<8x1xf32>
    %295 = vector.broadcast %294 : vector<8x1xf32> to vector<8x8xf32>
    %296 = arith.subf %290, %295 : vector<8x8xf32>
    %297 = math.exp %296 : vector<8x8xf32>
    %cst_76 = arith.constant dense<0.000000e+00> : vector<8xf32>
    %298 = vector.multi_reduction <add>, %297, %cst_76 [1] : vector<8x8xf32> to vector<8xf32>
    %299 = vector.shape_cast %298 : vector<8xf32> to vector<8x1xf32>
    %cst_77 = arith.constant 1.000000e-30 : f32
    %300 = vector.broadcast %cst_77 : f32 to vector<8x1xf32>
    %301 = arith.maximumf %299, %300 : vector<8x1xf32>
    %302 = vector.broadcast %301 : vector<8x1xf32> to vector<8x8xf32>
    %303 = arith.divf %297, %302 : vector<8x8xf32>
    %304 = arith.truncf %303 : vector<8x8xf32> to vector<8x8xbf16>
    %cst_78 = arith.constant dense<0.000000e+00> : vector<8x8xf32>
    %305 = tpu.matmul %304, %210, %cst_78 {dimension_numbers = #tpu.dot_dimension_numbers<[1], [0], [0], [1], [0, 0, 1, 1], [], []>} : vector<8x8xbf16>, vector<8x8xbf16>, vector<8x8xf32> -> vector<8x8xf32>
    %306 = vector.extract_strided_slice %5 {offsets = [0, 24], sizes = [8, 8], strides = [1, 1]} : vector<8x32xbf16> to vector<8x8xbf16>
    %307 = vector.extract_strided_slice %7 {offsets = [0, 24], sizes = [8, 8], strides = [1, 1]} : vector<8x32xbf16> to vector<8x8xbf16>
    %308 = vector.extract_strided_slice %9 {offsets = [0, 24], sizes = [8, 8], strides = [1, 1]} : vector<8x32xbf16> to vector<8x8xbf16>
    %cst_79 = arith.constant dense<0.000000e+00> : vector<8x8xf32>
    %309 = tpu.matmul %306, %307, %cst_79 {dimension_numbers = #tpu.dot_dimension_numbers<[1], [1], [0], [0], [0, 0, 1, 0], [], []>} : vector<8x8xbf16>, vector<8x8xbf16>, vector<8x8xf32> -> vector<8x8xf32>
    %310 = vector.extract_strided_slice %10 {offsets = [0, 24], sizes = [128, 8], strides = [1, 1]} : vector<128x32xbf16> to vector<128x8xbf16>
    %cst_80 = arith.constant dense<0.000000e+00> : vector<8x128xf32>
    %311 = tpu.matmul %306, %310, %cst_80 {dimension_numbers = #tpu.dot_dimension_numbers<[1], [1], [0], [0], [0, 0, 1, 0], [], []>} : vector<8x8xbf16>, vector<128x8xbf16>, vector<8x128xf32> -> vector<8x128xf32>
    %312 = vector.extract_strided_slice %11 {offsets = [0, 24], sizes = [128, 8], strides = [1, 1]} : vector<128x32xbf16> to vector<128x8xbf16>
    %cst_81 = arith.constant dense<0.000000e+00> : vector<8x128xf32>
    %313 = tpu.matmul %307, %312, %cst_81 {dimension_numbers = #tpu.dot_dimension_numbers<[1], [1], [0], [0], [0, 0, 1, 0], [], []>} : vector<8x8xbf16>, vector<128x8xbf16>, vector<8x128xf32> -> vector<8x128xf32>
    %314 = tpu.iota {dimensions = array<i32: 0>} : vector<8x1xi32>
    %c7_i32_82 = arith.constant 7 : i32
    %315 = vector.broadcast %c7_i32_82 : i32 to vector<8x1xi32>
    %316 = arith.subi %315, %314 : vector<8x1xi32>
    %317 = vector.extract_strided_slice %311 {offsets = [0, 1], sizes = [8, 127], strides = [1, 1]} : vector<8x128xf32> to vector<8x127xf32>
    %318 = vector.extract_strided_slice %311 {offsets = [0, 0], sizes = [8, 1], strides = [1, 1]} : vector<8x128xf32> to vector<8x1xf32>
    %319 = tpu.concatenate %317, %318 in 1 : vector<8x127xf32>, vector<8x1xf32> -> vector<8x128xf32>
    %c1_i32_83 = arith.constant 1 : i32
    %320 = vector.broadcast %c1_i32_83 : i32 to vector<8x1xi32>
    %321 = arith.andi %316, %320 : vector<8x1xi32>
    %c0_i32_84 = arith.constant 0 : i32
    %322 = vector.broadcast %c0_i32_84 : i32 to vector<8x1xi32>
    %323 = arith.cmpi ne, %321, %322 : vector<8x1xi32>
    %324 = vector.shape_cast %323 : vector<8x1xi1> to vector<8x1xi1>
    %325 = vector.broadcast %324 : vector<8x1xi1> to vector<8x128xi1>
    %326 = arith.select %325, %319, %311 : vector<8x128xi1>, vector<8x128xf32>
    %327 = vector.extract_strided_slice %326 {offsets = [0, 2], sizes = [8, 126], strides = [1, 1]} : vector<8x128xf32> to vector<8x126xf32>
    %328 = vector.extract_strided_slice %326 {offsets = [0, 0], sizes = [8, 2], strides = [1, 1]} : vector<8x128xf32> to vector<8x2xf32>
    %329 = tpu.concatenate %327, %328 in 1 : vector<8x126xf32>, vector<8x2xf32> -> vector<8x128xf32>
    %c2_i32_85 = arith.constant 2 : i32
    %330 = vector.broadcast %c2_i32_85 : i32 to vector<8x1xi32>
    %331 = arith.andi %316, %330 : vector<8x1xi32>
    %c0_i32_86 = arith.constant 0 : i32
    %332 = vector.broadcast %c0_i32_86 : i32 to vector<8x1xi32>
    %333 = arith.cmpi ne, %331, %332 : vector<8x1xi32>
    %334 = vector.shape_cast %333 : vector<8x1xi1> to vector<8x1xi1>
    %335 = vector.broadcast %334 : vector<8x1xi1> to vector<8x128xi1>
    %336 = arith.select %335, %329, %326 : vector<8x128xi1>, vector<8x128xf32>
    %337 = vector.extract_strided_slice %336 {offsets = [0, 4], sizes = [8, 124], strides = [1, 1]} : vector<8x128xf32> to vector<8x124xf32>
    %338 = vector.extract_strided_slice %336 {offsets = [0, 0], sizes = [8, 4], strides = [1, 1]} : vector<8x128xf32> to vector<8x4xf32>
    %339 = tpu.concatenate %337, %338 in 1 : vector<8x124xf32>, vector<8x4xf32> -> vector<8x128xf32>
    %c4_i32_87 = arith.constant 4 : i32
    %340 = vector.broadcast %c4_i32_87 : i32 to vector<8x1xi32>
    %341 = arith.andi %316, %340 : vector<8x1xi32>
    %c0_i32_88 = arith.constant 0 : i32
    %342 = vector.broadcast %c0_i32_88 : i32 to vector<8x1xi32>
    %343 = arith.cmpi ne, %341, %342 : vector<8x1xi32>
    %344 = vector.shape_cast %343 : vector<8x1xi1> to vector<8x1xi1>
    %345 = vector.broadcast %344 : vector<8x1xi1> to vector<8x128xi1>
    %346 = arith.select %345, %339, %336 : vector<8x128xi1>, vector<8x128xf32>
    %347 = vector.extract_strided_slice %346 {offsets = [0, 0], sizes = [8, 8], strides = [1, 1]} : vector<8x128xf32> to vector<8x8xf32>
    %348 = tpu.iota {dimensions = array<i32: 0>} : vector<8x1xi32>
    %c7_i32_89 = arith.constant 7 : i32
    %349 = vector.broadcast %c7_i32_89 : i32 to vector<8x1xi32>
    %350 = arith.subi %349, %348 : vector<8x1xi32>
    %351 = vector.extract_strided_slice %313 {offsets = [0, 1], sizes = [8, 127], strides = [1, 1]} : vector<8x128xf32> to vector<8x127xf32>
    %352 = vector.extract_strided_slice %313 {offsets = [0, 0], sizes = [8, 1], strides = [1, 1]} : vector<8x128xf32> to vector<8x1xf32>
    %353 = tpu.concatenate %351, %352 in 1 : vector<8x127xf32>, vector<8x1xf32> -> vector<8x128xf32>
    %c1_i32_90 = arith.constant 1 : i32
    %354 = vector.broadcast %c1_i32_90 : i32 to vector<8x1xi32>
    %355 = arith.andi %350, %354 : vector<8x1xi32>
    %c0_i32_91 = arith.constant 0 : i32
    %356 = vector.broadcast %c0_i32_91 : i32 to vector<8x1xi32>
    %357 = arith.cmpi ne, %355, %356 : vector<8x1xi32>
    %358 = vector.shape_cast %357 : vector<8x1xi1> to vector<8x1xi1>
    %359 = vector.broadcast %358 : vector<8x1xi1> to vector<8x128xi1>
    %360 = arith.select %359, %353, %313 : vector<8x128xi1>, vector<8x128xf32>
    %361 = vector.extract_strided_slice %360 {offsets = [0, 2], sizes = [8, 126], strides = [1, 1]} : vector<8x128xf32> to vector<8x126xf32>
    %362 = vector.extract_strided_slice %360 {offsets = [0, 0], sizes = [8, 2], strides = [1, 1]} : vector<8x128xf32> to vector<8x2xf32>
    %363 = tpu.concatenate %361, %362 in 1 : vector<8x126xf32>, vector<8x2xf32> -> vector<8x128xf32>
    %c2_i32_92 = arith.constant 2 : i32
    %364 = vector.broadcast %c2_i32_92 : i32 to vector<8x1xi32>
    %365 = arith.andi %350, %364 : vector<8x1xi32>
    %c0_i32_93 = arith.constant 0 : i32
    %366 = vector.broadcast %c0_i32_93 : i32 to vector<8x1xi32>
    %367 = arith.cmpi ne, %365, %366 : vector<8x1xi32>
    %368 = vector.shape_cast %367 : vector<8x1xi1> to vector<8x1xi1>
    %369 = vector.broadcast %368 : vector<8x1xi1> to vector<8x128xi1>
    %370 = arith.select %369, %363, %360 : vector<8x128xi1>, vector<8x128xf32>
    %371 = vector.extract_strided_slice %370 {offsets = [0, 4], sizes = [8, 124], strides = [1, 1]} : vector<8x128xf32> to vector<8x124xf32>
    %372 = vector.extract_strided_slice %370 {offsets = [0, 0], sizes = [8, 4], strides = [1, 1]} : vector<8x128xf32> to vector<8x4xf32>
    %373 = tpu.concatenate %371, %372 in 1 : vector<8x124xf32>, vector<8x4xf32> -> vector<8x128xf32>
    %c4_i32_94 = arith.constant 4 : i32
    %374 = vector.broadcast %c4_i32_94 : i32 to vector<8x1xi32>
    %375 = arith.andi %350, %374 : vector<8x1xi32>
    %c0_i32_95 = arith.constant 0 : i32
    %376 = vector.broadcast %c0_i32_95 : i32 to vector<8x1xi32>
    %377 = arith.cmpi ne, %375, %376 : vector<8x1xi32>
    %378 = vector.shape_cast %377 : vector<8x1xi1> to vector<8x1xi1>
    %379 = vector.broadcast %378 : vector<8x1xi1> to vector<8x128xi1>
    %380 = arith.select %379, %373, %370 : vector<8x128xi1>, vector<8x128xf32>
    %381 = vector.extract_strided_slice %380 {offsets = [0, 0], sizes = [8, 8], strides = [1, 1]} : vector<8x128xf32> to vector<8x8xf32>
    %382 = tpu.transpose %381, [1, 0] : vector<8x8xf32> -> vector<8x8xf32>
    %383 = arith.addf %309, %347 : vector<8x8xf32>
    %384 = arith.addf %383, %382 : vector<8x8xf32>
    %cst_96 = arith.constant 0xFF800000 : f32
    %385 = vector.shape_cast %3 : vector<1x8xi1> to vector<1x8xi1>
    %386 = vector.broadcast %385 : vector<1x8xi1> to vector<8x8xi1>
    %387 = vector.broadcast %cst_96 : f32 to vector<8x8xf32>
    %388 = arith.select %386, %387, %384 : vector<8x8xi1>, vector<8x8xf32>
    %cst_97 = arith.constant dense<0xFF800000> : vector<8xf32>
    %389 = vector.multi_reduction <maximumf>, %388, %cst_97 [1] : vector<8x8xf32> to vector<8xf32>
    %390 = vector.shape_cast %389 : vector<8xf32> to vector<8x1xf32>
    %cst_98 = arith.constant -1.000000e+30 : f32
    %391 = vector.broadcast %cst_98 : f32 to vector<8x1xf32>
    %392 = arith.maximumf %390, %391 : vector<8x1xf32>
    %393 = vector.broadcast %392 : vector<8x1xf32> to vector<8x8xf32>
    %394 = arith.subf %388, %393 : vector<8x8xf32>
    %395 = math.exp %394 : vector<8x8xf32>
    %cst_99 = arith.constant dense<0.000000e+00> : vector<8xf32>
    %396 = vector.multi_reduction <add>, %395, %cst_99 [1] : vector<8x8xf32> to vector<8xf32>
    %397 = vector.shape_cast %396 : vector<8xf32> to vector<8x1xf32>
    %cst_100 = arith.constant 1.000000e-30 : f32
    %398 = vector.broadcast %cst_100 : f32 to vector<8x1xf32>
    %399 = arith.maximumf %397, %398 : vector<8x1xf32>
    %400 = vector.broadcast %399 : vector<8x1xf32> to vector<8x8xf32>
    %401 = arith.divf %395, %400 : vector<8x8xf32>
    %402 = arith.truncf %401 : vector<8x8xf32> to vector<8x8xbf16>
    %cst_101 = arith.constant dense<0.000000e+00> : vector<8x8xf32>
    %403 = tpu.matmul %402, %308, %cst_101 {dimension_numbers = #tpu.dot_dimension_numbers<[1], [0], [0], [1], [0, 0, 1, 1], [], []>} : vector<8x8xbf16>, vector<8x8xbf16>, vector<8x8xf32> -> vector<8x8xf32>
    %404 = tpu.concatenate %109, %207, %305, %403 in 1 : vector<8x8xf32>, vector<8x8xf32>, vector<8x8xf32>, vector<8x8xf32> -> vector<8x32xf32>
    %405 = arith.truncf %404 : vector<8x32xf32> to vector<8x32xbf16>
    %c0_102 = arith.constant 0 : index
    %c0_103 = arith.constant 0 : index
    %c0_104 = arith.constant 0 : index
    %406 = vector.load %arg8[%c0_102, %c0_103, %c0_104] : memref<1x8x32xbf16, #tpu.memory_space<vmem>>, vector<1x8x32xbf16>
    %407 = vector.shape_cast %406 : vector<1x8x32xbf16> to vector<8x32xbf16>
    %408 = vector.shape_cast %405 : vector<8x32xbf16> to vector<1x8x32xbf16>
    tpu.vector_store %arg8[%c0_102, %c0_103, %c0_104], %408 {strides = array<i32>} : memref<1x8x32xbf16, #tpu.memory_space<vmem>>, vector<1x8x32xbf16>,
    return
  }
  func.func @transform_0(%arg0: i32, %arg1: i32) -> (i32, i32, i32) {
    %c0_i32 = arith.constant 0 : i32
    %c0_i32_0 = arith.constant 0 : i32
    return %arg0, %c0_i32, %arg1 : i32, i32, i32
  }
  func.func @transform_1(%arg0: i32, %arg1: i32) -> (i32, i32, i32) {
    %c0_i32 = arith.constant 0 : i32
    %c0_i32_0 = arith.constant 0 : i32
    return %arg0, %c0_i32, %arg1 : i32, i32, i32
  }
  func.func @transform_2(%arg0: i32, %arg1: i32) -> (i32, i32, i32) {
    %c0_i32 = arith.constant 0 : i32
    %c0_i32_0 = arith.constant 0 : i32
    return %arg0, %c0_i32, %arg1 : i32, i32, i32
  }
  func.func @transform_3(%arg0: i32, %arg1: i32) -> (i32, i32) {
    %c0_i32 = arith.constant 0 : i32
    %c0_i32_0 = arith.constant 0 : i32
    return %c0_i32, %arg1 : i32, i32
  }
  func.func @transform_4(%arg0: i32, %arg1: i32) -> (i32, i32) {
    %c0_i32 = arith.constant 0 : i32
    %c0_i32_0 = arith.constant 0 : i32
    return %c0_i32, %arg1 : i32, i32
  }
  func.func @transform_5(%arg0: i32, %arg1: i32) -> (i32, i32, i32) {
    %c0_i32 = arith.constant 0 : i32
    %c0_i32_0 = arith.constant 0 : i32
    %c0_i32_1 = arith.constant 0 : i32
    return %arg0, %c0_i32, %c0_i32_0 : i32, i32, i32
  }
  func.func @transform_6(%arg0: i32, %arg1: i32) -> (i32, i32, i32) {
    %c0_i32 = arith.constant 0 : i32
    %c0_i32_0 = arith.constant 0 : i32
    return %arg0, %c0_i32, %arg1 : i32, i32, i32
  }
}

module attributes {stable_mosaic.version = 11 : i64} {
  func.func @out_ffn_kernel(%arg0: i32, %arg1: memref<16x32xbf16, #tpu.memory_space<vmem>>, %arg2: memref<16x32xf32, #tpu.memory_space<vmem>>, %arg3: memref<32x32xbf16, #tpu.memory_space<vmem>>, %arg4: memref<1x32xf32, #tpu.memory_space<vmem>>, %arg5: memref<1x32xf32, #tpu.memory_space<vmem>>, %arg6: memref<1x32xf32, #tpu.memory_space<vmem>>, %arg7: memref<32x64xbf16, #tpu.memory_space<vmem>>, %arg8: memref<32x64xbf16, #tpu.memory_space<vmem>>, %arg9: memref<64x32xbf16, #tpu.memory_space<vmem>>, %arg10: memref<16x32xf32, #tpu.memory_space<vmem>>) attributes {dimension_semantics = [#tpu.dimension_semantics<parallel>], iteration_bounds = array<i64: 1>, scalar_prefetch = 0 : i64, scratch_operands = 0 : i64, tpu.core_type = #tpu.core_type<tc>, window_params = [{transform_indices = @transform_0, window_bounds = array<i64: 16, 32>}, {transform_indices = @transform_1, window_bounds = array<i64: 16, 32>}, {pipeline_mode = #tpu.pipeline_mode<synchronous>, transform_indices = @transform_2, window_bounds = array<i64: 32, 32>}, {pipeline_mode = #tpu.pipeline_mode<synchronous>, transform_indices = @transform_3, window_bounds = array<i64: 1, 32>}, {pipeline_mode = #tpu.pipeline_mode<synchronous>, transform_indices = @transform_4, window_bounds = array<i64: 1, 32>}, {pipeline_mode = #tpu.pipeline_mode<synchronous>, transform_indices = @transform_5, window_bounds = array<i64: 1, 32>}, {pipeline_mode = #tpu.pipeline_mode<synchronous>, transform_indices = @transform_6, window_bounds = array<i64: 32, 64>}, {pipeline_mode = #tpu.pipeline_mode<synchronous>, transform_indices = @transform_7, window_bounds = array<i64: 32, 64>}, {pipeline_mode = #tpu.pipeline_mode<synchronous>, transform_indices = @transform_8, window_bounds = array<i64: 64, 32>}, {transform_indices = @transform_9, window_bounds = array<i64: 16, 32>}]} {
    %c0 = arith.constant 0 : index
    %c0_0 = arith.constant 0 : index
    %0 = vector.load %arg1[%c0, %c0_0] : memref<16x32xbf16, #tpu.memory_space<vmem>>, vector<16x32xbf16>
    %c0_1 = arith.constant 0 : index
    %c0_2 = arith.constant 0 : index
    %1 = vector.load %arg3[%c0_1, %c0_2] : memref<32x32xbf16, #tpu.memory_space<vmem>>, vector<32x32xbf16>
    %cst = arith.constant dense<0.000000e+00> : vector<16x32xf32>
    %2 = tpu.matmul %0, %1, %cst {dimension_numbers = #tpu.dot_dimension_numbers<[1], [0], [0], [1], [0, 0, 1, 1], [], []>} : vector<16x32xbf16>, vector<32x32xbf16>, vector<16x32xf32> -> vector<16x32xf32>
    %c0_3 = arith.constant 0 : index
    %c0_4 = arith.constant 0 : index
    %3 = vector.load %arg4[%c0_3, %c0_4] : memref<1x32xf32, #tpu.memory_space<vmem>>, vector<1x32xf32>
    %4 = vector.broadcast %3 : vector<1x32xf32> to vector<16x32xf32>
    %5 = arith.addf %2, %4 : vector<16x32xf32>
    %c0_5 = arith.constant 0 : index
    %c0_6 = arith.constant 0 : index
    %6 = vector.load %arg2[%c0_5, %c0_6] : memref<16x32xf32, #tpu.memory_space<vmem>>, vector<16x32xf32>
    %cst_7 = arith.constant dense<0.000000e+00> : vector<16xf32>
    %7 = vector.multi_reduction <add>, %5, %cst_7 [1] : vector<16x32xf32> to vector<16xf32>
    %8 = vector.shape_cast %7 : vector<16xf32> to vector<16x1xf32>
    %cst_8 = arith.constant 3.200000e+01 : f32
    %9 = vector.broadcast %cst_8 : f32 to vector<16x1xf32>
    %10 = arith.divf %8, %9 : vector<16x1xf32>
    %11 = vector.broadcast %10 : vector<16x1xf32> to vector<16x32xf32>
    %12 = arith.subf %5, %11 : vector<16x32xf32>
    %13 = arith.mulf %12, %12 : vector<16x32xf32>
    %cst_9 = arith.constant dense<0.000000e+00> : vector<16xf32>
    %14 = vector.multi_reduction <add>, %13, %cst_9 [1] : vector<16x32xf32> to vector<16xf32>
    %15 = vector.shape_cast %14 : vector<16xf32> to vector<16x1xf32>
    %cst_10 = arith.constant 3.200000e+01 : f32
    %16 = vector.broadcast %cst_10 : f32 to vector<16x1xf32>
    %17 = arith.divf %15, %16 : vector<16x1xf32>
    %cst_11 = arith.constant 1.000000e-07 : f32
    %18 = vector.broadcast %cst_11 : f32 to vector<16x1xf32>
    %19 = arith.addf %17, %18 : vector<16x1xf32>
    %20 = math.rsqrt %19 : vector<16x1xf32>
    %21 = vector.broadcast %20 : vector<16x1xf32> to vector<16x32xf32>
    %22 = arith.mulf %12, %21 : vector<16x32xf32>
    %c0_12 = arith.constant 0 : index
    %c0_13 = arith.constant 0 : index
    %23 = vector.load %arg5[%c0_12, %c0_13] : memref<1x32xf32, #tpu.memory_space<vmem>>, vector<1x32xf32>
    %24 = vector.broadcast %23 : vector<1x32xf32> to vector<16x32xf32>
    %25 = arith.mulf %22, %24 : vector<16x32xf32>
    %26 = arith.addf %6, %25 : vector<16x32xf32>
    %c0_14 = arith.constant 0 : index
    %c0_15 = arith.constant 0 : index
    %27 = vector.load %arg6[%c0_14, %c0_15] : memref<1x32xf32, #tpu.memory_space<vmem>>, vector<1x32xf32>
    %28 = vector.broadcast %27 : vector<1x32xf32> to vector<16x32xf32>
    %29 = arith.addf %26, %28 : vector<16x32xf32>
    %cst_16 = arith.constant dense<0.000000e+00> : vector<16xf32>
    %30 = vector.multi_reduction <add>, %29, %cst_16 [1] : vector<16x32xf32> to vector<16xf32>
    %31 = vector.shape_cast %30 : vector<16xf32> to vector<16x1xf32>
    %cst_17 = arith.constant 3.200000e+01 : f32
    %32 = vector.broadcast %cst_17 : f32 to vector<16x1xf32>
    %33 = arith.divf %31, %32 : vector<16x1xf32>
    %34 = vector.broadcast %33 : vector<16x1xf32> to vector<16x32xf32>
    %35 = arith.subf %29, %34 : vector<16x32xf32>
    %36 = arith.mulf %35, %35 : vector<16x32xf32>
    %cst_18 = arith.constant dense<0.000000e+00> : vector<16xf32>
    %37 = vector.multi_reduction <add>, %36, %cst_18 [1] : vector<16x32xf32> to vector<16xf32>
    %38 = vector.shape_cast %37 : vector<16xf32> to vector<16x1xf32>
    %cst_19 = arith.constant 3.200000e+01 : f32
    %39 = vector.broadcast %cst_19 : f32 to vector<16x1xf32>
    %40 = arith.divf %38, %39 : vector<16x1xf32>
    %cst_20 = arith.constant 1.000000e-07 : f32
    %41 = vector.broadcast %cst_20 : f32 to vector<16x1xf32>
    %42 = arith.addf %40, %41 : vector<16x1xf32>
    %43 = math.rsqrt %42 : vector<16x1xf32>
    %44 = vector.broadcast %43 : vector<16x1xf32> to vector<16x32xf32>
    %45 = arith.mulf %35, %44 : vector<16x32xf32>
    %46 = arith.truncf %45 : vector<16x32xf32> to vector<16x32xbf16>
    %c0_21 = arith.constant 0 : index
    %c0_22 = arith.constant 0 : index
    %47 = vector.load %arg7[%c0_21, %c0_22] : memref<32x64xbf16, #tpu.memory_space<vmem>>, vector<32x64xbf16>
    %cst_23 = arith.constant dense<0.000000e+00> : vector<16x64xf32>
    %48 = tpu.matmul %46, %47, %cst_23 {dimension_numbers = #tpu.dot_dimension_numbers<[1], [0], [0], [1], [0, 0, 1, 1], [], []>} : vector<16x32xbf16>, vector<32x64xbf16>, vector<16x64xf32> -> vector<16x64xf32>
    %c0_24 = arith.constant 0 : index
    %c0_25 = arith.constant 0 : index
    %49 = vector.load %arg8[%c0_24, %c0_25] : memref<32x64xbf16, #tpu.memory_space<vmem>>, vector<32x64xbf16>
    %cst_26 = arith.constant dense<0.000000e+00> : vector<16x64xf32>
    %50 = tpu.matmul %46, %49, %cst_26 {dimension_numbers = #tpu.dot_dimension_numbers<[1], [0], [0], [1], [0, 0, 1, 1], [], []>} : vector<16x32xbf16>, vector<32x64xbf16>, vector<16x64xf32> -> vector<16x64xf32>
    %cst_27 = arith.constant 5.000000e-01 : f32
    %51 = vector.broadcast %cst_27 : f32 to vector<16x64xf32>
    %52 = arith.mulf %51, %50 : vector<16x64xf32>
    %cst_28 = arith.constant 4.471500e-02 : f32
    %53 = vector.broadcast %cst_28 : f32 to vector<16x64xf32>
    %54 = arith.mulf %53, %50 : vector<16x64xf32>
    %55 = arith.mulf %54, %50 : vector<16x64xf32>
    %56 = arith.mulf %55, %50 : vector<16x64xf32>
    %57 = arith.addf %50, %56 : vector<16x64xf32>
    %cst_29 = arith.constant 0.797884583 : f32
    %58 = vector.broadcast %cst_29 : f32 to vector<16x64xf32>
    %59 = arith.mulf %58, %57 : vector<16x64xf32>
    %60 = math.tanh %59 : vector<16x64xf32>
    %cst_30 = arith.constant 1.000000e+00 : f32
    %61 = vector.broadcast %cst_30 : f32 to vector<16x64xf32>
    %62 = arith.addf %61, %60 : vector<16x64xf32>
    %63 = arith.mulf %52, %62 : vector<16x64xf32>
    %64 = arith.mulf %48, %63 : vector<16x64xf32>
    %cst_31 = arith.constant dense<0.000000e+00> : vector<16xf32>
    %65 = vector.multi_reduction <add>, %64, %cst_31 [1] : vector<16x64xf32> to vector<16xf32>
    %66 = vector.shape_cast %65 : vector<16xf32> to vector<16x1xf32>
    %cst_32 = arith.constant 6.400000e+01 : f32
    %67 = vector.broadcast %cst_32 : f32 to vector<16x1xf32>
    %68 = arith.divf %66, %67 : vector<16x1xf32>
    %69 = vector.broadcast %68 : vector<16x1xf32> to vector<16x64xf32>
    %70 = arith.subf %64, %69 : vector<16x64xf32>
    %71 = arith.mulf %70, %70 : vector<16x64xf32>
    %cst_33 = arith.constant dense<0.000000e+00> : vector<16xf32>
    %72 = vector.multi_reduction <add>, %71, %cst_33 [1] : vector<16x64xf32> to vector<16xf32>
    %73 = vector.shape_cast %72 : vector<16xf32> to vector<16x1xf32>
    %cst_34 = arith.constant 6.400000e+01 : f32
    %74 = vector.broadcast %cst_34 : f32 to vector<16x1xf32>
    %75 = arith.divf %73, %74 : vector<16x1xf32>
    %cst_35 = arith.constant 1.000000e-07 : f32
    %76 = vector.broadcast %cst_35 : f32 to vector<16x1xf32>
    %77 = arith.addf %75, %76 : vector<16x1xf32>
    %78 = math.rsqrt %77 : vector<16x1xf32>
    %79 = vector.broadcast %78 : vector<16x1xf32> to vector<16x64xf32>
    %80 = arith.mulf %70, %79 : vector<16x64xf32>
    %81 = arith.truncf %80 : vector<16x64xf32> to vector<16x64xbf16>
    %c0_36 = arith.constant 0 : index
    %c0_37 = arith.constant 0 : index
    %82 = vector.load %arg9[%c0_36, %c0_37] : memref<64x32xbf16, #tpu.memory_space<vmem>>, vector<64x32xbf16>
    %cst_38 = arith.constant dense<0.000000e+00> : vector<16x32xf32>
    %83 = tpu.matmul %81, %82, %cst_38 {dimension_numbers = #tpu.dot_dimension_numbers<[1], [0], [0], [1], [0, 0, 1, 1], [], []>} : vector<16x64xbf16>, vector<64x32xbf16>, vector<16x32xf32> -> vector<16x32xf32>
    %84 = arith.addf %29, %83 : vector<16x32xf32>
    %c0_39 = arith.constant 0 : index
    %c0_40 = arith.constant 0 : index
    %85 = vector.load %arg10[%c0_39, %c0_40] : memref<16x32xf32, #tpu.memory_space<vmem>>, vector<16x32xf32>
    tpu.vector_store %arg10[%c0_39, %c0_40], %84 {strides = array<i32>} : memref<16x32xf32, #tpu.memory_space<vmem>>, vector<16x32xf32>,
    return
  }
  func.func @transform_0(%arg0: i32) -> (i32, i32) {
    %c0_i32 = arith.constant 0 : i32
    %c0_i32_0 = arith.constant 0 : i32
    return %arg0, %c0_i32 : i32, i32
  }
  func.func @transform_1(%arg0: i32) -> (i32, i32) {
    %c0_i32 = arith.constant 0 : i32
    %c0_i32_0 = arith.constant 0 : i32
    return %arg0, %c0_i32 : i32, i32
  }
  func.func @transform_2(%arg0: i32) -> (i32, i32) {
    %c0_i32 = arith.constant 0 : i32
    %c0_i32_0 = arith.constant 0 : i32
    %c0_i32_1 = arith.constant 0 : i32
    return %c0_i32, %c0_i32_0 : i32, i32
  }
  func.func @transform_3(%arg0: i32) -> (i32, i32) {
    %c0_i32 = arith.constant 0 : i32
    %c0_i32_0 = arith.constant 0 : i32
    %c0_i32_1 = arith.constant 0 : i32
    return %c0_i32, %c0_i32_0 : i32, i32
  }
  func.func @transform_4(%arg0: i32) -> (i32, i32) {
    %c0_i32 = arith.constant 0 : i32
    %c0_i32_0 = arith.constant 0 : i32
    %c0_i32_1 = arith.constant 0 : i32
    return %c0_i32, %c0_i32_0 : i32, i32
  }
  func.func @transform_5(%arg0: i32) -> (i32, i32) {
    %c0_i32 = arith.constant 0 : i32
    %c0_i32_0 = arith.constant 0 : i32
    %c0_i32_1 = arith.constant 0 : i32
    return %c0_i32, %c0_i32_0 : i32, i32
  }
  func.func @transform_6(%arg0: i32) -> (i32, i32) {
    %c0_i32 = arith.constant 0 : i32
    %c0_i32_0 = arith.constant 0 : i32
    %c0_i32_1 = arith.constant 0 : i32
    return %c0_i32, %c0_i32_0 : i32, i32
  }
  func.func @transform_7(%arg0: i32) -> (i32, i32) {
    %c0_i32 = arith.constant 0 : i32
    %c0_i32_0 = arith.constant 0 : i32
    %c0_i32_1 = arith.constant 0 : i32
    return %c0_i32, %c0_i32_0 : i32, i32
  }
  func.func @transform_8(%arg0: i32) -> (i32, i32) {
    %c0_i32 = arith.constant 0 : i32
    %c0_i32_0 = arith.constant 0 : i32
    %c0_i32_1 = arith.constant 0 : i32
    return %c0_i32, %c0_i32_0 : i32, i32
  }
  func.func @transform_9(%arg0: i32) -> (i32, i32) {
    %c0_i32 = arith.constant 0 : i32
    %c0_i32_0 = arith.constant 0 : i32
    return %arg0, %c0_i32 : i32, i32
  }
}

</mosaic_0001>

<llo_original>
// kernel: tpu_custom_call.1
$region0: #{tpu_custom_call.1}
  #allocation0 [shape = 'u32[]', space=smem, size = 0x4, offset = 0x4, fixed_abs, tag = 'smem constant byte address 0x4 - core index']
  #allocation1 [shape = 'u32[144,128]{1,0:T(1,128)}', space=vmem, size = 0x12000, scoped, tag = 'internal scratch']
  %s0 = inlined_call_operand.hbm [shape: f32[16,256], index: 0, kind: input, shape index: {}]
  %s1 = inlined_call_operand.hbm [shape: f32[16,256], index: 1, kind: output, shape index: {}]
  %s2 = sld [smem:[#allocation0]]
  $region18: #{tpu_custom_call.1} parent=0
    _
  %s4 = ssub.s32 1, %s2
  %s5 = scalar_select 0, %s4, %s2
  $region1: #{tpu_custom_call.1} parent=0
    #allocation2 [shape = 'u8[16384]{0}', space=vmem, size = 0x4000, scoped, tag = 'input window, operand 0, single buffered']
    #allocation3 [shape = 's32[1]{0}', space=sflag, size = 0x4, scoped, tag = 'scoped memory for tpu_custom_call.1']
    #allocation4 [shape = 's32[1]{0}', space=sflag, size = 0x4, scoped, tag = 'scoped memory for tpu_custom_call.1']
    #allocation5 [shape = 'u8[16384]{0}', space=vmem, size = 0x4000, scoped, tag = 'output window, operand 0, single buffered']
    %6 = vsyncpa [#allocation3], 0
    %7 = vsyncpa [#allocation4], 0
    // Predicated region
    $region2: #{tpu_custom_call.1} parent=1 // pred_check
      _
    $region3: #{tpu_custom_call.1} parent=1 // pred_check_branch
      %9 = sbr.rel (0) target = $region5
    $region4: #{tpu_custom_call.1} parent=1 // pred_region
      %s11 = ssub.s32 512, 512
      %12 = vsyncadd [#allocation3], %s11
      %s13 = sshll.u32 [#allocation2], 4
      %s14 = int_to_ptr.vmem [resolvable:$true] %s13
      %19 = dma.hbm_to_vmem [thread:$0]  %s0, 512, %s14, [#allocation3], 256, 256, 16
    $region5: #{tpu_custom_call.1} parent=1 // pred_fallthru
      _
    // Predicated region
    $region6: #{tpu_custom_call.1} parent=1 // pred_check
      _
    $region7: #{tpu_custom_call.1} parent=1 // pred_check_branch
      %21 = sbr.rel (0) target = $region9
    $region8: #{tpu_custom_call.1} parent=1 // pred_region
      %22 = dma.done [#allocation3], 512
    $region9: #{tpu_custom_call.1} parent=1 // pred_fallthru
      _
    %v23 = vld [vmem:[#allocation2] sm:$0xff]
    %v24 = vld [vmem:[#allocation2 + $0x8] sm:$0xff]
    %v25 = vld [vmem:[#allocation2 + $0x10] sm:$0xff]
    %v26 = vld [vmem:[#allocation2 + $0x18] sm:$0xff]
    %27 = vrot.lane.b32.xlu0 %v23, 3
    %v28 = vpop.permute.xlu0 %27
    %29 = vrot.lane.b32.xlu0 %v25, 3
    %v30 = vpop.permute.xlu0 %29
    %31 = vrot.lane.b32.xlu0 %v24, 3
    %v32 = vpop.permute.xlu0 %31
    %33 = vrot.lane.b32.xlu0 %v26, 3
    %v34 = vpop.permute.xlu0 %33
    %v35 = vlaneseq
    %v36 = vand.u32 %v35, 127
    %vm37 = vcmp.lt.s32.totalorder %v36, 3
    %v38 = vsel %vm37, %v28, %v32
    %v39 = vsel %vm37, %v30, %v34
    %v40 = vsel %vm37, %v32, %v28
    %v41 = vsel %vm37, %v34, %v30
    %42 = vst [vmem:[#allocation5] sm:$0xff] %v40
    %43 = vst [vmem:[#allocation5 + $0x8] sm:$0xff] %v38
    %44 = vst [vmem:[#allocation5 + $0x10] sm:$0xff] %v41
    %45 = vst [vmem:[#allocation5 + $0x18] sm:$0xff] %v39
    // Predicated region
    $region10: #{tpu_custom_call.1} parent=1 // pred_check
      _
    $region11: #{tpu_custom_call.1} parent=1 // pred_check_branch
      %47 = sbr.rel (0) target = $region13
    $region12: #{tpu_custom_call.1} parent=1 // pred_region
      %s49 = ssub.s32 512, 512
      %50 = vsyncadd [#allocation4], %s49
      %s51 = sshll.u32 [#allocation5], 4
      %s52 = int_to_ptr.vmem [resolvable:$true] %s51
      %57 = dma.vmem_to_hbm [thread:$0]  %s52, 512, %s1, [#allocation4], 256, 256, 16
    $region13: #{tpu_custom_call.1} parent=1 // pred_fallthru
      _
    // Predicated region
    $region14: #{tpu_custom_call.1} parent=1 // pred_check
      _
    $region15: #{tpu_custom_call.1} parent=1 // pred_check_branch
      %59 = sbr.rel (0) target = $region17
    $region16: #{tpu_custom_call.1} parent=1 // pred_region
      %60 = dma.done [#allocation4], 512
    $region17: #{tpu_custom_call.1} parent=1 // pred_fallthru
      _
    %61 = vsyncpa [#allocation3], 1
    %62 = vsyncpa [#allocation4], 1

// kernel: tpu_custom_call.1
$region0: #{tpu_custom_call.1}
  #allocation0 [shape = 'u32[]', space=smem, size = 0x4, offset = 0x4, fixed_abs, tag = 'smem constant byte address 0x4 - core index']
  #allocation1 [shape = 'u32[144,128]{1,0:T(1,128)}', space=vmem, size = 0x12000, scoped, tag = 'internal scratch']
  %s0 = inlined_call_operand.hbm [shape: f32[16,256], index: 0, kind: input, shape index: {}]
  %s1 = inlined_call_operand.hbm [shape: f32[16,256], index: 1, kind: output, shape index: {}]
  %s2 = sld [smem:[#allocation0]]
  $region18: #{tpu_custom_call.1} parent=0
    _
  %s4 = ssub.s32 1, %s2
  %s5 = scalar_select 0, %s4, %s2
  $region1: #{tpu_custom_call.1} parent=0
    #allocation2 [shape = 'u8[16384]{0}', space=vmem, size = 0x4000, scoped, tag = 'input window, operand 0, single buffered']
    #allocation3 [shape = 's32[1]{0}', space=sflag, size = 0x4, scoped, tag = 'scoped memory for tpu_custom_call.1']
    #allocation4 [shape = 's32[1]{0}', space=sflag, size = 0x4, scoped, tag = 'scoped memory for tpu_custom_call.1']
    #allocation5 [shape = 'u8[16384]{0}', space=vmem, size = 0x4000, scoped, tag = 'output window, operand 0, single buffered']
    %6 = vsyncpa [#allocation3], 0
    %7 = vsyncpa [#allocation4], 0
    // Predicated region
    $region2: #{tpu_custom_call.1} parent=1 // pred_check
      _
    $region3: #{tpu_custom_call.1} parent=1 // pred_check_branch
      %9 = sbr.rel (0) target = $region5
    $region4: #{tpu_custom_call.1} parent=1 // pred_region
      %s11 = ssub.s32 512, 512
      %12 = vsyncadd [#allocation3], %s11
      %s13 = sshll.u32 [#allocation2], 4
      %s14 = int_to_ptr.vmem [resolvable:$true] %s13
      %19 = dma.hbm_to_vmem [thread:$0]  %s0, 512, %s14, [#allocation3], 256, 256, 16
    $region5: #{tpu_custom_call.1} parent=1 // pred_fallthru
      _
    // Predicated region
    $region6: #{tpu_custom_call.1} parent=1 // pred_check
      _
    $region7: #{tpu_custom_call.1} parent=1 // pred_check_branch
      %21 = sbr.rel (0) target = $region9
    $region8: #{tpu_custom_call.1} parent=1 // pred_region
      %22 = dma.done [#allocation3], 512
    $region9: #{tpu_custom_call.1} parent=1 // pred_fallthru
      _
    %v23 = vld [vmem:[#allocation2] sm:$0xff]
    %v24 = vld [vmem:[#allocation2 + $0x8] sm:$0xff]
    %v25 = vld [vmem:[#allocation2 + $0x10] sm:$0xff]
    %v26 = vld [vmem:[#allocation2 + $0x18] sm:$0xff]
    %s28 = sor.u32 256, 113
    %29 = vrot.lane.b32.xlu0 %v23, %s28
    %v30 = vpop.permute.xlu0 %29
    %s32 = sor.u32 256, 113
    %33 = vrot.lane.b32.xlu0 %v24, %s32
    %v34 = vpop.permute.xlu0 %33
    %v35 = vlaneseq
    %v36 = vshrl.u32 %v35, 7
    %v37 = vadd.s32 %v36, 113
    %v38 = vlaneseq
    %v39 = vand.u32 %v38, 127
    %vm40 = vcmp.lt.s32.totalorder %v39, %v37
    %v41 = vsel %vm40, %v30, %v34
    %v42 = vsel %vm40, %v34, %v30
    %s44 = sor.u32 256, 121
    %45 = vrot.lane.b32.xlu0 %v25, %s44
    %v46 = vpop.permute.xlu0 %45
    %s48 = sor.u32 256, 121
    %49 = vrot.lane.b32.xlu0 %v26, %s48
    %v50 = vpop.permute.xlu0 %49
    %v51 = vadd.s32 %v36, 121
    %vm52 = vcmp.lt.s32.totalorder %v39, %v51
    %v53 = vsel %vm52, %v46, %v50
    %v54 = vsel %vm52, %v50, %v46
    %55 = vst [vmem:[#allocation5] sm:$0xff] %v41
    %56 = vst [vmem:[#allocation5 + $0x8] sm:$0xff] %v42
    %57 = vst [vmem:[#allocation5 + $0x10] sm:$0xff] %v53
    %58 = vst [vmem:[#allocation5 + $0x18] sm:$0xff] %v54
    // Predicated region
    $region10: #{tpu_custom_call.1} parent=1 // pred_check
      _
    $region11: #{tpu_custom_call.1} parent=1 // pred_check_branch
      %60 = sbr.rel (0) target = $region13
    $region12: #{tpu_custom_call.1} parent=1 // pred_region
      %s62 = ssub.s32 512, 512
      %63 = vsyncadd [#allocation4], %s62
      %s64 = sshll.u32 [#allocation5], 4
      %s65 = int_to_ptr.vmem [resolvable:$true] %s64
      %70 = dma.vmem_to_hbm [thread:$0]  %s65, 512, %s1, [#allocation4], 256, 256, 16
    $region13: #{tpu_custom_call.1} parent=1 // pred_fallthru
      _
    // Predicated region
    $region14: #{tpu_custom_call.1} parent=1 // pred_check
      _
    $region15: #{tpu_custom_call.1} parent=1 // pred_check_branch
      %72 = sbr.rel (0) target = $region17
    $region16: #{tpu_custom_call.1} parent=1 // pred_region
      %73 = dma.done [#allocation4], 512
    $region17: #{tpu_custom_call.1} parent=1 // pred_fallthru
      _
    %74 = vsyncpa [#allocation3], 1
    %75 = vsyncpa [#allocation4], 1

// kernel: tpu_custom_call.1
$region0: #{tpu_custom_call.1}
  #allocation0 [shape = 'u32[]', space=smem, size = 0x4, offset = 0x4, fixed_abs, tag = 'smem constant byte address 0x4 - core index']
  #allocation1 [shape = 'u32[144,128]{1,0:T(1,128)}', space=vmem, size = 0x12000, scoped, tag = 'internal scratch']
  %s0 = inlined_call_operand.hbm [shape: f32[16,256], index: 0, kind: input, shape index: {}]
  %s1 = inlined_call_operand.hbm [shape: f32[16,256], index: 1, kind: output, shape index: {}]
  %s2 = sld [smem:[#allocation0]]
  $region18: #{tpu_custom_call.1} parent=0
    _
  %s4 = ssub.s32 1, %s2
  %s5 = scalar_select 0, %s4, %s2
  $region1: #{tpu_custom_call.1} parent=0
    #allocation2 [shape = 'u8[16384]{0}', space=vmem, size = 0x4000, scoped, tag = 'input window, operand 0, single buffered']
    #allocation3 [shape = 's32[1]{0}', space=sflag, size = 0x4, scoped, tag = 'scoped memory for tpu_custom_call.1']
    #allocation4 [shape = 's32[1]{0}', space=sflag, size = 0x4, scoped, tag = 'scoped memory for tpu_custom_call.1']
    #allocation5 [shape = 'u8[16384]{0}', space=vmem, size = 0x4000, scoped, tag = 'output window, operand 0, single buffered']
    %6 = vsyncpa [#allocation3], 0
    %7 = vsyncpa [#allocation4], 0
    // Predicated region
    $region2: #{tpu_custom_call.1} parent=1 // pred_check
      _
    $region3: #{tpu_custom_call.1} parent=1 // pred_check_branch
      %9 = sbr.rel (0) target = $region5
    $region4: #{tpu_custom_call.1} parent=1 // pred_region
      %s11 = ssub.s32 512, 512
      %12 = vsyncadd [#allocation3], %s11
      %s13 = sshll.u32 [#allocation2], 4
      %s14 = int_to_ptr.vmem [resolvable:$true] %s13
      %19 = dma.hbm_to_vmem [thread:$0]  %s0, 512, %s14, [#allocation3], 256, 256, 16
    $region5: #{tpu_custom_call.1} parent=1 // pred_fallthru
      _
    // Predicated region
    $region6: #{tpu_custom_call.1} parent=1 // pred_check
      _
    $region7: #{tpu_custom_call.1} parent=1 // pred_check_branch
      %21 = sbr.rel (0) target = $region9
    $region8: #{tpu_custom_call.1} parent=1 // pred_region
      %22 = dma.done [#allocation3], 512
    $region9: #{tpu_custom_call.1} parent=1 // pred_fallthru
      _
    %v23 = vld [vmem:[#allocation2] sm:$0xff]
    %v24 = vld [vmem:[#allocation2 + $0x8] sm:$0xff]
    %v25 = vld [vmem:[#allocation2 + $0x10] sm:$0xff]
    %v26 = vld [vmem:[#allocation2 + $0x18] sm:$0xff]
    %s28 = sor.u32 3840, 15
    %29 = vrot.lane.b32.xlu0 %v23, %s28
    %v30 = vpop.permute.xlu0 %29
    %s32 = sor.u32 3840, 15
    %33 = vrot.lane.b32.xlu0 %v24, %s32
    %v34 = vpop.permute.xlu0 %33
    %v35 = vlaneseq
    %v36 = vshrl.u32 %v35, 7
    %v37 = vmul.u32 %v36, 15
    %v38 = vadd.s32 %v37, 15
    %v39 = vlaneseq
    %v40 = vand.u32 %v39, 127
    %vm41 = vcmp.lt.s32.totalorder %v40, %v38
    %v42 = vsel %vm41, %v30, %v34
    %v43 = vsel %vm41, %v34, %v30
    %s45 = sor.u32 3840, 7
    %46 = vrot.lane.b32.xlu0 %v25, %s45
    %v47 = vpop.permute.xlu0 %46
    %s49 = sor.u32 3840, 7
    %50 = vrot.lane.b32.xlu0 %v26, %s49
    %v51 = vpop.permute.xlu0 %50
    %v52 = vadd.s32 %v37, 7
    %vm53 = vcmp.lt.s32.totalorder %v40, %v52
    %v54 = vsel %vm53, %v47, %v51
    %v55 = vsel %vm53, %v51, %v47
    %56 = vst [vmem:[#allocation5] sm:$0xff] %v43
    %57 = vst [vmem:[#allocation5 + $0x8] sm:$0xff] %v42
    %58 = vst [vmem:[#allocation5 + $0x10] sm:$0xff] %v54
    %59 = vst [vmem:[#allocation5 + $0x18] sm:$0xff] %v55
    // Predicated region
    $region10: #{tpu_custom_call.1} parent=1 // pred_check
      _
    $region11: #{tpu_custom_call.1} parent=1 // pred_check_branch
      %61 = sbr.rel (0) target = $region13
    $region12: #{tpu_custom_call.1} parent=1 // pred_region
      %s63 = ssub.s32 512, 512
      %64 = vsyncadd [#allocation4], %s63
      %s65 = sshll.u32 [#allocation5], 4
      %s66 = int_to_ptr.vmem [resolvable:$true] %s65
      %71 = dma.vmem_to_hbm [thread:$0]  %s66, 512, %s1, [#allocation4], 256, 256, 16
    $region13: #{tpu_custom_call.1} parent=1 // pred_fallthru
      _
    // Predicated region
    $region14: #{tpu_custom_call.1} parent=1 // pred_check
      _
    $region15: #{tpu_custom_call.1} parent=1 // pred_check_branch
      %73 = sbr.rel (0) target = $region17
    $region16: #{tpu_custom_call.1} parent=1 // pred_region
      %74 = dma.done [#allocation4], 512
    $region17: #{tpu_custom_call.1} parent=1 // pred_fallthru
      _
    %75 = vsyncpa [#allocation3], 1
    %76 = vsyncpa [#allocation4], 1

// kernel: encoder_forward.6
$region0: #{encoder_forward.6}
  #allocation0 [shape = 'u32[]', space=smem, size = 0x4, offset = 0x4, fixed_abs, tag = 'smem constant byte address 0x4 - core index']
  #allocation1 [shape = 'u32[144,128]{1,0:T(1,128)}', space=vmem, size = 0x12000, scoped, tag = 'internal scratch']
  %s0 = inlined_call_operand.vmem [shape: f32[16,32], index: 0, kind: input, shape index: {}]
  %s1 = inlined_call_operand.vmem [shape: bf16[32,32], index: 1, kind: input, shape index: {}]
  %s2 = inlined_call_operand.vmem [shape: f32[1,32], index: 2, kind: input, shape index: {}]
  %s3 = inlined_call_operand.vmem [shape: bf16[32,32], index: 3, kind: input, shape index: {}]
  %s4 = inlined_call_operand.vmem [shape: f32[1,32], index: 4, kind: input, shape index: {}]
  %s5 = inlined_call_operand.vmem [shape: bf16[32,32], index: 5, kind: input, shape index: {}]
  %s6 = inlined_call_operand.vmem [shape: f32[1,32], index: 6, kind: input, shape index: {}]
  %s7 = inlined_call_operand.vmem [shape: bf16[16,32], index: 7, kind: output, shape index: {0}]
  %s8 = inlined_call_operand.vmem [shape: bf16[16,32], index: 8, kind: output, shape index: {1}]
  %s9 = inlined_call_operand.vmem [shape: bf16[16,32], index: 9, kind: output, shape index: {2}]
  %10 = xla_tuple %s7, %s8, %s9
  %s11 = sld [smem:[#allocation0]]
  $region54: #{encoder_forward.6} parent=0
    _
  %s13 = ssub.s32 1, %s11
  %s14 = scalar_select 0, %s13, %s11
  // Predicated region
  $region2: #{encoder_forward.6} parent=0 // pred_check
    _
  $region3: #{encoder_forward.6} parent=0 // pred_check_branch
    %16 = sbr.rel (0) target = $region5
  $region4: #{encoder_forward.6} parent=0 // pred_region
    _
  $region5: #{encoder_forward.6} parent=0 // pred_fallthru
    _
  // Predicated region
  $region6: #{encoder_forward.6} parent=0 // pred_check
    _
  $region7: #{encoder_forward.6} parent=0 // pred_check_branch
    %18 = sbr.rel (0) target = $region9
  $region8: #{encoder_forward.6} parent=0 // pred_region
    _
  $region9: #{encoder_forward.6} parent=0 // pred_fallthru
    _
  // Predicated region
  $region10: #{encoder_forward.6} parent=0 // pred_check
    _
  $region11: #{encoder_forward.6} parent=0 // pred_check_branch
    %20 = sbr.rel (0) target = $region13
  $region12: #{encoder_forward.6} parent=0 // pred_region
    _
  $region13: #{encoder_forward.6} parent=0 // pred_fallthru
    _
  // Predicated region
  $region14: #{encoder_forward.6} parent=0 // pred_check
    _
  $region15: #{encoder_forward.6} parent=0 // pred_check_branch
    %22 = sbr.rel (0) target = $region17
  $region16: #{encoder_forward.6} parent=0 // pred_region
    _
  $region17: #{encoder_forward.6} parent=0 // pred_fallthru
    _
  // Predicated region
  $region18: #{encoder_forward.6} parent=0 // pred_check
    _
  $region19: #{encoder_forward.6} parent=0 // pred_check_branch
    %24 = sbr.rel (0) target = $region21
  $region20: #{encoder_forward.6} parent=0 // pred_region
    _
  $region21: #{encoder_forward.6} parent=0 // pred_fallthru
    _
  // Predicated region
  $region22: #{encoder_forward.6} parent=0 // pred_check
    _
  $region23: #{encoder_forward.6} parent=0 // pred_check_branch
    %26 = sbr.rel (0) target = $region25
  $region24: #{encoder_forward.6} parent=0 // pred_region
    _
  $region25: #{encoder_forward.6} parent=0 // pred_fallthru
    _
  // Predicated region
  $region26: #{encoder_forward.6} parent=0 // pred_check
    _
  $region27: #{encoder_forward.6} parent=0 // pred_check_branch
    %28 = sbr.rel (0) target = $region29
  $region28: #{encoder_forward.6} parent=0 // pred_region
    _
  $region29: #{encoder_forward.6} parent=0 // pred_fallthru
    _
  %v30 = vld [vmem:[%s0] sm:$0xff]
  %v31 = vld [vmem:[%s0 + $0x8] sm:$0xff]
  %vm32 = vcmask 261120
  %v33 = vsel %vm32, %v30, 0.0
  %34 = vadd.xlane.f32.xlu0 %v33
  %v35 = vpop.xlane.xlu0 %34
  %v36 = vsel %vm32, %v31, 0.0
  %37 = vadd.xlane.f32.xlu0 %v36
  %v38 = vpop.xlane.xlu0 %37
  %v39 = vrcp.pop 32.0
  %v40 = vmul.f32 %v35, %v39
  %v41 = vmul.f32 %v38, %v39
  %v42 = vsub.f32 %v30, %v40
  %v43 = vsub.f32 %v31, %v41
  %v44 = vmul.f32 %v42, %v42
  %v45 = vmul.f32 %v43, %v43
  %v46 = vsel %vm32, %v44, 0.0
  %47 = vadd.xlane.f32.xlu0 %v46
  %v48 = vpop.xlane.xlu0 %47
  %v49 = vsel %vm32, %v45, 0.0
  %50 = vadd.xlane.f32.xlu0 %v49
  %v51 = vpop.xlane.xlu0 %50
  %v52 = vmul.f32 %v48, %v39
  %v53 = vmul.f32 %v51, %v39
  %v54 = vadd.f32 %v52, 1e-07
  %v55 = vadd.f32 %v53, 1e-07
  %v56 = vrsqrt.pop %v54
  %v57 = vrsqrt.pop %v55
  %v58 = vmul.f32 %v42, %v56
  %v59 = vmul.f32 %v43, %v57
  %v60 = vpack.c.bf16 %v59, %v58
  %v61 = vld [vmem:[%s1] sm:$0xf]
  %v62 = vld [vmem:[%s1 + $0x4] sm:$0xf]
  %v63 = vld [vmem:[%s1 + $0x8] sm:$0xf]
  %v64 = vld [vmem:[%s1 + $0xc] sm:$0xf]
  %v65 = vld [vmem:[%s2] sm:$0x1]
  %v67 = vlaneseq
  %v68 = vshrl.u32 %v67, 7
  %v69 = vsub.s32 0, %v68
  %v70 = vrot.slane %v65, %v69
  %v76 = vunpack.c.l.b16 %v61
  %v77 = vunpack.c.l.b16 %v62
  %v78 = vunpack.c.l.b16 %v63
  %v79 = vunpack.c.l.b16 %v64
  %v80 = vpack.c.b16 %v77, %v76
  %v81 = vpack.c.b16 %v79, %v78
  %v85 = vsel %vm32, %v60, 0
  %87 = vmatprep.subr.bf16.mxu0 0
  %88 = vmatpush1.bf16.msra.mxu0 %v80
  %89 = vmatprep.subr.bf16.mxu0 0
  %90 = vmatpush1.bf16.msra.mxu0 %v81
  %91 = vmatprep.subr.bf16.mxu0 0
  %92 = vmatpush1.bf16.msra.mxu0 0
  %93 = vmatprep.subr.bf16.mxu0 0
  %94 = vmatpush1.bf16.msra.mxu0 0
  %95 = vmatprep.subr.bf16.mxu0 0
  %96 = vmatpush1.bf16.msra.mxu0 0
  %97 = vmatprep.subr.bf16.mxu0 0
  %98 = vmatpush1.bf16.msra.mxu0 0
  %99 = vmatprep.subr.bf16.mxu0 0
  %100 = vmatpush1.bf16.msra.mxu0 0
  %101 = vmatprep.subr.bf16.mxu0 0
  %102 = vmatpush1.bf16.msra.mxu0 0
  %103 = vmatprep.subr.bf16.mxu0 0
  %104 = vmatpush1.bf16.msra.mxu0 0
  %105 = vmatprep.subr.bf16.mxu0 0
  %106 = vmatpush1.bf16.msra.mxu0 0
  %107 = vmatprep.subr.bf16.mxu0 0
  %108 = vmatpush1.bf16.msra.mxu0 0
  %109 = vmatprep.subr.bf16.mxu0 0
  %110 = vmatpush1.bf16.msra.mxu0 0
  %111 = vmatprep.subr.bf16.mxu0 0
  %112 = vmatpush1.bf16.msra.mxu0 0
  %113 = vmatprep.subr.bf16.mxu0 0
  %114 = vmatpush1.bf16.msra.mxu0 0
  %115 = vmatprep.subr.bf16.mxu0 0
  %116 = vmatpush1.bf16.msra.mxu0 0
  %117 = vmatprep.subr.bf16.mxu0 0
  %118 = vmatpush1.bf16.msra.mxu0 0
  %119 = vmatprep.mubr.bf16.mxu0 0
  %120 = vmatmul.mubr.bf16.gmra.mrb[0].mxu0 %v85
  %v121 = vpop.f32.mrb[0].mxu0
  %v122 = vadd.f32 %v70, %v121
  %v123 = vpop.f32.mrb[0].mxu0
  %v124 = vpop.f32.mrb[0].mxu0
  %v125 = vadd.f32 %v70, %v124
  %v126 = vpop.f32.mrb[0].mxu0
  %127 = vdwg.mxu0
  %v128 = vld [vmem:[%s3] sm:$0xf]
  %v129 = vld [vmem:[%s3 + $0x4] sm:$0xf]
  %v130 = vld [vmem:[%s3 + $0x8] sm:$0xf]
  %v131 = vld [vmem:[%s3 + $0xc] sm:$0xf]
  %v132 = vld [vmem:[%s4] sm:$0x1]
  %v134 = vlaneseq
  %v135 = vshrl.u32 %v134, 7
  %v136 = vsub.s32 0, %v135
  %v137 = vrot.slane %v132, %v136
  %v143 = vunpack.c.l.b16 %v128
  %v144 = vunpack.c.l.b16 %v129
  %v145 = vunpack.c.l.b16 %v130
  %v146 = vunpack.c.l.b16 %v131
  %v147 = vpack.c.b16 %v144, %v143
  %v148 = vpack.c.b16 %v146, %v145
  %151 = vmatprep.subr.bf16.mxu0 0
  %152 = vmatpush1.bf16.msra.mxu0 %v147
  %153 = vmatprep.subr.bf16.mxu0 0
  %154 = vmatpush1.bf16.msra.mxu0 %v148
  %155 = vmatprep.subr.bf16.mxu0 0
  %156 = vmatpush1.bf16.msra.mxu0 0
  %157 = vmatprep.subr.bf16.mxu0 0
  %158 = vmatpush1.bf16.msra.mxu0 0
  %159 = vmatprep.subr.bf16.mxu0 0
  %160 = vmatpush1.bf16.msra.mxu0 0
  %161 = vmatprep.subr.bf16.mxu0 0
  %162 = vmatpush1.bf16.msra.mxu0 0
  %163 = vmatprep.subr.bf16.mxu0 0
  %164 = vmatpush1.bf16.msra.mxu0 0
  %165 = vmatprep.subr.bf16.mxu0 0
  %166 = vmatpush1.bf16.msra.mxu0 0
  %167 = vmatprep.subr.bf16.mxu0 0
  %168 = vmatpush1.bf16.msra.mxu0 0
  %169 = vmatprep.subr.bf16.mxu0 0
  %170 = vmatpush1.bf16.msra.mxu0 0
  %171 = vmatprep.subr.bf16.mxu0 0
  %172 = vmatpush1.bf16.msra.mxu0 0
  %173 = vmatprep.subr.bf16.mxu0 0
  %174 = vmatpush1.bf16.msra.mxu0 0
  %175 = vmatprep.subr.bf16.mxu0 0
  %176 = vmatpush1.bf16.msra.mxu0 0
  %177 = vmatprep.subr.bf16.mxu0 0
  %178 = vmatpush1.bf16.msra.mxu0 0
  %179 = vmatprep.subr.bf16.mxu0 0
  %180 = vmatpush1.bf16.msra.mxu0 0
  %181 = vmatprep.subr.bf16.mxu0 0
  %182 = vmatpush1.bf16.msra.mxu0 0
  %183 = vmatprep.mubr.bf16.mxu0 0
  %184 = vmatmul.mubr.bf16.gmra.mrb[0].mxu0 %v85
  %v185 = vpop.f32.mrb[0].mxu0
  %v186 = vadd.f32 %v137, %v185
  %v187 = vpop.f32.mrb[0].mxu0
  %v188 = vpop.f32.mrb[0].mxu0
  %v189 = vadd.f32 %v137, %v188
  %v190 = vpop.f32.mrb[0].mxu0
  %191 = vdwg.mxu0
  %v192 = vld [vmem:[%s5] sm:$0xf]
  %v193 = vld [vmem:[%s5 + $0x4] sm:$0xf]
  %v194 = vld [vmem:[%s5 + $0x8] sm:$0xf]
  %v195 = vld [vmem:[%s5 + $0xc] sm:$0xf]
  %v196 = vld [vmem:[%s6] sm:$0x1]
  %v198 = vlaneseq
  %v199 = vshrl.u32 %v198, 7
  %v200 = vsub.s32 0, %v199
  %v201 = vrot.slane %v196, %v200
  %v207 = vunpack.c.l.b16 %v192
  %v208 = vunpack.c.l.b16 %v193
  %v209 = vunpack.c.l.b16 %v194
  %v210 = vunpack.c.l.b16 %v195
  %v211 = vpack.c.b16 %v208, %v207
  %v212 = vpack.c.b16 %v210, %v209
  %215 = vmatprep.subr.bf16.mxu0 0
  %216 = vmatpush1.bf16.msra.mxu0 %v211
  %217 = vmatprep.subr.bf16.mxu0 0
  %218 = vmatpush1.bf16.msra.mxu0 %v212
  %219 = vmatprep.subr.bf16.mxu0 0
  %220 = vmatpush1.bf16.msra.mxu0 0
  %221 = vmatprep.subr.bf16.mxu0 0
  %222 = vmatpush1.bf16.msra.mxu0 0
  %223 = vmatprep.subr.bf16.mxu0 0
  %224 = vmatpush1.bf16.msra.mxu0 0
  %225 = vmatprep.subr.bf16.mxu0 0
  %226 = vmatpush1.bf16.msra.mxu0 0
  %227 = vmatprep.subr.bf16.mxu0 0
  %228 = vmatpush1.bf16.msra.mxu0 0
  %229 = vmatprep.subr.bf16.mxu0 0
  %230 = vmatpush1.bf16.msra.mxu0 0
  %231 = vmatprep.subr.bf16.mxu0 0
  %232 = vmatpush1.bf16.msra.mxu0 0
  %233 = vmatprep.subr.bf16.mxu0 0
  %234 = vmatpush1.bf16.msra.mxu0 0
  %235 = vmatprep.subr.bf16.mxu0 0
  %236 = vmatpush1.bf16.msra.mxu0 0
  %237 = vmatprep.subr.bf16.mxu0 0
  %238 = vmatpush1.bf16.msra.mxu0 0
  %239 = vmatprep.subr.bf16.mxu0 0
  %240 = vmatpush1.bf16.msra.mxu0 0
  %241 = vmatprep.subr.bf16.mxu0 0
  %242 = vmatpush1.bf16.msra.mxu0 0
  %243 = vmatprep.subr.bf16.mxu0 0
  %244 = vmatpush1.bf16.msra.mxu0 0
  %245 = vmatprep.subr.bf16.mxu0 0
  %246 = vmatpush1.bf16.msra.mxu0 0
  %247 = vmatprep.mubr.bf16.mxu0 0
  %248 = vmatmul.mubr.bf16.gmra.mrb[0].mxu0 %v85
  %v249 = vpop.f32.mrb[0].mxu0
  %v250 = vadd.f32 %v201, %v249
  %v251 = vpop.f32.mrb[0].mxu0
  %v252 = vpop.f32.mrb[0].mxu0
  %v253 = vadd.f32 %v201, %v252
  %v254 = vpop.f32.mrb[0].mxu0
  %255 = vdwg.mxu0
  %v256 = vmul.f32 %v122, 0.20412415
  %v257 = vmul.f32 %v125, 0.20412415
  %v258 = vpack.c.bf16 %v257, %v256
  %v260 = vunpack.c.l.b16 %v258
  %v261 = vunpack.c.h.b16 %v258
  %v262 = vpack.c.b16 %v260, %v260
  %v263 = vpack.c.b16 %v261, %v261
  %vm266 = vcmask 257024
  %267 = vst.msk [vmem:[%s7] sm:$0xf] %vm266, %v262
  %268 = vst.msk [vmem:[%s7 + $0x4] sm:$0xf] %vm266, %v263
  %v269 = vpack.c.bf16 %v189, %v186
  %v271 = vunpack.c.l.b16 %v269
  %v272 = vunpack.c.h.b16 %v269
  %v273 = vpack.c.b16 %v271, %v271
  %v274 = vpack.c.b16 %v272, %v272
  %277 = vst.msk [vmem:[%s8] sm:$0xf] %vm266, %v273
  %278 = vst.msk [vmem:[%s8 + $0x4] sm:$0xf] %vm266, %v274
  %v279 = vpack.c.bf16 %v253, %v250
  %v281 = vunpack.c.l.b16 %v279
  %v282 = vunpack.c.h.b16 %v279
  %v283 = vpack.c.b16 %v281, %v281
  %v284 = vpack.c.b16 %v282, %v282
  %287 = vst.msk [vmem:[%s9] sm:$0xf] %vm266, %v283
  %288 = vst.msk [vmem:[%s9 + $0x4] sm:$0xf] %vm266, %v284
  // Predicated region
  $region30: #{encoder_forward.6} parent=0 // pred_check
    _
  $region31: #{encoder_forward.6} parent=0 // pred_check_branch
    %290 = sbr.rel (0) target = $region33
  $region32: #{encoder_forward.6} parent=0 // pred_region
    _
  $region33: #{encoder_forward.6} parent=0 // pred_fallthru
    _
  // Predicated region
  $region34: #{encoder_forward.6} parent=0 // pred_check
    _
  $region35: #{encoder_forward.6} parent=0 // pred_check_branch
    %292 = sbr.rel (0) target = $region37
  $region36: #{encoder_forward.6} parent=0 // pred_region
    _
  $region37: #{encoder_forward.6} parent=0 // pred_fallthru
    _
  // Predicated region
  $region38: #{encoder_forward.6} parent=0 // pred_check
    _
  $region39: #{encoder_forward.6} parent=0 // pred_check_branch
    %294 = sbr.rel (0) target = $region41
  $region40: #{encoder_forward.6} parent=0 // pred_region
    _
  $region41: #{encoder_forward.6} parent=0 // pred_fallthru
    _
  // Predicated region
  $region42: #{encoder_forward.6} parent=0 // pred_check
    _
  $region43: #{encoder_forward.6} parent=0 // pred_check_branch
    %296 = sbr.rel (0) target = $region45
  $region44: #{encoder_forward.6} parent=0 // pred_region
    _
  $region45: #{encoder_forward.6} parent=0 // pred_fallthru
    _
  // Predicated region
  $region46: #{encoder_forward.6} parent=0 // pred_check
    _
  $region47: #{encoder_forward.6} parent=0 // pred_check_branch
    %298 = sbr.rel (0) target = $region49
  $region48: #{encoder_forward.6} parent=0 // pred_region
    _
  $region49: #{encoder_forward.6} parent=0 // pred_fallthru
    _
  // Predicated region
  $region50: #{encoder_forward.6} parent=0 // pred_check
    _
  $region51: #{encoder_forward.6} parent=0 // pred_check_branch
    %300 = sbr.rel (0) target = $region53
  $region52: #{encoder_forward.6} parent=0 // pred_region
    _
  $region53: #{encoder_forward.6} parent=0 // pred_fallthru
    _

// kernel: encoder_forward.8
$region0: #{encoder_forward.8}
  #allocation0 [shape = 'u32[]', space=smem, size = 0x4, offset = 0x4, fixed_abs, tag = 'smem constant byte address 0x4 - core index']
  #allocation1 [shape = 'u32[144,128]{1,0:T(1,128)}', space=vmem, size = 0x12000, scoped, tag = 'internal scratch']
  %s0 = inlined_call_operand.vmem [shape: bf16[16,32], index: 0, kind: input, shape index: {}]
  %s1 = inlined_call_operand.vmem [shape: f32[16,32], index: 1, kind: input, shape index: {}]
  %s2 = inlined_call_operand.vmem [shape: bf16[32,32], index: 2, kind: input, shape index: {}]
  %s3 = inlined_call_operand.vmem [shape: f32[1,32], index: 3, kind: input, shape index: {}]
  %s4 = inlined_call_operand.vmem [shape: f32[1,32], index: 4, kind: input, shape index: {}]
  %s5 = inlined_call_operand.vmem [shape: f32[1,32], index: 5, kind: input, shape index: {}]
  %s6 = inlined_call_operand.vmem [shape: bf16[32,64], index: 6, kind: input, shape index: {}]
  %s7 = inlined_call_operand.vmem [shape: bf16[32,64], index: 7, kind: input, shape index: {}]
  %s8 = inlined_call_operand.vmem [shape: bf16[64,32], index: 8, kind: input, shape index: {}]
  %s9 = inlined_call_operand.vmem [shape: f32[16,32], index: 9, kind: output, shape index: {}]
  %s10 = sld [smem:[#allocation0]]
  $region46: #{encoder_forward.8} parent=0
    _
  %s12 = ssub.s32 1, %s10
  %s13 = scalar_select 0, %s12, %s10
  // Predicated region
  $region2: #{encoder_forward.8} parent=0 // pred_check
    _
  $region3: #{encoder_forward.8} parent=0 // pred_check_branch
    %15 = sbr.rel (0) target = $region5
  $region4: #{encoder_forward.8} parent=0 // pred_region
    _
  $region5: #{encoder_forward.8} parent=0 // pred_fallthru
    _
  // Predicated region
  $region6: #{encoder_forward.8} parent=0 // pred_check
    _
  $region7: #{encoder_forward.8} parent=0 // pred_check_branch
    %17 = sbr.rel (0) target = $region9
  $region8: #{encoder_forward.8} parent=0 // pred_region
    _
  $region9: #{encoder_forward.8} parent=0 // pred_fallthru
    _
  // Predicated region
  $region10: #{encoder_forward.8} parent=0 // pred_check
    _
  $region11: #{encoder_forward.8} parent=0 // pred_check_branch
    %19 = sbr.rel (0) target = $region13
  $region12: #{encoder_forward.8} parent=0 // pred_region
    _
  $region13: #{encoder_forward.8} parent=0 // pred_fallthru
    _
  // Predicated region
  $region14: #{encoder_forward.8} parent=0 // pred_check
    _
  $region15: #{encoder_forward.8} parent=0 // pred_check_branch
    %21 = sbr.rel (0) target = $region17
  $region16: #{encoder_forward.8} parent=0 // pred_region
    _
  $region17: #{encoder_forward.8} parent=0 // pred_fallthru
    _
  // Predicated region
  $region18: #{encoder_forward.8} parent=0 // pred_check
    _
  $region19: #{encoder_forward.8} parent=0 // pred_check_branch
    %23 = sbr.rel (0) target = $region21
  $region20: #{encoder_forward.8} parent=0 // pred_region
    _
  $region21: #{encoder_forward.8} parent=0 // pred_fallthru
    _
  // Predicated region
  $region22: #{encoder_forward.8} parent=0 // pred_check
    _
  $region23: #{encoder_forward.8} parent=0 // pred_check_branch
    %25 = sbr.rel (0) target = $region25
  $region24: #{encoder_forward.8} parent=0 // pred_region
    _
  $region25: #{encoder_forward.8} parent=0 // pred_fallthru
    _
  // Predicated region
  $region26: #{encoder_forward.8} parent=0 // pred_check
    _
  $region27: #{encoder_forward.8} parent=0 // pred_check_branch
    %27 = sbr.rel (0) target = $region29
  $region28: #{encoder_forward.8} parent=0 // pred_region
    _
  $region29: #{encoder_forward.8} parent=0 // pred_fallthru
    _
  // Predicated region
  $region30: #{encoder_forward.8} parent=0 // pred_check
    _
  $region31: #{encoder_forward.8} parent=0 // pred_check_branch
    %29 = sbr.rel (0) target = $region33
  $region32: #{encoder_forward.8} parent=0 // pred_region
    _
  $region33: #{encoder_forward.8} parent=0 // pred_fallthru
    _
  // Predicated region
  $region34: #{encoder_forward.8} parent=0 // pred_check
    _
  $region35: #{encoder_forward.8} parent=0 // pred_check_branch
    %31 = sbr.rel (0) target = $region37
  $region36: #{encoder_forward.8} parent=0 // pred_region
    _
  $region37: #{encoder_forward.8} parent=0 // pred_fallthru
    _
  %v33 = vld [vmem:[%s0] sm:$0xf]
  %v34 = vld [vmem:[%s0 + $0x4] sm:$0xf]
  %v35 = vld [vmem:[%s2] sm:$0xf]
  %v36 = vld [vmem:[%s2 + $0x4] sm:$0xf]
  %v37 = vld [vmem:[%s2 + $0x8] sm:$0xf]
  %v38 = vld [vmem:[%s2 + $0xc] sm:$0xf]
  %v39 = vld [vmem:[%s3] sm:$0x1]
  %v41 = vlaneseq
  %v42 = vshrl.u32 %v41, 7
  %v43 = vsub.s32 0, %v42
  %v44 = vrot.slane %v39, %v43
  %v48 = vunpack.c.l.b16 %v33
  %v49 = vunpack.c.l.b16 %v34
  %v50 = vpack.c.b16 %v49, %v48
  %v55 = vunpack.c.l.b16 %v35
  %v56 = vunpack.c.l.b16 %v36
  %v57 = vunpack.c.l.b16 %v37
  %v58 = vunpack.c.l.b16 %v38
  %v59 = vpack.c.b16 %v56, %v55
  %v60 = vpack.c.b16 %v58, %v57
  %vm63 = vcmask 261120
  %v65 = vsel %vm63, %v50, 0
  %67 = vmatprep.subr.bf16.mxu0 0
  %68 = vmatpush1.bf16.msra.mxu0 %v59
  %69 = vmatprep.subr.bf16.mxu0 0
  %70 = vmatpush1.bf16.msra.mxu0 %v60
  %71 = vmatprep.subr.bf16.mxu0 0
  %72 = vmatpush1.bf16.msra.mxu0 0
  %73 = vmatprep.subr.bf16.mxu0 0
  %74 = vmatpush1.bf16.msra.mxu0 0
  %75 = vmatprep.subr.bf16.mxu0 0
  %76 = vmatpush1.bf16.msra.mxu0 0
  %77 = vmatprep.subr.bf16.mxu0 0
  %78 = vmatpush1.bf16.msra.mxu0 0
  %79 = vmatprep.subr.bf16.mxu0 0
  %80 = vmatpush1.bf16.msra.mxu0 0
  %81 = vmatprep.subr.bf16.mxu0 0
  %82 = vmatpush1.bf16.msra.mxu0 0
  %83 = vmatprep.subr.bf16.mxu0 0
  %84 = vmatpush1.bf16.msra.mxu0 0
  %85 = vmatprep.subr.bf16.mxu0 0
  %86 = vmatpush1.bf16.msra.mxu0 0
  %87 = vmatprep.subr.bf16.mxu0 0
  %88 = vmatpush1.bf16.msra.mxu0 0
  %89 = vmatprep.subr.bf16.mxu0 0
  %90 = vmatpush1.bf16.msra.mxu0 0
  %91 = vmatprep.subr.bf16.mxu0 0
  %92 = vmatpush1.bf16.msra.mxu0 0
  %93 = vmatprep.subr.bf16.mxu0 0
  %94 = vmatpush1.bf16.msra.mxu0 0
  %95 = vmatprep.subr.bf16.mxu0 0
  %96 = vmatpush1.bf16.msra.mxu0 0
  %97 = vmatprep.subr.bf16.mxu0 0
  %98 = vmatpush1.bf16.msra.mxu0 0
  %99 = vmatprep.mubr.bf16.mxu0 0
  %100 = vmatmul.mubr.bf16.gmra.mrb[0].mxu0 %v65
  %v101 = vpop.f32.mrb[0].mxu0
  %v102 = vadd.f32 %v44, %v101
  %v103 = vpop.f32.mrb[0].mxu0
  %v104 = vpop.f32.mrb[0].mxu0
  %v105 = vadd.f32 %v44, %v104
  %v106 = vpop.f32.mrb[0].mxu0
  %107 = vdwg.mxu0
  %v108 = vld [vmem:[%s1] sm:$0xff]
  %v109 = vld [vmem:[%s1 + $0x8] sm:$0xff]
  %v110 = vsel %vm63, %v102, 0.0
  %111 = vadd.xlane.f32.xlu0 %v110
  %v112 = vpop.xlane.xlu0 %111
  %v113 = vsel %vm63, %v105, 0.0
  %114 = vadd.xlane.f32.xlu0 %v113
  %v115 = vpop.xlane.xlu0 %114
  %v116 = vrcp.pop 32.0
  %v117 = vmul.f32 %v112, %v116
  %v118 = vmul.f32 %v115, %v116
  %v119 = vsub.f32 %v102, %v117
  %v120 = vsub.f32 %v105, %v118
  %v121 = vmul.f32 %v119, %v119
  %v122 = vmul.f32 %v120, %v120
  %v123 = vsel %vm63, %v121, 0.0
  %124 = vadd.xlane.f32.xlu0 %v123
  %v125 = vpop.xlane.xlu0 %124
  %v126 = vsel %vm63, %v122, 0.0
  %127 = vadd.xlane.f32.xlu0 %v126
  %v128 = vpop.xlane.xlu0 %127
  %v129 = vmul.f32 %v125, %v116
  %v130 = vmul.f32 %v128, %v116
  %v131 = vadd.f32 %v129, 1e-07
  %v132 = vadd.f32 %v130, 1e-07
  %v133 = vrsqrt.pop %v131
  %v134 = vrsqrt.pop %v132
  %v135 = vmul.f32 %v119, %v133
  %v136 = vmul.f32 %v120, %v134
  %v137 = vld [vmem:[%s4] sm:$0x1]
  %v139 = vlaneseq
  %v140 = vshrl.u32 %v139, 7
  %v141 = vsub.s32 0, %v140
  %v142 = vrot.slane %v137, %v141
  %v144 = vmul.f32 %v135, %v142
  %v145 = vmul.f32 %v136, %v142
  %v146 = vadd.f32 %v108, %v144
  %v147 = vadd.f32 %v109, %v145
  %v148 = vld [vmem:[%s5] sm:$0x1]
  %v150 = vlaneseq
  %v151 = vshrl.u32 %v150, 7
  %v152 = vsub.s32 0, %v151
  %v153 = vrot.slane %v148, %v152
  %v155 = vadd.f32 %v146, %v153
  %v156 = vadd.f32 %v147, %v153
  %v157 = vsel %vm63, %v155, 0.0
  %158 = vadd.xlane.f32.xlu0 %v157
  %v159 = vpop.xlane.xlu0 %158
  %v160 = vsel %vm63, %v156, 0.0
  %161 = vadd.xlane.f32.xlu0 %v160
  %v162 = vpop.xlane.xlu0 %161
  %v163 = vmul.f32 %v159, %v116
  %v164 = vmul.f32 %v162, %v116
  %v165 = vsub.f32 %v155, %v163
  %v166 = vsub.f32 %v156, %v164
  %v167 = vmul.f32 %v165, %v165
  %v168 = vmul.f32 %v166, %v166
  %v169 = vsel %vm63, %v167, 0.0
  %170 = vadd.xlane.f32.xlu0 %v169
  %v171 = vpop.xlane.xlu0 %170
  %v172 = vsel %vm63, %v168, 0.0
  %173 = vadd.xlane.f32.xlu0 %v172
  %v174 = vpop.xlane.xlu0 %173
  %v175 = vmul.f32 %v171, %v116
  %v176 = vmul.f32 %v174, %v116
  %v177 = vadd.f32 %v175, 1e-07
  %v178 = vadd.f32 %v176, 1e-07
  %v179 = vrsqrt.pop %v177
  %v180 = vrsqrt.pop %v178
  %v181 = vmul.f32 %v165, %v179
  %v182 = vmul.f32 %v166, %v180
  %v183 = vpack.c.bf16 %v182, %v181
  %v184 = vld [vmem:[%s6] sm:$0xf]
  %v185 = vld [vmem:[%s6 + $0x4] sm:$0xf]
  %v186 = vld [vmem:[%s6 + $0x8] sm:$0xf]
  %v187 = vld [vmem:[%s6 + $0xc] sm:$0xf]
  %v192 = vunpack.c.l.b16 %v184
  %v193 = vunpack.c.l.b16 %v185
  %v194 = vunpack.c.l.b16 %v186
  %v195 = vunpack.c.l.b16 %v187
  %v196 = vpack.c.b16 %v193, %v192
  %v197 = vpack.c.b16 %v195, %v194
  %v201 = vsel %vm63, %v183, 0
  %203 = vmatprep.subr.bf16.mxu0 0
  %204 = vmatpush1.bf16.msra.mxu0 %v196
  %205 = vmatprep.subr.bf16.mxu0 0
  %206 = vmatpush1.bf16.msra.mxu0 %v197
  %207 = vmatprep.subr.bf16.mxu0 0
  %208 = vmatpush1.bf16.msra.mxu0 0
  %209 = vmatprep.subr.bf16.mxu0 0
  %210 = vmatpush1.bf16.msra.mxu0 0
  %211 = vmatprep.subr.bf16.mxu0 0
  %212 = vmatpush1.bf16.msra.mxu0 0
  %213 = vmatprep.subr.bf16.mxu0 0
  %214 = vmatpush1.bf16.msra.mxu0 0
  %215 = vmatprep.subr.bf16.mxu0 0
  %216 = vmatpush1.bf16.msra.mxu0 0
  %217 = vmatprep.subr.bf16.mxu0 0
  %218 = vmatpush1.bf16.msra.mxu0 0
  %219 = vmatprep.subr.bf16.mxu0 0
  %220 = vmatpush1.bf16.msra.mxu0 0
  %221 = vmatprep.subr.bf16.mxu0 0
  %222 = vmatpush1.bf16.msra.mxu0 0
  %223 = vmatprep.subr.bf16.mxu0 0
  %224 = vmatpush1.bf16.msra.mxu0 0
  %225 = vmatprep.subr.bf16.mxu0 0
  %226 = vmatpush1.bf16.msra.mxu0 0
  %227 = vmatprep.subr.bf16.mxu0 0
  %228 = vmatpush1.bf16.msra.mxu0 0
  %229 = vmatprep.subr.bf16.mxu0 0
  %230 = vmatpush1.bf16.msra.mxu0 0
  %231 = vmatprep.subr.bf16.mxu0 0
  %232 = vmatpush1.bf16.msra.mxu0 0
  %233 = vmatprep.subr.bf16.mxu0 0
  %234 = vmatpush1.bf16.msra.mxu0 0
  %235 = vmatprep.mubr.bf16.mxu0 0
  %236 = vmatmul.mubr.bf16.gmra.mrb[0].mxu0 %v201
  %v237 = vpop.f32.mrb[0].mxu0
  %v238 = vadd.f32 0.0, %v237
  %v239 = vpop.f32.mrb[0].mxu0
  %v240 = vpop.f32.mrb[0].mxu0
  %v241 = vadd.f32 0.0, %v240
  %v242 = vpop.f32.mrb[0].mxu0
  %243 = vdwg.mxu0
  %v244 = vld [vmem:[%s7] sm:$0xf]
  %v245 = vld [vmem:[%s7 + $0x4] sm:$0xf]
  %v246 = vld [vmem:[%s7 + $0x8] sm:$0xf]
  %v247 = vld [vmem:[%s7 + $0xc] sm:$0xf]
  %v252 = vunpack.c.l.b16 %v244
  %v253 = vunpack.c.l.b16 %v245
  %v254 = vunpack.c.l.b16 %v246
  %v255 = vunpack.c.l.b16 %v247
  %v256 = vpack.c.b16 %v253, %v252
  %v257 = vpack.c.b16 %v255, %v254
  %260 = vmatprep.subr.bf16.mxu0 0
  %261 = vmatpush1.bf16.msra.mxu0 %v256
  %262 = vmatprep.subr.bf16.mxu0 0
  %263 = vmatpush1.bf16.msra.mxu0 %v257
  %264 = vmatprep.subr.bf16.mxu0 0
  %265 = vmatpush1.bf16.msra.mxu0 0
  %266 = vmatprep.subr.bf16.mxu0 0
  %267 = vmatpush1.bf16.msra.mxu0 0
  %268 = vmatprep.subr.bf16.mxu0 0
  %269 = vmatpush1.bf16.msra.mxu0 0
  %270 = vmatprep.subr.bf16.mxu0 0
  %271 = vmatpush1.bf16.msra.mxu0 0
  %272 = vmatprep.subr.bf16.mxu0 0
  %273 = vmatpush1.bf16.msra.mxu0 0
  %274 = vmatprep.subr.bf16.mxu0 0
  %275 = vmatpush1.bf16.msra.mxu0 0
  %276 = vmatprep.subr.bf16.mxu0 0
  %277 = vmatpush1.bf16.msra.mxu0 0
  %278 = vmatprep.subr.bf16.mxu0 0
  %279 = vmatpush1.bf16.msra.mxu0 0
  %280 = vmatprep.subr.bf16.mxu0 0
  %281 = vmatpush1.bf16.msra.mxu0 0
  %282 = vmatprep.subr.bf16.mxu0 0
  %283 = vmatpush1.bf16.msra.mxu0 0
  %284 = vmatprep.subr.bf16.mxu0 0
  %285 = vmatpush1.bf16.msra.mxu0 0
  %286 = vmatprep.subr.bf16.mxu0 0
  %287 = vmatpush1.bf16.msra.mxu0 0
  %288 = vmatprep.subr.bf16.mxu0 0
  %289 = vmatpush1.bf16.msra.mxu0 0
  %290 = vmatprep.subr.bf16.mxu0 0
  %291 = vmatpush1.bf16.msra.mxu0 0
  %292 = vmatprep.mubr.bf16.mxu0 0
  %293 = vmatmul.mubr.bf16.gmra.mrb[0].mxu0 %v201
  %v294 = vpop.f32.mrb[0].mxu0
  %v295 = vadd.f32 0.0, %v294
  %v296 = vpop.f32.mrb[0].mxu0
  %v297 = vpop.f32.mrb[0].mxu0
  %v298 = vadd.f32 0.0, %v297
  %v299 = vpop.f32.mrb[0].mxu0
  %300 = vdwg.mxu0
  %v301 = vmul.f32 %v295, 0.5
  %v302 = vmul.f32 %v298, 0.5
  %v303 = vmul.f32 %v295, 0.044715
  %v304 = vmul.f32 %v298, 0.044715
  %v305 = vmul.f32 %v303, %v295
  %v306 = vmul.f32 %v304, %v298
  %v307 = vmul.f32 %v305, %v295
  %v308 = vmul.f32 %v306, %v298
  %v309 = vadd.f32 %v295, %v307
  %v310 = vadd.f32 %v298, %v308
  %v311 = vmul.f32 %v309, 0.7978846
  %v312 = vmul.f32 %v310, 0.7978846
  %v313 = vtanh.pop %v311
  %v314 = vtanh.pop %v312
  %v315 = vadd.f32 %v313, 1.0
  %v316 = vadd.f32 %v314, 1.0
  %v317 = vmul.f32 %v301, %v315
  %v318 = vmul.f32 %v302, %v316
  %v319 = vmul.f32 %v238, %v317
  %v320 = vmul.f32 %v241, %v318
  %vm321 = vcmask 523264
  %v322 = vsel %vm321, %v319, 0.0
  %323 = vadd.xlane.f32.xlu0 %v322
  %v324 = vpop.xlane.xlu0 %323
  %v325 = vsel %vm321, %v320, 0.0
  %326 = vadd.xlane.f32.xlu0 %v325
  %v327 = vpop.xlane.xlu0 %326
  %v328 = vrcp.pop 64.0
  %v329 = vmul.f32 %v324, %v328
  %v330 = vmul.f32 %v327, %v328
  %v331 = vsub.f32 %v319, %v329
  %v332 = vsub.f32 %v320, %v330
  %v333 = vmul.f32 %v331, %v331
  %v334 = vmul.f32 %v332, %v332
  %v335 = vsel %vm321, %v333, 0.0
  %336 = vadd.xlane.f32.xlu0 %v335
  %v337 = vpop.xlane.xlu0 %336
  %v338 = vsel %vm321, %v334, 0.0
  %339 = vadd.xlane.f32.xlu0 %v338
  %v340 = vpop.xlane.xlu0 %339
  %v341 = vmul.f32 %v337, %v328
  %v342 = vmul.f32 %v340, %v328
  %v343 = vadd.f32 %v341, 1e-07
  %v344 = vadd.f32 %v342, 1e-07
  %v345 = vrsqrt.pop %v343
  %v346 = vrsqrt.pop %v344
  %v347 = vmul.f32 %v331, %v345
  %v348 = vmul.f32 %v332, %v346
  %v349 = vpack.c.bf16 %v348, %v347
  %v350 = vld [vmem:[%s8] sm:$0xf]
  %v351 = vld [vmem:[%s8 + $0x4] sm:$0xf]
  %v352 = vld [vmem:[%s8 + $0x8] sm:$0xf]
  %v353 = vld [vmem:[%s8 + $0xc] sm:$0xf]
  %v354 = vld [vmem:[%s8 + $0x10] sm:$0xf]
  %v355 = vld [vmem:[%s8 + $0x14] sm:$0xf]
  %v356 = vld [vmem:[%s8 + $0x18] sm:$0xf]
  %v357 = vld [vmem:[%s8 + $0x1c] sm:$0xf]
  %v366 = vunpack.c.l.b16 %v350
  %v367 = vunpack.c.l.b16 %v351
  %v368 = vunpack.c.l.b16 %v352
  %v369 = vunpack.c.l.b16 %v353
  %v370 = vunpack.c.l.b16 %v354
  %v371 = vunpack.c.l.b16 %v355
  %v372 = vunpack.c.l.b16 %v356
  %v373 = vunpack.c.l.b16 %v357
  %v374 = vpack.c.b16 %v367, %v366
  %v375 = vpack.c.b16 %v369, %v368
  %v376 = vpack.c.b16 %v371, %v370
  %v377 = vpack.c.b16 %v373, %v372
  %v383 = vsel %vm321, %v349, 0
  %385 = vmatprep.subr.bf16.mxu0 0
  %386 = vmatpush1.bf16.msra.mxu0 %v374
  %387 = vmatprep.subr.bf16.mxu0 0
  %388 = vmatpush1.bf16.msra.mxu0 %v375
  %389 = vmatprep.subr.bf16.mxu0 0
  %390 = vmatpush1.bf16.msra.mxu0 %v376
  %391 = vmatprep.subr.bf16.mxu0 0
  %392 = vmatpush1.bf16.msra.mxu0 %v377
  %393 = vmatprep.subr.bf16.mxu0 0
  %394 = vmatpush1.bf16.msra.mxu0 0
  %395 = vmatprep.subr.bf16.mxu0 0
  %396 = vmatpush1.bf16.msra.mxu0 0
  %397 = vmatprep.subr.bf16.mxu0 0
  %398 = vmatpush1.bf16.msra.mxu0 0
  %399 = vmatprep.subr.bf16.mxu0 0
  %400 = vmatpush1.bf16.msra.mxu0 0
  %401 = vmatprep.subr.bf16.mxu0 0
  %402 = vmatpush1.bf16.msra.mxu0 0
  %403 = vmatprep.subr.bf16.mxu0 0
  %404 = vmatpush1.bf16.msra.mxu0 0
  %405 = vmatprep.subr.bf16.mxu0 0
  %406 = vmatpush1.bf16.msra.mxu0 0
  %407 = vmatprep.subr.bf16.mxu0 0
  %408 = vmatpush1.bf16.msra.mxu0 0
  %409 = vmatprep.subr.bf16.mxu0 0
  %410 = vmatpush1.bf16.msra.mxu0 0
  %411 = vmatprep.subr.bf16.mxu0 0
  %412 = vmatpush1.bf16.msra.mxu0 0
  %413 = vmatprep.subr.bf16.mxu0 0
  %414 = vmatpush1.bf16.msra.mxu0 0
  %415 = vmatprep.subr.bf16.mxu0 0
  %416 = vmatpush1.bf16.msra.mxu0 0
  %417 = vmatprep.mubr.bf16.mxu0 0
  %418 = vmatmul.mubr.bf16.gmra.mrb[0].mxu0 %v383
  %v419 = vpop.f32.mrb[0].mxu0
  %v420 = vadd.f32 0.0, %v419
  %v421 = vpop.f32.mrb[0].mxu0
  %v422 = vpop.f32.mrb[0].mxu0
  %v423 = vadd.f32 0.0, %v422
  %v424 = vpop.f32.mrb[0].mxu0
  %425 = vdwg.mxu0
  %v426 = vadd.f32 %v155, %v420
  %v427 = vadd.f32 %v156, %v423
  %428 = vst.msk [vmem:[%s9] sm:$0xff] %vm63, %v426
  %429 = vst.msk [vmem:[%s9 + $0x8] sm:$0xff] %vm63, %v427
  // Predicated region
  $region38: #{encoder_forward.8} parent=0 // pred_check
    _
  $region39: #{encoder_forward.8} parent=0 // pred_check_branch
    %431 = sbr.rel (0) target = $region41
  $region40: #{encoder_forward.8} parent=0 // pred_region
    _
  $region41: #{encoder_forward.8} parent=0 // pred_fallthru
    _
  // Predicated region
  $region42: #{encoder_forward.8} parent=0 // pred_check
    _
  $region43: #{encoder_forward.8} parent=0 // pred_check_branch
    %433 = sbr.rel (0) target = $region45
  $region44: #{encoder_forward.8} parent=0 // pred_region
    _
  $region45: #{encoder_forward.8} parent=0 // pred_fallthru
    _

// kernel: encoder_forward.7
$region0: #{encoder_forward.7}
  #allocation0 [shape = 'u32[]', space=smem, size = 0x4, offset = 0x4, fixed_abs, tag = 'smem constant byte address 0x4 - core index']
  #allocation1 [shape = 'u32[144,128]{1,0:T(1,128)}', space=vmem, size = 0x12000, scoped, tag = 'internal scratch']
  %s0 = inlined_call_operand.vmem [shape: bf16[2,8,32], index: 0, kind: input, shape index: {}]
  %s1 = inlined_call_operand.vmem [shape: bf16[2,8,32], index: 1, kind: input, shape index: {}]
  %s2 = inlined_call_operand.vmem [shape: bf16[2,8,32], index: 2, kind: input, shape index: {}]
  %s3 = inlined_call_operand.vmem [shape: bf16[128,32], index: 3, kind: input, shape index: {}]
  %s4 = inlined_call_operand.vmem [shape: bf16[128,32], index: 4, kind: input, shape index: {}]
  %s5 = inlined_call_operand.vmem [shape: f32[2,1,8], index: 5, kind: input, shape index: {}]
  %s6 = inlined_call_operand.vmem [shape: bf16[2,8,32], index: 6, kind: output, shape index: {}]
  %s7 = sld [smem:[#allocation0]]
  $region57: #{encoder_forward.7} parent=0
    _
  %s9 = ssub.s32 1, %s7
  %s10 = scalar_select 0, %s9, %s7
  loop: start=0, step=1, limit=4
  $region2: #{encoder_forward.7} parent=0 // loop_pre_header
    _
  $region3: #{encoder_forward.7} parent=0 // loop_header
    %s12 = sphi 0, %s16
    %p13 = scmp.ge.s32.totalorder %s12, 4
    %s19 = sphi 0, %s31
    %s20 = sphi 0, %s27
    %s21 = sphi 0, %s19
    %s22 = sphi 0, %s20
    %s23 = sphi 0, %s21
    %s24 = sphi 0, %s22
    %s36 = sphi 0, %s38
    %s39 = sphi 0, %s36
    %s40 = sphi 0, %s39
    %s56 = sphi 0, %s40
    %s64 = sphi 0, %s66
    %s67 = sphi 0, %s64
    %s68 = sphi 0, %s67
    %s84 = sphi 0, %s68
    %s92 = sphi 0, %s94
    %s95 = sphi 0, %s92
    %s96 = sphi 0, %s95
    %s112 = sphi 0, %s96
    %s118 = sphi 0, %s120
    %s121 = sphi 0, %s118
    %s122 = sphi 0, %s121
    %s138 = sphi 0, %s122
    %s144 = sphi 0, %s146
    %s147 = sphi 0, %s144
    %s148 = sphi 0, %s147
    %s164 = sphi 0, %s148
    %s170 = sphi 0, %s172
    %s173 = sphi 0, %s170
    %s174 = sphi 0, %s173
    %s190 = sphi 0, %s174
    %s198 = sphi 0, %s200
    %s201 = sphi 0, %s198
    %s202 = sphi 0, %s201
    %s218 = sphi 0, %s202
  $region4: #{encoder_forward.7} parent=0 // loop_header_branch
    %15 = sbr.rel (%p13) target = $region8
  $region5: #{encoder_forward.7} parent=0 // loop_body
    %s17 = ssub.s32 %s12, 1
    %s18 = ssub.s32 %s12, 2
    %s25 = sadd.s32 1, %s20
    %p26 = scmp.ge.s32.totalorder %s25, 1
    %s27 = scalar_select %p26, 0, %s25
    %s28 = sadd.s32 1, %s19
    %s29 = scalar_select %p26, %s28, %s19
    %p30 = scmp.ge.s32.totalorder %s29, 2
    %s31 = scalar_select %p30, 0, %s29
    %s32 = ssub.s32 %s19, %s31
    %s33 = ssub.s32 %s20, %s27
    %s34 = sor.u32 %s32, %s33
    %p35 = scmp.eq.s32.totalorder %s34, 0
    %s37 = sadd.s32 %s36, 1
    %s38 = scalar_select %p35, %s36, %s37
    %p41 = pneg %p35
    %p42 = scmp.eq.s32.totalorder %s12, 1
    %p43 = por %p41, %p42
    %p44 = scmp.ne.s32.totalorder %s36, %s39
    %p45 = scmp.eq.s32.totalorder %s12, 0
    %p46 = por %p44, %p45
    %p47 = scmp.ne.s32.totalorder %s36, %s39
    %p48 = scmp.eq.s32.totalorder %s17, 1
    %p49 = por %p47, %p48
    %p50 = scmp.ne.s32.totalorder %s39, %s40
    %p51 = scmp.eq.s32.totalorder %s17, 0
    %p52 = por %p50, %p51
    %p53 = scmp.ne.s32.totalorder %s39, %s40
    %p54 = scmp.eq.s32.totalorder %s18, 1
    %p55 = por %p53, %p54
    %p57 = scmp.ne.s32.totalorder %s40, %s56
    %p58 = scmp.eq.s32.totalorder %s18, 0
    %p59 = por %p57, %p58
    %s60 = ssub.s32 %s19, %s31
    %s61 = ssub.s32 %s20, %s27
    %s62 = sor.u32 %s60, %s61
    %p63 = scmp.eq.s32.totalorder %s62, 0
    %s65 = sadd.s32 %s64, 1
    %s66 = scalar_select %p63, %s64, %s65
    %p69 = pneg %p63
    %p70 = scmp.eq.s32.totalorder %s12, 1
    %p71 = por %p69, %p70
    %p72 = scmp.ne.s32.totalorder %s64, %s67
    %p73 = scmp.eq.s32.totalorder %s12, 0
    %p74 = por %p72, %p73
    %p75 = scmp.ne.s32.totalorder %s64, %s67
    %p76 = scmp.eq.s32.totalorder %s17, 1
    %p77 = por %p75, %p76
    %p78 = scmp.ne.s32.totalorder %s67, %s68
    %p79 = scmp.eq.s32.totalorder %s17, 0
    %p80 = por %p78, %p79
    %p81 = scmp.ne.s32.totalorder %s67, %s68
    %p82 = scmp.eq.s32.totalorder %s18, 1
    %p83 = por %p81, %p82
    %p85 = scmp.ne.s32.totalorder %s68, %s84
    %p86 = scmp.eq.s32.totalorder %s18, 0
    %p87 = por %p85, %p86
    %s88 = ssub.s32 %s19, %s31
    %s89 = ssub.s32 %s20, %s27
    %s90 = sor.u32 %s88, %s89
    %p91 = scmp.eq.s32.totalorder %s90, 0
    %s93 = sadd.s32 %s92, 1
    %s94 = scalar_select %p91, %s92, %s93
    %p97 = pneg %p91
    %p98 = scmp.eq.s32.totalorder %s12, 1
    %p99 = por %p97, %p98
    %p100 = scmp.ne.s32.totalorder %s92, %s95
    %p101 = scmp.eq.s32.totalorder %s12, 0
    %p102 = por %p100, %p101
    %p103 = scmp.ne.s32.totalorder %s92, %s95
    %p104 = scmp.eq.s32.totalorder %s17, 1
    %p105 = por %p103, %p104
    %p106 = scmp.ne.s32.totalorder %s95, %s96
    %p107 = scmp.eq.s32.totalorder %s17, 0
    %p108 = por %p106, %p107
    %p109 = scmp.ne.s32.totalorder %s95, %s96
    %p110 = scmp.eq.s32.totalorder %s18, 1
    %p111 = por %p109, %p110
    %p113 = scmp.ne.s32.totalorder %s96, %s112
    %p114 = scmp.eq.s32.totalorder %s18, 0
    %p115 = por %p113, %p114
    %s116 = ssub.s32 %s20, %s27
    %p117 = scmp.eq.s32.totalorder %s116, 0
    %s119 = sadd.s32 %s118, 1
    %s120 = scalar_select %p117, %s118, %s119
    %p123 = pneg %p117
    %p124 = scmp.eq.s32.totalorder %s12, 1
    %p125 = por %p123, %p124
    %p126 = scmp.ne.s32.totalorder %s118, %s121
    %p127 = scmp.eq.s32.totalorder %s12, 0
    %p128 = por %p126, %p127
    %p129 = scmp.ne.s32.totalorder %s118, %s121
    %p130 = scmp.eq.s32.totalorder %s17, 1
    %p131 = por %p129, %p130
    %p132 = scmp.ne.s32.totalorder %s121, %s122
    %p133 = scmp.eq.s32.totalorder %s17, 0
    %p134 = por %p132, %p133
    %p135 = scmp.ne.s32.totalorder %s121, %s122
    %p136 = scmp.eq.s32.totalorder %s18, 1
    %p137 = por %p135, %p136
    %p139 = scmp.ne.s32.totalorder %s122, %s138
    %p140 = scmp.eq.s32.totalorder %s18, 0
    %p141 = por %p139, %p140
    %s142 = ssub.s32 %s20, %s27
    %p143 = scmp.eq.s32.totalorder %s142, 0
    %s145 = sadd.s32 %s144, 1
    %s146 = scalar_select %p143, %s144, %s145
    %p149 = pneg %p143
    %p150 = scmp.eq.s32.totalorder %s12, 1
    %p151 = por %p149, %p150
    %p152 = scmp.ne.s32.totalorder %s144, %s147
    %p153 = scmp.eq.s32.totalorder %s12, 0
    %p154 = por %p152, %p153
    %p155 = scmp.ne.s32.totalorder %s144, %s147
    %p156 = scmp.eq.s32.totalorder %s17, 1
    %p157 = por %p155, %p156
    %p158 = scmp.ne.s32.totalorder %s147, %s148
    %p159 = scmp.eq.s32.totalorder %s17, 0
    %p160 = por %p158, %p159
    %p161 = scmp.ne.s32.totalorder %s147, %s148
    %p162 = scmp.eq.s32.totalorder %s18, 1
    %p163 = por %p161, %p162
    %p165 = scmp.ne.s32.totalorder %s148, %s164
    %p166 = scmp.eq.s32.totalorder %s18, 0
    %p167 = por %p165, %p166
    %s168 = ssub.s32 %s19, %s31
    %p169 = scmp.eq.s32.totalorder %s168, 0
    %s171 = sadd.s32 %s170, 1
    %s172 = scalar_select %p169, %s170, %s171
    %p175 = pneg %p169
    %p176 = scmp.eq.s32.totalorder %s12, 1
    %p177 = por %p175, %p176
    %p178 = scmp.ne.s32.totalorder %s170, %s173
    %p179 = scmp.eq.s32.totalorder %s12, 0
    %p180 = por %p178, %p179
    %p181 = scmp.ne.s32.totalorder %s170, %s173
    %p182 = scmp.eq.s32.totalorder %s17, 1
    %p183 = por %p181, %p182
    %p184 = scmp.ne.s32.totalorder %s173, %s174
    %p185 = scmp.eq.s32.totalorder %s17, 0
    %p186 = por %p184, %p185
    %p187 = scmp.ne.s32.totalorder %s173, %s174
    %p188 = scmp.eq.s32.totalorder %s18, 1
    %p189 = por %p187, %p188
    %p191 = scmp.ne.s32.totalorder %s174, %s190
    %p192 = scmp.eq.s32.totalorder %s18, 0
    %p193 = por %p191, %p192
    %s194 = ssub.s32 %s19, %s31
    %s195 = ssub.s32 %s20, %s27
    %s196 = sor.u32 %s194, %s195
    %p197 = scmp.eq.s32.totalorder %s196, 0
    %s199 = sadd.s32 %s198, 1
    %s200 = scalar_select %p197, %s198, %s199
    %p203 = pneg %p197
    %p204 = scmp.eq.s32.totalorder %s12, 1
    %p205 = por %p203, %p204
    %p206 = scmp.ne.s32.totalorder %s198, %s201
    %p207 = scmp.eq.s32.totalorder %s12, 0
    %p208 = por %p206, %p207
    %p209 = scmp.ne.s32.totalorder %s198, %s201
    %p210 = scmp.eq.s32.totalorder %s17, 1
    %p211 = por %p209, %p210
    %p212 = scmp.ne.s32.totalorder %s201, %s202
    %p213 = scmp.eq.s32.totalorder %s17, 0
    %p214 = por %p212, %p213
    %p215 = scmp.ne.s32.totalorder %s201, %s202
    %p216 = scmp.eq.s32.totalorder %s18, 1
    %p217 = por %p215, %p216
    %p219 = scmp.ne.s32.totalorder %s202, %s218
    %p220 = scmp.eq.s32.totalorder %s18, 0
    %p221 = por %p219, %p220
    %p222 = scmp.le.s32.totalorder 1, %s12
    %p223 = scmp.lt.s32.totalorder %s12, 3
    %p224 = pnand %p222, %p223
    %p225 = pneg %p224
    // Predicated region
    $region9: #{encoder_forward.7} parent=5 // pred_check
      _
    $region10: #{encoder_forward.7} parent=5 // pred_check_branch
      %227 = sbr.rel (%p224) target = $region12
    $region11: #{encoder_forward.7} parent=5 // pred_region
      %s228 = ssub.s32 %s12, 1
      // Predicated region
      $region13: #{encoder_forward.7} parent=11 // pred_check
        %p229 = pneg %p134
      $region14: #{encoder_forward.7} parent=11 // pred_check_branch
        %231 = sbr.rel (%p229) target = $region16
      $region15: #{encoder_forward.7} parent=11 // pred_region
        %p232 = scmp.lt.s32.totalorder %s22, 0
        %s233 = scalar_select %p232, %s22, 0
        %s234 = smul.addr %s233, 4
        %s235 = scalar_lea.vmem %s3, %s234
      $region16: #{encoder_forward.7} parent=11 // pred_fallthru
        _
      // Predicated region
      $region17: #{encoder_forward.7} parent=11 // pred_check
        %p236 = pneg %p160
      $region18: #{encoder_forward.7} parent=11 // pred_check_branch
        %238 = sbr.rel (%p236) target = $region20
      $region19: #{encoder_forward.7} parent=11 // pred_region
        %p239 = scmp.lt.s32.totalorder %s22, 0
        %s240 = scalar_select %p239, %s22, 0
        %s241 = smul.addr %s240, 4
        %s242 = scalar_lea.vmem %s4, %s241
      $region20: #{encoder_forward.7} parent=11 // pred_fallthru
        _
    $region12: #{encoder_forward.7} parent=5 // pred_fallthru
      _
    %p243 = scmp.lt.s32.totalorder %s12, 2
    // Predicated region
    $region21: #{encoder_forward.7} parent=5 // pred_check
      %p244 = pneg %p243
    $region22: #{encoder_forward.7} parent=5 // pred_check_branch
      %246 = sbr.rel (%p244) target = $region24
    $region23: #{encoder_forward.7} parent=5 // pred_region
      // Predicated region
      $region25: #{encoder_forward.7} parent=23 // pred_check
        %p247 = pneg %p46
      $region26: #{encoder_forward.7} parent=23 // pred_check_branch
        %249 = sbr.rel (%p247) target = $region28
      $region27: #{encoder_forward.7} parent=23 // pred_region
        %p250 = scmp.lt.s32.totalorder %s19, 1
        %s251 = scalar_select %p250, %s19, 1
        %p252 = scmp.lt.s32.totalorder %s20, 0
        %s253 = scalar_select %p252, %s20, 0
        %s254 = sadd.s32 %s253, %s251
        %s255 = smul.addr %s254, 4
        %s256 = scalar_lea.vmem %s0, %s255
      $region28: #{encoder_forward.7} parent=23 // pred_fallthru
        _
      // Predicated region
      $region29: #{encoder_forward.7} parent=23 // pred_check
        %p257 = pneg %p74
      $region30: #{encoder_forward.7} parent=23 // pred_check_branch
        %259 = sbr.rel (%p257) target = $region32
      $region31: #{encoder_forward.7} parent=23 // pred_region
        %p260 = scmp.lt.s32.totalorder %s19, 1
        %s261 = scalar_select %p260, %s19, 1
        %p262 = scmp.lt.s32.totalorder %s20, 0
        %s263 = scalar_select %p262, %s20, 0
        %s264 = sadd.s32 %s263, %s261
        %s265 = smul.addr %s264, 4
        %s266 = scalar_lea.vmem %s1, %s265
      $region32: #{encoder_forward.7} parent=23 // pred_fallthru
        _
      // Predicated region
      $region33: #{encoder_forward.7} parent=23 // pred_check
        %p267 = pneg %p102
      $region34: #{encoder_forward.7} parent=23 // pred_check_branch
        %269 = sbr.rel (%p267) target = $region36
      $region35: #{encoder_forward.7} parent=23 // pred_region
        %p270 = scmp.lt.s32.totalorder %s19, 1
        %s271 = scalar_select %p270, %s19, 1
        %p272 = scmp.lt.s32.totalorder %s20, 0
        %s273 = scalar_select %p272, %s20, 0
        %s274 = sadd.s32 %s273, %s271
        %s275 = smul.addr %s274, 4
        %s276 = scalar_lea.vmem %s2, %s275
      $region36: #{encoder_forward.7} parent=23 // pred_fallthru
        _
      // Predicated region
      $region37: #{encoder_forward.7} parent=23 // pred_check
        %p277 = pneg %p180
      $region38: #{encoder_forward.7} parent=23 // pred_check_branch
        %279 = sbr.rel (%p277) target = $region40
      $region39: #{encoder_forward.7} parent=23 // pred_region
        %p280 = scmp.lt.s32.totalorder %s19, 1
        %s281 = scalar_select %p280, %s19, 1
        %s282 = scalar_lea.vmem %s5, %s281
      $region40: #{encoder_forward.7} parent=23 // pred_fallthru
        _
    $region24: #{encoder_forward.7} parent=5 // pred_fallthru
      _
    %p283 = scmp.le.s32.totalorder 1, %s12
    %p284 = scmp.lt.s32.totalorder %s12, 3
    %p285 = pnand %p283, %p284
    %p286 = pneg %p285
    // Predicated region
    $region41: #{encoder_forward.7} parent=5 // pred_check
      _
    $region42: #{encoder_forward.7} parent=5 // pred_check_branch
      %288 = sbr.rel (%p285) target = $region44
    $region43: #{encoder_forward.7} parent=5 // pred_region
      %s289 = ssub.s32 %s12, 1
      %p290 = scmp.lt.s32.totalorder %s21, 1
      %s291 = scalar_select %p290, %s21, 1
      %p292 = scmp.lt.s32.totalorder %s22, 0
      %s293 = scalar_select %p292, %s22, 0
      %s294 = sadd.s32 %s293, %s291
      %s295 = smul.addr %s294, 4
      %s296 = scalar_lea.vmem %s0, %s295
      %p297 = pneg %p52
      %p298 = pneg %p49
      %p299 = scmp.lt.s32.totalorder %s21, 1
      %s300 = scalar_select %p299, %s21, 1
      %p301 = scmp.lt.s32.totalorder %s22, 0
      %s302 = scalar_select %p301, %s22, 0
      %s303 = sadd.s32 %s302, %s300
      %s304 = smul.addr %s303, 4
      %s305 = scalar_lea.vmem %s1, %s304
      %p306 = pneg %p80
      %p307 = pneg %p77
      %p308 = scmp.lt.s32.totalorder %s21, 1
      %s309 = scalar_select %p308, %s21, 1
      %p310 = scmp.lt.s32.totalorder %s22, 0
      %s311 = scalar_select %p310, %s22, 0
      %s312 = sadd.s32 %s311, %s309
      %s313 = smul.addr %s312, 4
      %s314 = scalar_lea.vmem %s2, %s313
      %p315 = pneg %p108
      %p316 = pneg %p105
      %p317 = scmp.lt.s32.totalorder %s22, 0
      %s318 = scalar_select %p317, %s22, 0
      %s319 = smul.addr %s318, 4
      %s320 = scalar_lea.vmem %s3, %s319
      %p321 = pneg %p134
      %p322 = pneg %p131
      %p323 = scmp.lt.s32.totalorder %s22, 0
      %s324 = scalar_select %p323, %s22, 0
      %s325 = smul.addr %s324, 4
      %s326 = scalar_lea.vmem %s4, %s325
      %p327 = pneg %p160
      %p328 = pneg %p157
      %p329 = scmp.lt.s32.totalorder %s21, 1
      %s330 = scalar_select %p329, %s21, 1
      %s331 = scalar_lea.vmem %s5, %s330
      %p332 = pneg %p186
      %p333 = pneg %p183
      %p334 = pneg %p214
      %p335 = pneg %p211
      %p336 = scmp.lt.s32.totalorder %s21, 1
      %s337 = scalar_select %p336, %s21, 1
      %p338 = scmp.lt.s32.totalorder %s22, 0
      %s339 = scalar_select %p338, %s22, 0
      %s340 = sadd.s32 %s339, %s337
      %s341 = smul.addr %s340, 4
      %s342 = scalar_lea.vmem %s6, %s341
      %p343 = scmp.lt.s32.totalorder %s21, 1
      %s344 = scalar_select %p343, %s21, 1
      %p345 = scmp.lt.s32.totalorder %s22, 0
      %s346 = scalar_select %p345, %s22, 0
      %s347 = sadd.s32 %s346, %s344
      %s348 = smul.addr %s347, 4
      %s349 = scalar_lea.vmem %s0, %s348
      %p350 = scmp.lt.s32.totalorder %s21, 1
      %s351 = scalar_select %p350, %s21, 1
      %p352 = scmp.lt.s32.totalorder %s22, 0
      %s353 = scalar_select %p352, %s22, 0
      %s354 = sadd.s32 %s353, %s351
      %s355 = smul.addr %s354, 4
      %s356 = scalar_lea.vmem %s1, %s355
      %p357 = scmp.lt.s32.totalorder %s21, 1
      %s358 = scalar_select %p357, %s21, 1
      %p359 = scmp.lt.s32.totalorder %s22, 0
      %s360 = scalar_select %p359, %s22, 0
      %s361 = sadd.s32 %s360, %s358
      %s362 = smul.addr %s361, 4
      %s363 = scalar_lea.vmem %s2, %s362
      %p364 = scmp.lt.s32.totalorder %s22, 0
      %s365 = scalar_select %p364, %s22, 0
      %s366 = smul.addr %s365, 4
      %s367 = scalar_lea.vmem %s3, %s366
      %p368 = scmp.lt.s32.totalorder %s22, 0
      %s369 = scalar_select %p368, %s22, 0
      %s370 = smul.addr %s369, 4
      %s371 = scalar_lea.vmem %s4, %s370
      %p372 = scmp.lt.s32.totalorder %s21, 1
      %s373 = scalar_select %p372, %s21, 1
      %s374 = scalar_lea.vmem %s5, %s373
      %p375 = scmp.lt.s32.totalorder %s21, 1
      %s376 = scalar_select %p375, %s21, 1
      %p377 = scmp.lt.s32.totalorder %s22, 0
      %s378 = scalar_select %p377, %s22, 0
      %s379 = sadd.s32 %s378, %s376
      %s380 = smul.addr %s379, 4
      %s381 = scalar_lea.vmem %s6, %s380
      %v383 = vld [vmem:[%s374] sm:$0x1]
      %vm384 = vcmp.gt.f32.partialorder %v383, 0.5
      %v385 = vld [vmem:[%s349] sm:$0xf]
      %v386 = vld [vmem:[%s356] sm:$0xf]
      %v387 = vld [vmem:[%s363] sm:$0xf]
      %v388 = vld [vmem:[%s367] sm:$0xf]
      %v389 = vld [vmem:[%s367 + $0x4] sm:$0xf]
      %v390 = vld [vmem:[%s367 + $0x8] sm:$0xf]
      %v391 = vld [vmem:[%s367 + $0xc] sm:$0xf]
      %v392 = vld [vmem:[%s367 + $0x10] sm:$0xf]
      %v393 = vld [vmem:[%s367 + $0x14] sm:$0xf]
      %v394 = vld [vmem:[%s367 + $0x18] sm:$0xf]
      %v395 = vld [vmem:[%s367 + $0x1c] sm:$0xf]
      %v396 = vld [vmem:[%s367 + $0x20] sm:$0xf]
      %v397 = vld [vmem:[%s367 + $0x24] sm:$0xf]
      %v398 = vld [vmem:[%s367 + $0x28] sm:$0xf]
      %v399 = vld [vmem:[%s367 + $0x2c] sm:$0xf]
      %v400 = vld [vmem:[%s367 + $0x30] sm:$0xf]
      %v401 = vld [vmem:[%s367 + $0x34] sm:$0xf]
      %v402 = vld [vmem:[%s367 + $0x38] sm:$0xf]
      %v403 = vld [vmem:[%s367 + $0x3c] sm:$0xf]
      %v404 = vld [vmem:[%s371] sm:$0xf]
      %v405 = vld [vmem:[%s371 + $0x4] sm:$0xf]
      %v406 = vld [vmem:[%s371 + $0x8] sm:$0xf]
      %v407 = vld [vmem:[%s371 + $0xc] sm:$0xf]
      %v408 = vld [vmem:[%s371 + $0x10] sm:$0xf]
      %v409 = vld [vmem:[%s371 + $0x14] sm:$0xf]
      %v410 = vld [vmem:[%s371 + $0x18] sm:$0xf]
      %v411 = vld [vmem:[%s371 + $0x1c] sm:$0xf]
      %v412 = vld [vmem:[%s371 + $0x20] sm:$0xf]
      %v413 = vld [vmem:[%s371 + $0x24] sm:$0xf]
      %v414 = vld [vmem:[%s371 + $0x28] sm:$0xf]
      %v415 = vld [vmem:[%s371 + $0x2c] sm:$0xf]
      %v416 = vld [vmem:[%s371 + $0x30] sm:$0xf]
      %v417 = vld [vmem:[%s371 + $0x34] sm:$0xf]
      %v418 = vld [vmem:[%s371 + $0x38] sm:$0xf]
      %v419 = vld [vmem:[%s371 + $0x3c] sm:$0xf]
      %v436 = vunpack.c.l.b16 %v388
      %v437 = vunpack.c.l.b16 %v389
      %v438 = vunpack.c.l.b16 %v390
      %v439 = vunpack.c.l.b16 %v391
      %v440 = vunpack.c.l.b16 %v392
      %v441 = vunpack.c.l.b16 %v393
      %v442 = vunpack.c.l.b16 %v394
      %v443 = vunpack.c.l.b16 %v395
      %v444 = vunpack.c.l.b16 %v396
      %v445 = vunpack.c.l.b16 %v397
      %v446 = vunpack.c.l.b16 %v398
      %v447 = vunpack.c.l.b16 %v399
      %v448 = vunpack.c.l.b16 %v400
      %v449 = vunpack.c.l.b16 %v401
      %v450 = vunpack.c.l.b16 %v402
      %v451 = vunpack.c.l.b16 %v403
      %v452 = vpack.c.b16 %v437, %v436
      %v453 = vpack.c.b16 %v439, %v438
      %v454 = vpack.c.b16 %v441, %v440
      %v455 = vpack.c.b16 %v443, %v442
      %v456 = vpack.c.b16 %v445, %v444
      %v457 = vpack.c.b16 %v447, %v446
      %v458 = vpack.c.b16 %v449, %v448
      %v459 = vpack.c.b16 %v451, %v450
      %vm460 = vcmask 64512
      %v462 = vsel %vm460, %v385, 0
      %v465 = vsel %vm460, %v452, 0
      %v468 = vsel %vm460, %v453, 0
      %v471 = vsel %vm460, %v454, 0
      %v474 = vsel %vm460, %v455, 0
      %v477 = vsel %vm460, %v456, 0
      %v480 = vsel %vm460, %v457, 0
      %v483 = vsel %vm460, %v458, 0
      %v486 = vsel %vm460, %v459, 0
      %488 = vmatprep.subr.bf16.mxu0 0
      %489 = vmatpush1.bf16.xpose.msra.mxu0 %v465
      %490 = vmatprep.subr.bf16.mxu0 0
      %491 = vmatpush1.bf16.xpose.msra.mxu0 %v468
      %492 = vmatprep.subr.bf16.mxu0 0
      %493 = vmatpush1.bf16.xpose.msra.mxu0 %v471
      %494 = vmatprep.subr.bf16.mxu0 0
      %495 = vmatpush1.bf16.xpose.msra.mxu0 %v474
      %496 = vmatprep.subr.bf16.mxu0 0
      %497 = vmatpush1.bf16.xpose.msra.mxu0 %v477
      %498 = vmatprep.subr.bf16.mxu0 0
      %499 = vmatpush1.bf16.xpose.msra.mxu0 %v480
      %500 = vmatprep.subr.bf16.mxu0 0
      %501 = vmatpush1.bf16.xpose.msra.mxu0 %v483
      %502 = vmatprep.subr.bf16.mxu0 0
      %503 = vmatpush1.bf16.xpose.msra.mxu0 %v486
      %504 = vmatprep.subr.bf16.mxu0 0
      %505 = vmatpush1.bf16.xpose.msra.mxu0 0
      %506 = vmatprep.subr.bf16.mxu0 0
      %507 = vmatpush1.bf16.xpose.msra.mxu0 0
      %508 = vmatprep.subr.bf16.mxu0 0
      %509 = vmatpush1.bf16.xpose.msra.mxu0 0
      %510 = vmatprep.subr.bf16.mxu0 0
      %511 = vmatpush1.bf16.xpose.msra.mxu0 0
      %512 = vmatprep.subr.bf16.mxu0 0
      %513 = vmatpush1.bf16.xpose.msra.mxu0 0
      %514 = vmatprep.subr.bf16.mxu0 0
      %515 = vmatpush1.bf16.xpose.msra.mxu0 0
      %516 = vmatprep.subr.bf16.mxu0 0
      %517 = vmatpush1.bf16.xpose.msra.mxu0 0
      %518 = vmatprep.subr.bf16.mxu0 0
      %519 = vmatpush1.bf16.xpose.msra.mxu0 0
      %520 = vmatprep.mubr.bf16.mxu0 0
      %521 = vmatmul.mubr.bf16.gmra.mrb[0].mxu0 %v462
      %v522 = vpop.f32.mrb[0].mxu0
      %v523 = vadd.f32 0.0, %v522
      %v524 = vpop.f32.mrb[0].mxu0
      %v525 = vpop.f32.mrb[0].mxu0
      %v526 = vpop.f32.mrb[0].mxu0
      %527 = vdwg.mxu0
      %v544 = vunpack.c.l.b16 %v404
      %v545 = vunpack.c.l.b16 %v405
      %v546 = vunpack.c.l.b16 %v406
      %v547 = vunpack.c.l.b16 %v407
      %v548 = vunpack.c.l.b16 %v408
      %v549 = vunpack.c.l.b16 %v409
      %v550 = vunpack.c.l.b16 %v410
      %v551 = vunpack.c.l.b16 %v411
      %v552 = vunpack.c.l.b16 %v412
      %v553 = vunpack.c.l.b16 %v413
      %v554 = vunpack.c.l.b16 %v414
      %v555 = vunpack.c.l.b16 %v415
      %v556 = vunpack.c.l.b16 %v416
      %v557 = vunpack.c.l.b16 %v417
      %v558 = vunpack.c.l.b16 %v418
      %v559 = vunpack.c.l.b16 %v419
      %v560 = vpack.c.b16 %v545, %v544
      %v561 = vpack.c.b16 %v547, %v546
      %v562 = vpack.c.b16 %v549, %v548
      %v563 = vpack.c.b16 %v551, %v550
      %v564 = vpack.c.b16 %v553, %v552
      %v565 = vpack.c.b16 %v555, %v554
      %v566 = vpack.c.b16 %v557, %v556
      %v567 = vpack.c.b16 %v559, %v558
      %v569 = vsel %vm460, %v386, 0
      %v572 = vsel %vm460, %v560, 0
      %v575 = vsel %vm460, %v561, 0
      %v578 = vsel %vm460, %v562, 0
      %v581 = vsel %vm460, %v563, 0
      %v584 = vsel %vm460, %v564, 0
      %v587 = vsel %vm460, %v565, 0
      %v590 = vsel %vm460, %v566, 0
      %v593 = vsel %vm460, %v567, 0
      %595 = vmatprep.subr.bf16.mxu0 0
      %596 = vmatpush1.bf16.xpose.msra.mxu0 %v572
      %597 = vmatprep.subr.bf16.mxu0 0
      %598 = vmatpush1.bf16.xpose.msra.mxu0 %v575
      %599 = vmatprep.subr.bf16.mxu0 0
      %600 = vmatpush1.bf16.xpose.msra.mxu0 %v578
      %601 = vmatprep.subr.bf16.mxu0 0
      %602 = vmatpush1.bf16.xpose.msra.mxu0 %v581
      %603 = vmatprep.subr.bf16.mxu0 0
      %604 = vmatpush1.bf16.xpose.msra.mxu0 %v584
      %605 = vmatprep.subr.bf16.mxu0 0
      %606 = vmatpush1.bf16.xpose.msra.mxu0 %v587
      %607 = vmatprep.subr.bf16.mxu0 0
      %608 = vmatpush1.bf16.xpose.msra.mxu0 %v590
      %609 = vmatprep.subr.bf16.mxu0 0
      %610 = vmatpush1.bf16.xpose.msra.mxu0 %v593
      %611 = vmatprep.subr.bf16.mxu0 0
      %612 = vmatpush1.bf16.xpose.msra.mxu0 0
      %613 = vmatprep.subr.bf16.mxu0 0
      %614 = vmatpush1.bf16.xpose.msra.mxu0 0
      %615 = vmatprep.subr.bf16.mxu0 0
      %616 = vmatpush1.bf16.xpose.msra.mxu0 0
      %617 = vmatprep.subr.bf16.mxu0 0
      %618 = vmatpush1.bf16.xpose.msra.mxu0 0
      %619 = vmatprep.subr.bf16.mxu0 0
      %620 = vmatpush1.bf16.xpose.msra.mxu0 0
      %621 = vmatprep.subr.bf16.mxu0 0
      %622 = vmatpush1.bf16.xpose.msra.mxu0 0
      %623 = vmatprep.subr.bf16.mxu0 0
      %624 = vmatpush1.bf16.xpose.msra.mxu0 0
      %625 = vmatprep.subr.bf16.mxu0 0
      %626 = vmatpush1.bf16.xpose.msra.mxu0 0
      %627 = vmatprep.mubr.bf16.mxu0 0
      %628 = vmatmul.mubr.bf16.gmra.mrb[0].mxu0 %v569
      %v629 = vpop.f32.mrb[0].mxu0
      %v630 = vadd.f32 0.0, %v629
      %v631 = vpop.f32.mrb[0].mxu0
      %v632 = vpop.f32.mrb[0].mxu0
      %v633 = vpop.f32.mrb[0].mxu0
      %634 = vdwg.mxu0
      %v635 = vlaneseq
      %v636 = vshrl.u32 %v635, 7
      %v637 = vsub.s32 7, %v636
      %639 = vrot.lane.b32.xlu0 %v523, 127
      %v640 = vpop.permute.xlu0 %639
      %v642 = vand.u32 %v637, 1
      %vm643 = vcmp.ne.s32.totalorder %v642, 0
      %v644 = vsel %vm643, 1, 0
      %vm645 = vcmp.eq.s32.totalorder %v644, 1
      %v646 = vsel %vm645, %v640, %v523
      %648 = vrot.lane.b32.xlu0 %v646, 126
      %v649 = vpop.permute.xlu0 %648
      %v651 = vand.u32 %v637, 2
      %vm652 = vcmp.ne.s32.totalorder %v651, 0
      %v653 = vsel %vm652, 1, 0
      %vm654 = vcmp.eq.s32.totalorder %v653, 1
      %v655 = vsel %vm654, %v649, %v646
      %657 = vrot.lane.b32.xlu0 %v655, 124
      %v658 = vpop.permute.xlu0 %657
      %v660 = vand.u32 %v637, 4
      %vm661 = vcmp.ne.s32.totalorder %v660, 0
      %v662 = vsel %vm661, 1, 0
      %vm663 = vcmp.eq.s32.totalorder %v662, 1
      %v664 = vsel %vm663, %v658, %v655
      %666 = vrot.lane.b32.xlu0 %v630, 127
      %v667 = vpop.permute.xlu0 %666
      %v669 = vsel %vm645, %v667, %v630
      %671 = vrot.lane.b32.xlu0 %v669, 126
      %v672 = vpop.permute.xlu0 %671
      %v674 = vsel %vm654, %v672, %v669
      %676 = vrot.lane.b32.xlu0 %v674, 124
      %v677 = vpop.permute.xlu0 %676
      %v679 = vsel %vm663, %v677, %v674
      %680 = vxpose.xlu0.b32.start [1/16] %v679, 128
      %681 = vxpose.xlu0.b32.cont [2/16] 0.0, 128
      %682 = vxpose.xlu0.b32.cont [3/16] 0.0, 128
      %683 = vxpose.xlu0.b32.cont [4/16] 0.0, 128
      %684 = vxpose.xlu0.b32.cont [5/16] 0.0, 128
      %685 = vxpose.xlu0.b32.cont [6/16] 0.0, 128
      %686 = vxpose.xlu0.b32.cont [7/16] 0.0, 128
      %687 = vxpose.xlu0.b32.cont [8/16] 0.0, 128
      %688 = vxpose.xlu0.b32.cont [9/16] 0.0, 128
      %689 = vxpose.xlu0.b32.cont [10/16] 0.0, 128
      %690 = vxpose.xlu0.b32.cont [11/16] 0.0, 128
      %691 = vxpose.xlu0.b32.cont [12/16] 0.0, 128
      %692 = vxpose.xlu0.b32.cont [13/16] 0.0, 128
      %693 = vxpose.xlu0.b32.cont [14/16] 0.0, 128
      %694 = vxpose.xlu0.b32.cont [15/16] 0.0, 128
      %695 = vxpose.xlu0.b32.end [16/16] 0.0, 128
      %v696 = vpop.trf.xlu0
      %v697 = vpop.trf.xlu0
      %v698 = vpop.trf.xlu0
      %v699 = vpop.trf.xlu0
      %v700 = vpop.trf.xlu0
      %v701 = vpop.trf.xlu0
      %v702 = vpop.trf.xlu0
      %v703 = vpop.trf.xlu0
      %v704 = vpop.trf.xlu0
      %v705 = vpop.trf.xlu0
      %v706 = vpop.trf.xlu0
      %v707 = vpop.trf.xlu0
      %v708 = vpop.trf.xlu0
      %v709 = vpop.trf.xlu0
      %v710 = vpop.trf.xlu0
      %v711 = vpop.trf.xlu0
      %712 = vmatprep.subr.bf16.mxu0 0
      %713 = vmatpush1.bf16.xpose.msra.mxu0 %v569
      %714 = vmatprep.subr.bf16.mxu0 0
      %715 = vmatpush1.bf16.xpose.msra.mxu0 0
      %716 = vmatprep.subr.bf16.mxu0 0
      %717 = vmatpush1.bf16.xpose.msra.mxu0 0
      %718 = vmatprep.subr.bf16.mxu0 0
      %719 = vmatpush1.bf16.xpose.msra.mxu0 0
      %720 = vmatprep.subr.bf16.mxu0 0
      %721 = vmatpush1.bf16.xpose.msra.mxu0 0
      %722 = vmatprep.subr.bf16.mxu0 0
      %723 = vmatpush1.bf16.xpose.msra.mxu0 0
      %724 = vmatprep.subr.bf16.mxu0 0
      %725 = vmatpush1.bf16.xpose.msra.mxu0 0
      %726 = vmatprep.subr.bf16.mxu0 0
      %727 = vmatpush1.bf16.xpose.msra.mxu0 0
      %728 = vmatprep.subr.bf16.mxu0 0
      %729 = vmatpush1.bf16.xpose.msra.mxu0 0
      %730 = vmatprep.subr.bf16.mxu0 0
      %731 = vmatpush1.bf16.xpose.msra.mxu0 0
      %732 = vmatprep.subr.bf16.mxu0 0
      %733 = vmatpush1.bf16.xpose.msra.mxu0 0
      %734 = vmatprep.subr.bf16.mxu0 0
      %735 = vmatpush1.bf16.xpose.msra.mxu0 0
      %736 = vmatprep.subr.bf16.mxu0 0
      %737 = vmatpush1.bf16.xpose.msra.mxu0 0
      %738 = vmatprep.subr.bf16.mxu0 0
      %739 = vmatpush1.bf16.xpose.msra.mxu0 0
      %740 = vmatprep.subr.bf16.mxu0 0
      %741 = vmatpush1.bf16.xpose.msra.mxu0 0
      %742 = vmatprep.subr.bf16.mxu0 0
      %743 = vmatpush1.bf16.xpose.msra.mxu0 0
      %744 = vmatprep.mubr.bf16.mxu0 0
      %745 = vmatmul.mubr.bf16.gmra.mrb[0].mxu0 %v462
      %v746 = vpop.f32.mrb[0].mxu0
      %v747 = vadd.f32 %v664, %v746
      %v748 = vpop.f32.mrb[0].mxu0
      %v749 = vpop.f32.mrb[0].mxu0
      %v750 = vpop.f32.mrb[0].mxu0
      %751 = vdwg.mxu0
      %v752 = vadd.f32 %v747, %v696
      %v753 = vsel %vm384, 1, 0
      %v754 = vlaneseq
      %v755 = vshrl.u32 %v754, 7
      %v756 = vsub.s32 0, %v755
      %v757 = vrot.slane %v753, %v756
      %vm758 = vcmp.eq.s32.totalorder %v757, 1
      %v759 = vsel %vm758, -inf, %v752
      %v760 = vsel %vm460, %v759, -inf
      %761 = vmax.xlane.f32.xlu0 %v760
      %v762 = vpop.xlane.xlu0 %761
      %v763 = vmax.f32 %v762, -1e+30
      %v764 = vsub.f32 %v759, %v763
      %v765 = vmul.f32 %v764, 1.442695
      %v766 = vpow.pop %v765
      %v767 = vsel %vm460, %v766, 0.0
      %768 = vadd.xlane.f32.xlu0 %v767
      %v769 = vpop.xlane.xlu0 %768
      %v770 = vmax.f32 %v769, 1e-30
      %v771 = vrcp.pop %v770
      %v772 = vmul.f32 %v766, %v771
      %v773 = vpack.c.bf16 %v772, %v772
      %v775 = vsel %vm460, %v773, 0
      %vm777 = vcmask 1043456
      %v779 = vsel %vm777, %v387, 0
      %781 = vmatprep.subr.bf16.mxu0 0
      %782 = vmatpush1.bf16.msra.mxu0 %v779
      %783 = vmatprep.subr.bf16.mxu0 0
      %784 = vmatpush1.bf16.msra.mxu0 0
      %785 = vmatprep.subr.bf16.mxu0 0
      %786 = vmatpush1.bf16.msra.mxu0 0
      %787 = vmatprep.subr.bf16.mxu0 0
      %788 = vmatpush1.bf16.msra.mxu0 0
      %789 = vmatprep.subr.bf16.mxu0 0
      %790 = vmatpush1.bf16.msra.mxu0 0
      %791 = vmatprep.subr.bf16.mxu0 0
      %792 = vmatpush1.bf16.msra.mxu0 0
      %793 = vmatprep.subr.bf16.mxu0 0
      %794 = vmatpush1.bf16.msra.mxu0 0
      %795 = vmatprep.subr.bf16.mxu0 0
      %796 = vmatpush1.bf16.msra.mxu0 0
      %797 = vmatprep.subr.bf16.mxu0 0
      %798 = vmatpush1.bf16.msra.mxu0 0
      %799 = vmatprep.subr.bf16.mxu0 0
      %800 = vmatpush1.bf16.msra.mxu0 0
      %801 = vmatprep.subr.bf16.mxu0 0
      %802 = vmatpush1.bf16.msra.mxu0 0
      %803 = vmatprep.subr.bf16.mxu0 0
      %804 = vmatpush1.bf16.msra.mxu0 0
      %805 = vmatprep.subr.bf16.mxu0 0
      %806 = vmatpush1.bf16.msra.mxu0 0
      %807 = vmatprep.subr.bf16.mxu0 0
      %808 = vmatpush1.bf16.msra.mxu0 0
      %809 = vmatprep.subr.bf16.mxu0 0
      %810 = vmatpush1.bf16.msra.mxu0 0
      %811 = vmatprep.subr.bf16.mxu0 0
      %812 = vmatpush1.bf16.msra.mxu0 0
      %813 = vmatprep.mubr.bf16.mxu0 0
      %814 = vmatmul.mubr.bf16.gmra.mrb[0].mxu0 %v775
      %v815 = vpop.f32.mrb[0].mxu0
      %v816 = vadd.f32 0.0, %v815
      %v817 = vpop.f32.mrb[0].mxu0
      %v818 = vpop.f32.mrb[0].mxu0
      %v819 = vpop.f32.mrb[0].mxu0
      %820 = vdwg.mxu0
      %v822 = vunpack.c.l.b16 %v385
      %v823 = vpack.c.b16 %v822, %v822
      %824 = vrot.lane.b32.xlu0 %v823, 120
      %v825 = vpop.permute.xlu0 %824
      %826 = vrot.lane.b32.xlu0 %v452, 120
      %v827 = vpop.permute.xlu0 %826
      %828 = vrot.lane.b32.xlu0 %v453, 120
      %v829 = vpop.permute.xlu0 %828
      %830 = vrot.lane.b32.xlu0 %v454, 120
      %v831 = vpop.permute.xlu0 %830
      %832 = vrot.lane.b32.xlu0 %v455, 120
      %v833 = vpop.permute.xlu0 %832
      %834 = vrot.lane.b32.xlu0 %v456, 120
      %v835 = vpop.permute.xlu0 %834
      %836 = vrot.lane.b32.xlu0 %v457, 120
      %v837 = vpop.permute.xlu0 %836
      %838 = vrot.lane.b32.xlu0 %v458, 120
      %v839 = vpop.permute.xlu0 %838
      %840 = vrot.lane.b32.xlu0 %v459, 120
      %v841 = vpop.permute.xlu0 %840
      %v843 = vsel %vm460, %v825, 0
      %v846 = vsel %vm460, %v827, 0
      %v849 = vsel %vm460, %v829, 0
      %v852 = vsel %vm460, %v831, 0
      %v855 = vsel %vm460, %v833, 0
      %v858 = vsel %vm460, %v835, 0
      %v861 = vsel %vm460, %v837, 0
      %v864 = vsel %vm460, %v839, 0
      %v867 = vsel %vm460, %v841, 0
      %869 = vmatprep.subr.bf16.mxu0 0
      %870 = vmatpush1.bf16.xpose.msra.mxu0 %v846
      %871 = vmatprep.subr.bf16.mxu0 0
      %872 = vmatpush1.bf16.xpose.msra.mxu0 %v849
      %873 = vmatprep.subr.bf16.mxu0 0
      %874 = vmatpush1.bf16.xpose.msra.mxu0 %v852
      %875 = vmatprep.subr.bf16.mxu0 0
      %876 = vmatpush1.bf16.xpose.msra.mxu0 %v855
      %877 = vmatprep.subr.bf16.mxu0 0
      %878 = vmatpush1.bf16.xpose.msra.mxu0 %v858
      %879 = vmatprep.subr.bf16.mxu0 0
      %880 = vmatpush1.bf16.xpose.msra.mxu0 %v861
      %881 = vmatprep.subr.bf16.mxu0 0
      %882 = vmatpush1.bf16.xpose.msra.mxu0 %v864
      %883 = vmatprep.subr.bf16.mxu0 0
      %884 = vmatpush1.bf16.xpose.msra.mxu0 %v867
      %885 = vmatprep.subr.bf16.mxu0 0
      %886 = vmatpush1.bf16.xpose.msra.mxu0 0
      %887 = vmatprep.subr.bf16.mxu0 0
      %888 = vmatpush1.bf16.xpose.msra.mxu0 0
      %889 = vmatprep.subr.bf16.mxu0 0
      %890 = vmatpush1.bf16.xpose.msra.mxu0 0
      %891 = vmatprep.subr.bf16.mxu0 0
      %892 = vmatpush1.bf16.xpose.msra.mxu0 0
      %893 = vmatprep.subr.bf16.mxu0 0
      %894 = vmatpush1.bf16.xpose.msra.mxu0 0
      %895 = vmatprep.subr.bf16.mxu0 0
      %896 = vmatpush1.bf16.xpose.msra.mxu0 0
      %897 = vmatprep.subr.bf16.mxu0 0
      %898 = vmatpush1.bf16.xpose.msra.mxu0 0
      %899 = vmatprep.subr.bf16.mxu0 0
      %900 = vmatpush1.bf16.xpose.msra.mxu0 0
      %901 = vmatprep.mubr.bf16.mxu0 0
      %902 = vmatmul.mubr.bf16.gmra.mrb[0].mxu0 %v843
      %v903 = vpop.f32.mrb[0].mxu0
      %v904 = vadd.f32 0.0, %v903
      %v905 = vpop.f32.mrb[0].mxu0
      %v906 = vpop.f32.mrb[0].mxu0
      %v907 = vpop.f32.mrb[0].mxu0
      %908 = vdwg.mxu0
      %v910 = vunpack.c.l.b16 %v386
      %v911 = vpack.c.b16 %v910, %v910
      %912 = vrot.lane.b32.xlu0 %v911, 120
      %v913 = vpop.permute.xlu0 %912
      %914 = vrot.lane.b32.xlu0 %v560, 120
      %v915 = vpop.permute.xlu0 %914
      %916 = vrot.lane.b32.xlu0 %v561, 120
      %v917 = vpop.permute.xlu0 %916
      %918 = vrot.lane.b32.xlu0 %v562, 120
      %v919 = vpop.permute.xlu0 %918
      %920 = vrot.lane.b32.xlu0 %v563, 120
      %v921 = vpop.permute.xlu0 %920
      %922 = vrot.lane.b32.xlu0 %v564, 120
      %v923 = vpop.permute.xlu0 %922
      %924 = vrot.lane.b32.xlu0 %v565, 120
      %v925 = vpop.permute.xlu0 %924
      %926 = vrot.lane.b32.xlu0 %v566, 120
      %v927 = vpop.permute.xlu0 %926
      %928 = vrot.lane.b32.xlu0 %v567, 120
      %v929 = vpop.permute.xlu0 %928
      %v931 = vsel %vm460, %v913, 0
      %v934 = vsel %vm460, %v915, 0
      %v937 = vsel %vm460, %v917, 0
      %v940 = vsel %vm460, %v919, 0
      %v943 = vsel %vm460, %v921, 0
      %v946 = vsel %vm460, %v923, 0
      %v949 = vsel %vm460, %v925, 0
      %v952 = vsel %vm460, %v927, 0
      %v955 = vsel %vm460, %v929, 0
      %957 = vmatprep.subr.bf16.mxu0 0
      %958 = vmatpush1.bf16.xpose.msra.mxu0 %v934
      %959 = vmatprep.subr.bf16.mxu0 0
      %960 = vmatpush1.bf16.xpose.msra.mxu0 %v937
      %961 = vmatprep.subr.bf16.mxu0 0
      %962 = vmatpush1.bf16.xpose.msra.mxu0 %v940
      %963 = vmatprep.subr.bf16.mxu0 0
      %964 = vmatpush1.bf16.xpose.msra.mxu0 %v943
      %965 = vmatprep.subr.bf16.mxu0 0
      %966 = vmatpush1.bf16.xpose.msra.mxu0 %v946
      %967 = vmatprep.subr.bf16.mxu0 0
      %968 = vmatpush1.bf16.xpose.msra.mxu0 %v949
      %969 = vmatprep.subr.bf16.mxu0 0
      %970 = vmatpush1.bf16.xpose.msra.mxu0 %v952
      %971 = vmatprep.subr.bf16.mxu0 0
      %972 = vmatpush1.bf16.xpose.msra.mxu0 %v955
      %973 = vmatprep.subr.bf16.mxu0 0
      %974 = vmatpush1.bf16.xpose.msra.mxu0 0
      %975 = vmatprep.subr.bf16.mxu0 0
      %976 = vmatpush1.bf16.xpose.msra.mxu0 0
      %977 = vmatprep.subr.bf16.mxu0 0
      %978 = vmatpush1.bf16.xpose.msra.mxu0 0
      %979 = vmatprep.subr.bf16.mxu0 0
      %980 = vmatpush1.bf16.xpose.msra.mxu0 0
      %981 = vmatprep.subr.bf16.mxu0 0
      %982 = vmatpush1.bf16.xpose.msra.mxu0 0
      %983 = vmatprep.subr.bf16.mxu0 0
      %984 = vmatpush1.bf16.xpose.msra.mxu0 0
      %985 = vmatprep.subr.bf16.mxu0 0
      %986 = vmatpush1.bf16.xpose.msra.mxu0 0
      %987 = vmatprep.subr.bf16.mxu0 0
      %988 = vmatpush1.bf16.xpose.msra.mxu0 0
      %989 = vmatprep.mubr.bf16.mxu0 0
      %990 = vmatmul.mubr.bf16.gmra.mrb[0].mxu0 %v931
      %v991 = vpop.f32.mrb[0].mxu0
      %v992 = vadd.f32 0.0, %v991
      %v993 = vpop.f32.mrb[0].mxu0
      %v994 = vpop.f32.mrb[0].mxu0
      %v995 = vpop.f32.mrb[0].mxu0
      %996 = vdwg.mxu0
      %998 = vrot.lane.b32.xlu0 %v904, 127
      %v999 = vpop.permute.xlu0 %998
      %v1001 = vsel %vm645, %v999, %v904
      %1003 = vrot.lane.b32.xlu0 %v1001, 126
      %v1004 = vpop.permute.xlu0 %1003
      %v1006 = vsel %vm654, %v1004, %v1001
      %1008 = vrot.lane.b32.xlu0 %v1006, 124
      %v1009 = vpop.permute.xlu0 %1008
      %v1011 = vsel %vm663, %v1009, %v1006
      %1013 = vrot.lane.b32.xlu0 %v992, 127
      %v1014 = vpop.permute.xlu0 %1013
      %v1016 = vsel %vm645, %v1014, %v992
      %1018 = vrot.lane.b32.xlu0 %v1016, 126
      %v1019 = vpop.permute.xlu0 %1018
      %v1021 = vsel %vm654, %v1019, %v1016
      %1023 = vrot.lane.b32.xlu0 %v1021, 124
      %v1024 = vpop.permute.xlu0 %1023
      %v1026 = vsel %vm663, %v1024, %v1021
      %1027 = vxpose.xlu0.b32.start [1/16] %v1026, 128
      %1028 = vxpose.xlu0.b32.cont [2/16] 0.0, 128
      %1029 = vxpose.xlu0.b32.cont [3/16] 0.0, 128
      %1030 = vxpose.xlu0.b32.cont [4/16] 0.0, 128
      %1031 = vxpose.xlu0.b32.cont [5/16] 0.0, 128
      %1032 = vxpose.xlu0.b32.cont [6/16] 0.0, 128
      %1033 = vxpose.xlu0.b32.cont [7/16] 0.0, 128
      %1034 = vxpose.xlu0.b32.cont [8/16] 0.0, 128
      %1035 = vxpose.xlu0.b32.cont [9/16] 0.0, 128
      %1036 = vxpose.xlu0.b32.cont [10/16] 0.0, 128
      %1037 = vxpose.xlu0.b32.cont [11/16] 0.0, 128
      %1038 = vxpose.xlu0.b32.cont [12/16] 0.0, 128
      %1039 = vxpose.xlu0.b32.cont [13/16] 0.0, 128
      %1040 = vxpose.xlu0.b32.cont [14/16] 0.0, 128
      %1041 = vxpose.xlu0.b32.cont [15/16] 0.0, 128
      %1042 = vxpose.xlu0.b32.end [16/16] 0.0, 128
      %v1043 = vpop.trf.xlu0
      %v1044 = vpop.trf.xlu0
      %v1045 = vpop.trf.xlu0
      %v1046 = vpop.trf.xlu0
      %v1047 = vpop.trf.xlu0
      %v1048 = vpop.trf.xlu0
      %v1049 = vpop.trf.xlu0
      %v1050 = vpop.trf.xlu0
      %v1051 = vpop.trf.xlu0
      %v1052 = vpop.trf.xlu0
      %v1053 = vpop.trf.xlu0
      %v1054 = vpop.trf.xlu0
      %v1055 = vpop.trf.xlu0
      %v1056 = vpop.trf.xlu0
      %v1057 = vpop.trf.xlu0
      %v1058 = vpop.trf.xlu0
      %1059 = vmatprep.subr.bf16.mxu0 0
      %1060 = vmatpush1.bf16.xpose.msra.mxu0 %v931
      %1061 = vmatprep.subr.bf16.mxu0 0
      %1062 = vmatpush1.bf16.xpose.msra.mxu0 0
      %1063 = vmatprep.subr.bf16.mxu0 0
      %1064 = vmatpush1.bf16.xpose.msra.mxu0 0
      %1065 = vmatprep.subr.bf16.mxu0 0
      %1066 = vmatpush1.bf16.xpose.msra.mxu0 0
      %1067 = vmatprep.subr.bf16.mxu0 0
      %1068 = vmatpush1.bf16.xpose.msra.mxu0 0
      %1069 = vmatprep.subr.bf16.mxu0 0
      %1070 = vmatpush1.bf16.xpose.msra.mxu0 0
      %1071 = vmatprep.subr.bf16.mxu0 0
      %1072 = vmatpush1.bf16.xpose.msra.mxu0 0
      %1073 = vmatprep.subr.bf16.mxu0 0
      %1074 = vmatpush1.bf16.xpose.msra.mxu0 0
      %1075 = vmatprep.subr.bf16.mxu0 0
      %1076 = vmatpush1.bf16.xpose.msra.mxu0 0
      %1077 = vmatprep.subr.bf16.mxu0 0
      %1078 = vmatpush1.bf16.xpose.msra.mxu0 0
      %1079 = vmatprep.subr.bf16.mxu0 0
      %1080 = vmatpush1.bf16.xpose.msra.mxu0 0
      %1081 = vmatprep.subr.bf16.mxu0 0
      %1082 = vmatpush1.bf16.xpose.msra.mxu0 0
      %1083 = vmatprep.subr.bf16.mxu0 0
      %1084 = vmatpush1.bf16.xpose.msra.mxu0 0
      %1085 = vmatprep.subr.bf16.mxu0 0
      %1086 = vmatpush1.bf16.xpose.msra.mxu0 0
      %1087 = vmatprep.subr.bf16.mxu0 0
      %1088 = vmatpush1.bf16.xpose.msra.mxu0 0
      %1089 = vmatprep.subr.bf16.mxu0 0
      %1090 = vmatpush1.bf16.xpose.msra.mxu0 0
      %1091 = vmatprep.mubr.bf16.mxu0 0
      %1092 = vmatmul.mubr.bf16.gmra.mrb[0].mxu0 %v843
      %v1093 = vpop.f32.mrb[0].mxu0
      %v1094 = vadd.f32 %v1011, %v1093
      %v1095 = vpop.f32.mrb[0].mxu0
      %v1096 = vpop.f32.mrb[0].mxu0
      %v1097 = vpop.f32.mrb[0].mxu0
      %1098 = vdwg.mxu0
      %v1099 = vadd.f32 %v1094, %v1043
      %v1100 = vsel %vm758, -inf, %v1099
      %v1101 = vsel %vm460, %v1100, -inf
      %1102 = vmax.xlane.f32.xlu0 %v1101
      %v1103 = vpop.xlane.xlu0 %1102
      %v1104 = vmax.f32 %v1103, -1e+30
      %v1105 = vsub.f32 %v1100, %v1104
      %v1106 = vmul.f32 %v1105, 1.442695
      %v1107 = vpow.pop %v1106
      %v1108 = vsel %vm460, %v1107, 0.0
      %1109 = vadd.xlane.f32.xlu0 %v1108
      %v1110 = vpop.xlane.xlu0 %1109
      %v1111 = vmax.f32 %v1110, 1e-30
      %v1112 = vrcp.pop %v1111
      %v1113 = vmul.f32 %v1107, %v1112
      %v1114 = vpack.c.bf16 %v1113, %v1113
      %v1116 = vunpack.c.l.b16 %v387
      %v1117 = vpack.c.b16 %v1116, %v1116
      %1118 = vrot.lane.b32.xlu0 %v1117, 120
      %v1119 = vpop.permute.xlu0 %1118
      %v1121 = vsel %vm460, %v1114, 0
      %v1124 = vsel %vm777, %v1119, 0
      %1126 = vmatprep.subr.bf16.mxu0 0
      %1127 = vmatpush1.bf16.msra.mxu0 %v1124
      %1128 = vmatprep.subr.bf16.mxu0 0
      %1129 = vmatpush1.bf16.msra.mxu0 0
      %1130 = vmatprep.subr.bf16.mxu0 0
      %1131 = vmatpush1.bf16.msra.mxu0 0
      %1132 = vmatprep.subr.bf16.mxu0 0
      %1133 = vmatpush1.bf16.msra.mxu0 0
      %1134 = vmatprep.subr.bf16.mxu0 0
      %1135 = vmatpush1.bf16.msra.mxu0 0
      %1136 = vmatprep.subr.bf16.mxu0 0
      %1137 = vmatpush1.bf16.msra.mxu0 0
      %1138 = vmatprep.subr.bf16.mxu0 0
      %1139 = vmatpush1.bf16.msra.mxu0 0
      %1140 = vmatprep.subr.bf16.mxu0 0
      %1141 = vmatpush1.bf16.msra.mxu0 0
      %1142 = vmatprep.subr.bf16.mxu0 0
      %1143 = vmatpush1.bf16.msra.mxu0 0
      %1144 = vmatprep.subr.bf16.mxu0 0
      %1145 = vmatpush1.bf16.msra.mxu0 0
      %1146 = vmatprep.subr.bf16.mxu0 0
      %1147 = vmatpush1.bf16.msra.mxu0 0
      %1148 = vmatprep.subr.bf16.mxu0 0
      %1149 = vmatpush1.bf16.msra.mxu0 0
      %1150 = vmatprep.subr.bf16.mxu0 0
      %1151 = vmatpush1.bf16.msra.mxu0 0
      %1152 = vmatprep.subr.bf16.mxu0 0
      %1153 = vmatpush1.bf16.msra.mxu0 0
      %1154 = vmatprep.subr.bf16.mxu0 0
      %1155 = vmatpush1.bf16.msra.mxu0 0
      %1156 = vmatprep.subr.bf16.mxu0 0
      %1157 = vmatpush1.bf16.msra.mxu0 0
      %1158 = vmatprep.mubr.bf16.mxu0 0
      %1159 = vmatmul.mubr.bf16.gmra.mrb[0].mxu0 %v1121
      %v1160 = vpop.f32.mrb[0].mxu0
      %v1161 = vadd.f32 0.0, %v1160
      %v1162 = vpop.f32.mrb[0].mxu0
      %v1163 = vpop.f32.mrb[0].mxu0
      %v1164 = vpop.f32.mrb[0].mxu0
      %1165 = vdwg.mxu0
      %1166 = vrot.lane.b32.xlu0 %v823, 112
      %v1167 = vpop.permute.xlu0 %1166
      %1168 = vrot.lane.b32.xlu0 %v452, 112
      %v1169 = vpop.permute.xlu0 %1168
      %1170 = vrot.lane.b32.xlu0 %v453, 112
      %v1171 = vpop.permute.xlu0 %1170
      %1172 = vrot.lane.b32.xlu0 %v454, 112
      %v1173 = vpop.permute.xlu0 %1172
      %1174 = vrot.lane.b32.xlu0 %v455, 112
      %v1175 = vpop.permute.xlu0 %1174
      %1176 = vrot.lane.b32.xlu0 %v456, 112
      %v1177 = vpop.permute.xlu0 %1176
      %1178 = vrot.lane.b32.xlu0 %v457, 112
      %v1179 = vpop.permute.xlu0 %1178
      %1180 = vrot.lane.b32.xlu0 %v458, 112
      %v1181 = vpop.permute.xlu0 %1180
      %1182 = vrot.lane.b32.xlu0 %v459, 112
      %v1183 = vpop.permute.xlu0 %1182
      %v1185 = vsel %vm460, %v1167, 0
      %v1188 = vsel %vm460, %v1169, 0
      %v1191 = vsel %vm460, %v1171, 0
      %v1194 = vsel %vm460, %v1173, 0
      %v1197 = vsel %vm460, %v1175, 0
      %v1200 = vsel %vm460, %v1177, 0
      %v1203 = vsel %vm460, %v1179, 0
      %v1206 = vsel %vm460, %v1181, 0
      %v1209 = vsel %vm460, %v1183, 0
      %1211 = vmatprep.subr.bf16.mxu0 0
      %1212 = vmatpush1.bf16.xpose.msra.mxu0 %v1188
      %1213 = vmatprep.subr.bf16.mxu0 0
      %1214 = vmatpush1.bf16.xpose.msra.mxu0 %v1191
      %1215 = vmatprep.subr.bf16.mxu0 0
      %1216 = vmatpush1.bf16.xpose.msra.mxu0 %v1194
      %1217 = vmatprep.subr.bf16.mxu0 0
      %1218 = vmatpush1.bf16.xpose.msra.mxu0 %v1197
      %1219 = vmatprep.subr.bf16.mxu0 0
      %1220 = vmatpush1.bf16.xpose.msra.mxu0 %v1200
      %1221 = vmatprep.subr.bf16.mxu0 0
      %1222 = vmatpush1.bf16.xpose.msra.mxu0 %v1203
      %1223 = vmatprep.subr.bf16.mxu0 0
      %1224 = vmatpush1.bf16.xpose.msra.mxu0 %v1206
      %1225 = vmatprep.subr.bf16.mxu0 0
      %1226 = vmatpush1.bf16.xpose.msra.mxu0 %v1209
      %1227 = vmatprep.subr.bf16.mxu0 0
      %1228 = vmatpush1.bf16.xpose.msra.mxu0 0
      %1229 = vmatprep.subr.bf16.mxu0 0
      %1230 = vmatpush1.bf16.xpose.msra.mxu0 0
      %1231 = vmatprep.subr.bf16.mxu0 0
      %1232 = vmatpush1.bf16.xpose.msra.mxu0 0
      %1233 = vmatprep.subr.bf16.mxu0 0
      %1234 = vmatpush1.bf16.xpose.msra.mxu0 0
      %1235 = vmatprep.subr.bf16.mxu0 0
      %1236 = vmatpush1.bf16.xpose.msra.mxu0 0
      %1237 = vmatprep.subr.bf16.mxu0 0
      %1238 = vmatpush1.bf16.xpose.msra.mxu0 0
      %1239 = vmatprep.subr.bf16.mxu0 0
      %1240 = vmatpush1.bf16.xpose.msra.mxu0 0
      %1241 = vmatprep.subr.bf16.mxu0 0
      %1242 = vmatpush1.bf16.xpose.msra.mxu0 0
      %1243 = vmatprep.mubr.bf16.mxu0 0
      %1244 = vmatmul.mubr.bf16.gmra.mrb[0].mxu0 %v1185
      %v1245 = vpop.f32.mrb[0].mxu0
      %v1246 = vadd.f32 0.0, %v1245
      %v1247 = vpop.f32.mrb[0].mxu0
      %v1248 = vpop.f32.mrb[0].mxu0
      %v1249 = vpop.f32.mrb[0].mxu0
      %1250 = vdwg.mxu0
      %1251 = vrot.lane.b32.xlu0 %v911, 112
      %v1252 = vpop.permute.xlu0 %1251
      %1253 = vrot.lane.b32.xlu0 %v560, 112
      %v1254 = vpop.permute.xlu0 %1253
      %1255 = vrot.lane.b32.xlu0 %v561, 112
      %v1256 = vpop.permute.xlu0 %1255
      %1257 = vrot.lane.b32.xlu0 %v562, 112
      %v1258 = vpop.permute.xlu0 %1257
      %1259 = vrot.lane.b32.xlu0 %v563, 112
      %v1260 = vpop.permute.xlu0 %1259
      %1261 = vrot.lane.b32.xlu0 %v564, 112
      %v1262 = vpop.permute.xlu0 %1261
      %1263 = vrot.lane.b32.xlu0 %v565, 112
      %v1264 = vpop.permute.xlu0 %1263
      %1265 = vrot.lane.b32.xlu0 %v566, 112
      %v1266 = vpop.permute.xlu0 %1265
      %1267 = vrot.lane.b32.xlu0 %v567, 112
      %v1268 = vpop.permute.xlu0 %1267
      %v1270 = vsel %vm460, %v1252, 0
      %v1273 = vsel %vm460, %v1254, 0
      %v1276 = vsel %vm460, %v1256, 0
      %v1279 = vsel %vm460, %v1258, 0
      %v1282 = vsel %vm460, %v1260, 0
      %v1285 = vsel %vm460, %v1262, 0
      %v1288 = vsel %vm460, %v1264, 0
      %v1291 = vsel %vm460, %v1266, 0
      %v1294 = vsel %vm460, %v1268, 0
      %1296 = vmatprep.subr.bf16.mxu0 0
      %1297 = vmatpush1.bf16.xpose.msra.mxu0 %v1273
      %1298 = vmatprep.subr.bf16.mxu0 0
      %1299 = vmatpush1.bf16.xpose.msra.mxu0 %v1276
      %1300 = vmatprep.subr.bf16.mxu0 0
      %1301 = vmatpush1.bf16.xpose.msra.mxu0 %v1279
      %1302 = vmatprep.subr.bf16.mxu0 0
      %1303 = vmatpush1.bf16.xpose.msra.mxu0 %v1282
      %1304 = vmatprep.subr.bf16.mxu0 0
      %1305 = vmatpush1.bf16.xpose.msra.mxu0 %v1285
      %1306 = vmatprep.subr.bf16.mxu0 0
      %1307 = vmatpush1.bf16.xpose.msra.mxu0 %v1288
      %1308 = vmatprep.subr.bf16.mxu0 0
      %1309 = vmatpush1.bf16.xpose.msra.mxu0 %v1291
      %1310 = vmatprep.subr.bf16.mxu0 0
      %1311 = vmatpush1.bf16.xpose.msra.mxu0 %v1294
      %1312 = vmatprep.subr.bf16.mxu0 0
      %1313 = vmatpush1.bf16.xpose.msra.mxu0 0
      %1314 = vmatprep.subr.bf16.mxu0 0
      %1315 = vmatpush1.bf16.xpose.msra.mxu0 0
      %1316 = vmatprep.subr.bf16.mxu0 0
      %1317 = vmatpush1.bf16.xpose.msra.mxu0 0
      %1318 = vmatprep.subr.bf16.mxu0 0
      %1319 = vmatpush1.bf16.xpose.msra.mxu0 0
      %1320 = vmatprep.subr.bf16.mxu0 0
      %1321 = vmatpush1.bf16.xpose.msra.mxu0 0
      %1322 = vmatprep.subr.bf16.mxu0 0
      %1323 = vmatpush1.bf16.xpose.msra.mxu0 0
      %1324 = vmatprep.subr.bf16.mxu0 0
      %1325 = vmatpush1.bf16.xpose.msra.mxu0 0
      %1326 = vmatprep.subr.bf16.mxu0 0
      %1327 = vmatpush1.bf16.xpose.msra.mxu0 0
      %1328 = vmatprep.mubr.bf16.mxu0 0
      %1329 = vmatmul.mubr.bf16.gmra.mrb[0].mxu0 %v1270
      %v1330 = vpop.f32.mrb[0].mxu0
      %v1331 = vadd.f32 0.0, %v1330
      %v1332 = vpop.f32.mrb[0].mxu0
      %v1333 = vpop.f32.mrb[0].mxu0
      %v1334 = vpop.f32.mrb[0].mxu0
      %1335 = vdwg.mxu0
      %1337 = vrot.lane.b32.xlu0 %v1246, 127
      %v1338 = vpop.permute.xlu0 %1337
      %v1340 = vsel %vm645, %v1338, %v1246
      %1342 = vrot.lane.b32.xlu0 %v1340, 126
      %v1343 = vpop.permute.xlu0 %1342
      %v1345 = vsel %vm654, %v1343, %v1340
      %1347 = vrot.lane.b32.xlu0 %v1345, 124
      %v1348 = vpop.permute.xlu0 %1347
      %v1350 = vsel %vm663, %v1348, %v1345
      %1352 = vrot.lane.b32.xlu0 %v1331, 127
      %v1353 = vpop.permute.xlu0 %1352
      %v1355 = vsel %vm645, %v1353, %v1331
      %1357 = vrot.lane.b32.xlu0 %v1355, 126
      %v1358 = vpop.permute.xlu0 %1357
      %v1360 = vsel %vm654, %v1358, %v1355
      %1362 = vrot.lane.b32.xlu0 %v1360, 124
      %v1363 = vpop.permute.xlu0 %1362
      %v1365 = vsel %vm663, %v1363, %v1360
      %1366 = vxpose.xlu0.b32.start [1/16] %v1365, 128
      %1367 = vxpose.xlu0.b32.cont [2/16] 0.0, 128
      %1368 = vxpose.xlu0.b32.cont [3/16] 0.0, 128
      %1369 = vxpose.xlu0.b32.cont [4/16] 0.0, 128
      %1370 = vxpose.xlu0.b32.cont [5/16] 0.0, 128
      %1371 = vxpose.xlu0.b32.cont [6/16] 0.0, 128
      %1372 = vxpose.xlu0.b32.cont [7/16] 0.0, 128
      %1373 = vxpose.xlu0.b32.cont [8/16] 0.0, 128
      %1374 = vxpose.xlu0.b32.cont [9/16] 0.0, 128
      %1375 = vxpose.xlu0.b32.cont [10/16] 0.0, 128
      %1376 = vxpose.xlu0.b32.cont [11/16] 0.0, 128
      %1377 = vxpose.xlu0.b32.cont [12/16] 0.0, 128
      %1378 = vxpose.xlu0.b32.cont [13/16] 0.0, 128
      %1379 = vxpose.xlu0.b32.cont [14/16] 0.0, 128
      %1380 = vxpose.xlu0.b32.cont [15/16] 0.0, 128
      %1381 = vxpose.xlu0.b32.end [16/16] 0.0, 128
      %v1382 = vpop.trf.xlu0
      %v1383 = vpop.trf.xlu0
      %v1384 = vpop.trf.xlu0
      %v1385 = vpop.trf.xlu0
      %v1386 = vpop.trf.xlu0
      %v1387 = vpop.trf.xlu0
      %v1388 = vpop.trf.xlu0
      %v1389 = vpop.trf.xlu0
      %v1390 = vpop.trf.xlu0
      %v1391 = vpop.trf.xlu0
      %v1392 = vpop.trf.xlu0
      %v1393 = vpop.trf.xlu0
      %v1394 = vpop.trf.xlu0
      %v1395 = vpop.trf.xlu0
      %v1396 = vpop.trf.xlu0
      %v1397 = vpop.trf.xlu0
      %1398 = vmatprep.subr.bf16.mxu0 0
      %1399 = vmatpush1.bf16.xpose.msra.mxu0 %v1270
      %1400 = vmatprep.subr.bf16.mxu0 0
      %1401 = vmatpush1.bf16.xpose.msra.mxu0 0
      %1402 = vmatprep.subr.bf16.mxu0 0
      %1403 = vmatpush1.bf16.xpose.msra.mxu0 0
      %1404 = vmatprep.subr.bf16.mxu0 0
      %1405 = vmatpush1.bf16.xpose.msra.mxu0 0
      %1406 = vmatprep.subr.bf16.mxu0 0
      %1407 = vmatpush1.bf16.xpose.msra.mxu0 0
      %1408 = vmatprep.subr.bf16.mxu0 0
      %1409 = vmatpush1.bf16.xpose.msra.mxu0 0
      %1410 = vmatprep.subr.bf16.mxu0 0
      %1411 = vmatpush1.bf16.xpose.msra.mxu0 0
      %1412 = vmatprep.subr.bf16.mxu0 0
      %1413 = vmatpush1.bf16.xpose.msra.mxu0 0
      %1414 = vmatprep.subr.bf16.mxu0 0
      %1415 = vmatpush1.bf16.xpose.msra.mxu0 0
      %1416 = vmatprep.subr.bf16.mxu0 0
      %1417 = vmatpush1.bf16.xpose.msra.mxu0 0
      %1418 = vmatprep.subr.bf16.mxu0 0
      %1419 = vmatpush1.bf16.xpose.msra.mxu0 0
      %1420 = vmatprep.subr.bf16.mxu0 0
      %1421 = vmatpush1.bf16.xpose.msra.mxu0 0
      %1422 = vmatprep.subr.bf16.mxu0 0
      %1423 = vmatpush1.bf16.xpose.msra.mxu0 0
      %1424 = vmatprep.subr.bf16.mxu0 0
      %1425 = vmatpush1.bf16.xpose.msra.mxu0 0
      %1426 = vmatprep.subr.bf16.mxu0 0
      %1427 = vmatpush1.bf16.xpose.msra.mxu0 0
      %1428 = vmatprep.subr.bf16.mxu0 0
      %1429 = vmatpush1.bf16.xpose.msra.mxu0 0
      %1430 = vmatprep.mubr.bf16.mxu0 0
      %1431 = vmatmul.mubr.bf16.gmra.mrb[0].mxu0 %v1185
      %v1432 = vpop.f32.mrb[0].mxu0
      %v1433 = vadd.f32 %v1350, %v1432
      %v1434 = vpop.f32.mrb[0].mxu0
      %v1435 = vpop.f32.mrb[0].mxu0
      %v1436 = vpop.f32.mrb[0].mxu0
      %1437 = vdwg.mxu0
      %v1438 = vadd.f32 %v1433, %v1382
      %v1439 = vsel %vm758, -inf, %v1438
      %v1440 = vsel %vm460, %v1439, -inf
      %1441 = vmax.xlane.f32.xlu0 %v1440
      %v1442 = vpop.xlane.xlu0 %1441
      %v1443 = vmax.f32 %v1442, -1e+30
      %v1444 = vsub.f32 %v1439, %v1443
      %v1445 = vmul.f32 %v1444, 1.442695
      %v1446 = vpow.pop %v1445
      %v1447 = vsel %vm460, %v1446, 0.0
      %1448 = vadd.xlane.f32.xlu0 %v1447
      %v1449 = vpop.xlane.xlu0 %1448
      %v1450 = vmax.f32 %v1449, 1e-30
      %v1451 = vrcp.pop %v1450
      %v1452 = vmul.f32 %v1446, %v1451
      %v1453 = vpack.c.bf16 %v1452, %v1452
      %1454 = vrot.lane.b32.xlu0 %v1117, 112
      %v1455 = vpop.permute.xlu0 %1454
      %v1457 = vsel %vm460, %v1453, 0
      %v1460 = vsel %vm777, %v1455, 0
      %1462 = vmatprep.subr.bf16.mxu0 0
      %1463 = vmatpush1.bf16.msra.mxu0 %v1460
      %1464 = vmatprep.subr.bf16.mxu0 0
      %1465 = vmatpush1.bf16.msra.mxu0 0
      %1466 = vmatprep.subr.bf16.mxu0 0
      %1467 = vmatpush1.bf16.msra.mxu0 0
      %1468 = vmatprep.subr.bf16.mxu0 0
      %1469 = vmatpush1.bf16.msra.mxu0 0
      %1470 = vmatprep.subr.bf16.mxu0 0
      %1471 = vmatpush1.bf16.msra.mxu0 0
      %1472 = vmatprep.subr.bf16.mxu0 0
      %1473 = vmatpush1.bf16.msra.mxu0 0
      %1474 = vmatprep.subr.bf16.mxu0 0
      %1475 = vmatpush1.bf16.msra.mxu0 0
      %1476 = vmatprep.subr.bf16.mxu0 0
      %1477 = vmatpush1.bf16.msra.mxu0 0
      %1478 = vmatprep.subr.bf16.mxu0 0
      %1479 = vmatpush1.bf16.msra.mxu0 0
      %1480 = vmatprep.subr.bf16.mxu0 0
      %1481 = vmatpush1.bf16.msra.mxu0 0
      %1482 = vmatprep.subr.bf16.mxu0 0
      %1483 = vmatpush1.bf16.msra.mxu0 0
      %1484 = vmatprep.subr.bf16.mxu0 0
      %1485 = vmatpush1.bf16.msra.mxu0 0
      %1486 = vmatprep.subr.bf16.mxu0 0
      %1487 = vmatpush1.bf16.msra.mxu0 0
      %1488 = vmatprep.subr.bf16.mxu0 0
      %1489 = vmatpush1.bf16.msra.mxu0 0
      %1490 = vmatprep.subr.bf16.mxu0 0
      %1491 = vmatpush1.bf16.msra.mxu0 0
      %1492 = vmatprep.subr.bf16.mxu0 0
      %1493 = vmatpush1.bf16.msra.mxu0 0
      %1494 = vmatprep.mubr.bf16.mxu0 0
      %1495 = vmatmul.mubr.bf16.gmra.mrb[0].mxu0 %v1457
      %v1496 = vpop.f32.mrb[0].mxu0
      %v1497 = vadd.f32 0.0, %v1496
      %v1498 = vpop.f32.mrb[0].mxu0
      %v1499 = vpop.f32.mrb[0].mxu0
      %v1500 = vpop.f32.mrb[0].mxu0
      %1501 = vdwg.mxu0
      %1502 = vrot.lane.b32.xlu0 %v823, 104
      %v1503 = vpop.permute.xlu0 %1502
      %1504 = vrot.lane.b32.xlu0 %v452, 104
      %v1505 = vpop.permute.xlu0 %1504
      %1506 = vrot.lane.b32.xlu0 %v453, 104
      %v1507 = vpop.permute.xlu0 %1506
      %1508 = vrot.lane.b32.xlu0 %v454, 104
      %v1509 = vpop.permute.xlu0 %1508
      %1510 = vrot.lane.b32.xlu0 %v455, 104
      %v1511 = vpop.permute.xlu0 %1510
      %1512 = vrot.lane.b32.xlu0 %v456, 104
      %v1513 = vpop.permute.xlu0 %1512
      %1514 = vrot.lane.b32.xlu0 %v457, 104
      %v1515 = vpop.permute.xlu0 %1514
      %1516 = vrot.lane.b32.xlu0 %v458, 104
      %v1517 = vpop.permute.xlu0 %1516
      %1518 = vrot.lane.b32.xlu0 %v459, 104
      %v1519 = vpop.permute.xlu0 %1518
      %v1521 = vsel %vm460, %v1503, 0
      %v1524 = vsel %vm460, %v1505, 0
      %v1527 = vsel %vm460, %v1507, 0
      %v1530 = vsel %vm460, %v1509, 0
      %v1533 = vsel %vm460, %v1511, 0
      %v1536 = vsel %vm460, %v1513, 0
      %v1539 = vsel %vm460, %v1515, 0
      %v1542 = vsel %vm460, %v1517, 0
      %v1545 = vsel %vm460, %v1519, 0
      %1547 = vmatprep.subr.bf16.mxu0 0
      %1548 = vmatpush1.bf16.xpose.msra.mxu0 %v1524
      %1549 = vmatprep.subr.bf16.mxu0 0
      %1550 = vmatpush1.bf16.xpose.msra.mxu0 %v1527
      %1551 = vmatprep.subr.bf16.mxu0 0
      %1552 = vmatpush1.bf16.xpose.msra.mxu0 %v1530
      %1553 = vmatprep.subr.bf16.mxu0 0
      %1554 = vmatpush1.bf16.xpose.msra.mxu0 %v1533
      %1555 = vmatprep.subr.bf16.mxu0 0
      %1556 = vmatpush1.bf16.xpose.msra.mxu0 %v1536
      %1557 = vmatprep.subr.bf16.mxu0 0
      %1558 = vmatpush1.bf16.xpose.msra.mxu0 %v1539
      %1559 = vmatprep.subr.bf16.mxu0 0
      %1560 = vmatpush1.bf16.xpose.msra.mxu0 %v1542
      %1561 = vmatprep.subr.bf16.mxu0 0
      %1562 = vmatpush1.bf16.xpose.msra.mxu0 %v1545
      %1563 = vmatprep.subr.bf16.mxu0 0
      %1564 = vmatpush1.bf16.xpose.msra.mxu0 0
      %1565 = vmatprep.subr.bf16.mxu0 0
      %1566 = vmatpush1.bf16.xpose.msra.mxu0 0
      %1567 = vmatprep.subr.bf16.mxu0 0
      %1568 = vmatpush1.bf16.xpose.msra.mxu0 0
      %1569 = vmatprep.subr.bf16.mxu0 0
      %1570 = vmatpush1.bf16.xpose.msra.mxu0 0
      %1571 = vmatprep.subr.bf16.mxu0 0
      %1572 = vmatpush1.bf16.xpose.msra.mxu0 0
      %1573 = vmatprep.subr.bf16.mxu0 0
      %1574 = vmatpush1.bf16.xpose.msra.mxu0 0
      %1575 = vmatprep.subr.bf16.mxu0 0
      %1576 = vmatpush1.bf16.xpose.msra.mxu0 0
      %1577 = vmatprep.subr.bf16.mxu0 0
      %1578 = vmatpush1.bf16.xpose.msra.mxu0 0
      %1579 = vmatprep.mubr.bf16.mxu0 0
      %1580 = vmatmul.mubr.bf16.gmra.mrb[0].mxu0 %v1521
      %v1581 = vpop.f32.mrb[0].mxu0
      %v1582 = vadd.f32 0.0, %v1581
      %v1583 = vpop.f32.mrb[0].mxu0
      %v1584 = vpop.f32.mrb[0].mxu0
      %v1585 = vpop.f32.mrb[0].mxu0
      %1586 = vdwg.mxu0
      %1587 = vrot.lane.b32.xlu0 %v911, 104
      %v1588 = vpop.permute.xlu0 %1587
      %1589 = vrot.lane.b32.xlu0 %v560, 104
      %v1590 = vpop.permute.xlu0 %1589
      %1591 = vrot.lane.b32.xlu0 %v561, 104
      %v1592 = vpop.permute.xlu0 %1591
      %1593 = vrot.lane.b32.xlu0 %v562, 104
      %v1594 = vpop.permute.xlu0 %1593
      %1595 = vrot.lane.b32.xlu0 %v563, 104
      %v1596 = vpop.permute.xlu0 %1595
      %1597 = vrot.lane.b32.xlu0 %v564, 104
      %v1598 = vpop.permute.xlu0 %1597
      %1599 = vrot.lane.b32.xlu0 %v565, 104
      %v1600 = vpop.permute.xlu0 %1599
      %1601 = vrot.lane.b32.xlu0 %v566, 104
      %v1602 = vpop.permute.xlu0 %1601
      %1603 = vrot.lane.b32.xlu0 %v567, 104
      %v1604 = vpop.permute.xlu0 %1603
      %v1606 = vsel %vm460, %v1588, 0
      %v1609 = vsel %vm460, %v1590, 0
      %v1612 = vsel %vm460, %v1592, 0
      %v1615 = vsel %vm460, %v1594, 0
      %v1618 = vsel %vm460, %v1596, 0
      %v1621 = vsel %vm460, %v1598, 0
      %v1624 = vsel %vm460, %v1600, 0
      %v1627 = vsel %vm460, %v1602, 0
      %v1630 = vsel %vm460, %v1604, 0
      %1632 = vmatprep.subr.bf16.mxu0 0
      %1633 = vmatpush1.bf16.xpose.msra.mxu0 %v1609
      %1634 = vmatprep.subr.bf16.mxu0 0
      %1635 = vmatpush1.bf16.xpose.msra.mxu0 %v1612
      %1636 = vmatprep.subr.bf16.mxu0 0
      %1637 = vmatpush1.bf16.xpose.msra.mxu0 %v1615
      %1638 = vmatprep.subr.bf16.mxu0 0
      %1639 = vmatpush1.bf16.xpose.msra.mxu0 %v1618
      %1640 = vmatprep.subr.bf16.mxu0 0
      %1641 = vmatpush1.bf16.xpose.msra.mxu0 %v1621
      %1642 = vmatprep.subr.bf16.mxu0 0
      %1643 = vmatpush1.bf16.xpose.msra.mxu0 %v1624
      %1644 = vmatprep.subr.bf16.mxu0 0
      %1645 = vmatpush1.bf16.xpose.msra.mxu0 %v1627
      %1646 = vmatprep.subr.bf16.mxu0 0
      %1647 = vmatpush1.bf16.xpose.msra.mxu0 %v1630
      %1648 = vmatprep.subr.bf16.mxu0 0
      %1649 = vmatpush1.bf16.xpose.msra.mxu0 0
      %1650 = vmatprep.subr.bf16.mxu0 0
      %1651 = vmatpush1.bf16.xpose.msra.mxu0 0
      %1652 = vmatprep.subr.bf16.mxu0 0
      %1653 = vmatpush1.bf16.xpose.msra.mxu0 0
      %1654 = vmatprep.subr.bf16.mxu0 0
      %1655 = vmatpush1.bf16.xpose.msra.mxu0 0
      %1656 = vmatprep.subr.bf16.mxu0 0
      %1657 = vmatpush1.bf16.xpose.msra.mxu0 0
      %1658 = vmatprep.subr.bf16.mxu0 0
      %1659 = vmatpush1.bf16.xpose.msra.mxu0 0
      %1660 = vmatprep.subr.bf16.mxu0 0
      %1661 = vmatpush1.bf16.xpose.msra.mxu0 0
      %1662 = vmatprep.subr.bf16.mxu0 0
      %1663 = vmatpush1.bf16.xpose.msra.mxu0 0
      %1664 = vmatprep.mubr.bf16.mxu0 0
      %1665 = vmatmul.mubr.bf16.gmra.mrb[0].mxu0 %v1606
      %v1666 = vpop.f32.mrb[0].mxu0
      %v1667 = vadd.f32 0.0, %v1666
      %v1668 = vpop.f32.mrb[0].mxu0
      %v1669 = vpop.f32.mrb[0].mxu0
      %v1670 = vpop.f32.mrb[0].mxu0
      %1671 = vdwg.mxu0
      %1673 = vrot.lane.b32.xlu0 %v1582, 127
      %v1674 = vpop.permute.xlu0 %1673
      %v1676 = vsel %vm645, %v1674, %v1582
      %1678 = vrot.lane.b32.xlu0 %v1676, 126
      %v1679 = vpop.permute.xlu0 %1678
      %v1681 = vsel %vm654, %v1679, %v1676
      %1683 = vrot.lane.b32.xlu0 %v1681, 124
      %v1684 = vpop.permute.xlu0 %1683
      %v1686 = vsel %vm663, %v1684, %v1681
      %1688 = vrot.lane.b32.xlu0 %v1667, 127
      %v1689 = vpop.permute.xlu0 %1688
      %v1691 = vsel %vm645, %v1689, %v1667
      %1693 = vrot.lane.b32.xlu0 %v1691, 126
      %v1694 = vpop.permute.xlu0 %1693
      %v1696 = vsel %vm654, %v1694, %v1691
      %1698 = vrot.lane.b32.xlu0 %v1696, 124
      %v1699 = vpop.permute.xlu0 %1698
      %v1701 = vsel %vm663, %v1699, %v1696
      %1702 = vxpose.xlu0.b32.start [1/16] %v1701, 128
      %1703 = vxpose.xlu0.b32.cont [2/16] 0.0, 128
      %1704 = vxpose.xlu0.b32.cont [3/16] 0.0, 128
      %1705 = vxpose.xlu0.b32.cont [4/16] 0.0, 128
      %1706 = vxpose.xlu0.b32.cont [5/16] 0.0, 128
      %1707 = vxpose.xlu0.b32.cont [6/16] 0.0, 128
      %1708 = vxpose.xlu0.b32.cont [7/16] 0.0, 128
      %1709 = vxpose.xlu0.b32.cont [8/16] 0.0, 128
      %1710 = vxpose.xlu0.b32.cont [9/16] 0.0, 128
      %1711 = vxpose.xlu0.b32.cont [10/16] 0.0, 128
      %1712 = vxpose.xlu0.b32.cont [11/16] 0.0, 128
      %1713 = vxpose.xlu0.b32.cont [12/16] 0.0, 128
      %1714 = vxpose.xlu0.b32.cont [13/16] 0.0, 128
      %1715 = vxpose.xlu0.b32.cont [14/16] 0.0, 128
      %1716 = vxpose.xlu0.b32.cont [15/16] 0.0, 128
      %1717 = vxpose.xlu0.b32.end [16/16] 0.0, 128
      %v1718 = vpop.trf.xlu0
      %v1719 = vpop.trf.xlu0
      %v1720 = vpop.trf.xlu0
      %v1721 = vpop.trf.xlu0
      %v1722 = vpop.trf.xlu0
      %v1723 = vpop.trf.xlu0
      %v1724 = vpop.trf.xlu0
      %v1725 = vpop.trf.xlu0
      %v1726 = vpop.trf.xlu0
      %v1727 = vpop.trf.xlu0
      %v1728 = vpop.trf.xlu0
      %v1729 = vpop.trf.xlu0
      %v1730 = vpop.trf.xlu0
      %v1731 = vpop.trf.xlu0
      %v1732 = vpop.trf.xlu0
      %v1733 = vpop.trf.xlu0
      %1734 = vmatprep.subr.bf16.mxu0 0
      %1735 = vmatpush1.bf16.xpose.msra.mxu0 %v1606
      %1736 = vmatprep.subr.bf16.mxu0 0
      %1737 = vmatpush1.bf16.xpose.msra.mxu0 0
      %1738 = vmatprep.subr.bf16.mxu0 0
      %1739 = vmatpush1.bf16.xpose.msra.mxu0 0
      %1740 = vmatprep.subr.bf16.mxu0 0
      %1741 = vmatpush1.bf16.xpose.msra.mxu0 0
      %1742 = vmatprep.subr.bf16.mxu0 0
      %1743 = vmatpush1.bf16.xpose.msra.mxu0 0
      %1744 = vmatprep.subr.bf16.mxu0 0
      %1745 = vmatpush1.bf16.xpose.msra.mxu0 0
      %1746 = vmatprep.subr.bf16.mxu0 0
      %1747 = vmatpush1.bf16.xpose.msra.mxu0 0
      %1748 = vmatprep.subr.bf16.mxu0 0
      %1749 = vmatpush1.bf16.xpose.msra.mxu0 0
      %1750 = vmatprep.subr.bf16.mxu0 0
      %1751 = vmatpush1.bf16.xpose.msra.mxu0 0
      %1752 = vmatprep.subr.bf16.mxu0 0
      %1753 = vmatpush1.bf16.xpose.msra.mxu0 0
      %1754 = vmatprep.subr.bf16.mxu0 0
      %1755 = vmatpush1.bf16.xpose.msra.mxu0 0
      %1756 = vmatprep.subr.bf16.mxu0 0
      %1757 = vmatpush1.bf16.xpose.msra.mxu0 0
      %1758 = vmatprep.subr.bf16.mxu0 0
      %1759 = vmatpush1.bf16.xpose.msra.mxu0 0
      %1760 = vmatprep.subr.bf16.mxu0 0
      %1761 = vmatpush1.bf16.xpose.msra.mxu0 0
      %1762 = vmatprep.subr.bf16.mxu0 0
      %1763 = vmatpush1.bf16.xpose.msra.mxu0 0
      %1764 = vmatprep.subr.bf16.mxu0 0
      %1765 = vmatpush1.bf16.xpose.msra.mxu0 0
      %1766 = vmatprep.mubr.bf16.mxu0 0
      %1767 = vmatmul.mubr.bf16.gmra.mrb[0].mxu0 %v1521
      %v1768 = vpop.f32.mrb[0].mxu0
      %v1769 = vadd.f32 %v1686, %v1768
      %v1770 = vpop.f32.mrb[0].mxu0
      %v1771 = vpop.f32.mrb[0].mxu0
      %v1772 = vpop.f32.mrb[0].mxu0
      %1773 = vdwg.mxu0
      %v1774 = vadd.f32 %v1769, %v1718
      %v1775 = vsel %vm758, -inf, %v1774
      %v1776 = vsel %vm460, %v1775, -inf
      %1777 = vmax.xlane.f32.xlu0 %v1776
      %v1778 = vpop.xlane.xlu0 %1777
      %v1779 = vmax.f32 %v1778, -1e+30
      %v1780 = vsub.f32 %v1775, %v1779
      %v1781 = vmul.f32 %v1780, 1.442695
      %v1782 = vpow.pop %v1781
      %v1783 = vsel %vm460, %v1782, 0.0
      %1784 = vadd.xlane.f32.xlu0 %v1783
      %v1785 = vpop.xlane.xlu0 %1784
      %v1786 = vmax.f32 %v1785, 1e-30
      %v1787 = vrcp.pop %v1786
      %v1788 = vmul.f32 %v1782, %v1787
      %v1789 = vpack.c.bf16 %v1788, %v1788
      %1790 = vrot.lane.b32.xlu0 %v1117, 104
      %v1791 = vpop.permute.xlu0 %1790
      %v1793 = vsel %vm460, %v1789, 0
      %v1796 = vsel %vm777, %v1791, 0
      %1798 = vmatprep.subr.bf16.mxu0 0
      %1799 = vmatpush1.bf16.msra.mxu0 %v1796
      %1800 = vmatprep.subr.bf16.mxu0 0
      %1801 = vmatpush1.bf16.msra.mxu0 0
      %1802 = vmatprep.subr.bf16.mxu0 0
      %1803 = vmatpush1.bf16.msra.mxu0 0
      %1804 = vmatprep.subr.bf16.mxu0 0
      %1805 = vmatpush1.bf16.msra.mxu0 0
      %1806 = vmatprep.subr.bf16.mxu0 0
      %1807 = vmatpush1.bf16.msra.mxu0 0
      %1808 = vmatprep.subr.bf16.mxu0 0
      %1809 = vmatpush1.bf16.msra.mxu0 0
      %1810 = vmatprep.subr.bf16.mxu0 0
      %1811 = vmatpush1.bf16.msra.mxu0 0
      %1812 = vmatprep.subr.bf16.mxu0 0
      %1813 = vmatpush1.bf16.msra.mxu0 0
      %1814 = vmatprep.subr.bf16.mxu0 0
      %1815 = vmatpush1.bf16.msra.mxu0 0
      %1816 = vmatprep.subr.bf16.mxu0 0
      %1817 = vmatpush1.bf16.msra.mxu0 0
      %1818 = vmatprep.subr.bf16.mxu0 0
      %1819 = vmatpush1.bf16.msra.mxu0 0
      %1820 = vmatprep.subr.bf16.mxu0 0
      %1821 = vmatpush1.bf16.msra.mxu0 0
      %1822 = vmatprep.subr.bf16.mxu0 0
      %1823 = vmatpush1.bf16.msra.mxu0 0
      %1824 = vmatprep.subr.bf16.mxu0 0
      %1825 = vmatpush1.bf16.msra.mxu0 0
      %1826 = vmatprep.subr.bf16.mxu0 0
      %1827 = vmatpush1.bf16.msra.mxu0 0
      %1828 = vmatprep.subr.bf16.mxu0 0
      %1829 = vmatpush1.bf16.msra.mxu0 0
      %1830 = vmatprep.mubr.bf16.mxu0 0
      %1831 = vmatmul.mubr.bf16.gmra.mrb[0].mxu0 %v1793
      %v1832 = vpop.f32.mrb[0].mxu0
      %v1833 = vadd.f32 0.0, %v1832
      %v1834 = vpop.f32.mrb[0].mxu0
      %v1835 = vpop.f32.mrb[0].mxu0
      %v1836 = vpop.f32.mrb[0].mxu0
      %1837 = vdwg.mxu0
      %1839 = vrot.lane.b32.xlu0 %v1161, 8
      %v1840 = vpop.permute.xlu0 %1839
      %1843 = vrot.lane.b32.xlu0 %v1497, 16
      %v1844 = vpop.permute.xlu0 %1843
      %1847 = vrot.lane.b32.xlu0 %v1833, 24
      %v1848 = vpop.permute.xlu0 %1847
      %v1850 = vsel %vm460, %v816, %v1840
      %vm1851 = vcmask 130048
      %v1852 = vsel %vm1851, %v1850, %v1844
      %vm1853 = vcmask 195584
      %v1854 = vsel %vm1853, %v1852, %v1848
      %v1855 = vpack.c.bf16 %v1854, %v1854
      %vm1856 = vcmask 257024
      %1857 = vst.msk [vmem:[%s381] sm:$0xf] %vm1856, %v1855
      %p1858 = scmp.lt.s32.totalorder %s21, 1
      %s1859 = scalar_select %p1858, %s21, 1
      %p1860 = scmp.lt.s32.totalorder %s22, 0
      %s1861 = scalar_select %p1860, %s22, 0
      %s1862 = sadd.s32 %s1861, %s1859
      %s1863 = smul.addr %s1862, 4
      %s1864 = scalar_lea.vmem %s6, %s1863
      // Predicated region
      $region45: #{encoder_forward.7} parent=43 // pred_check
        %p1865 = pneg %p211
      $region46: #{encoder_forward.7} parent=43 // pred_check_branch
        %1867 = sbr.rel (%p1865) target = $region48
      $region47: #{encoder_forward.7} parent=43 // pred_region
        _
      $region48: #{encoder_forward.7} parent=43 // pred_fallthru
        _
    $region44: #{encoder_forward.7} parent=5 // pred_fallthru
      _
    %p1868 = scmp.le.s32.totalorder 2, %s12
    // Predicated region
    $region49: #{encoder_forward.7} parent=5 // pred_check
      %p1869 = pneg %p1868
    $region50: #{encoder_forward.7} parent=5 // pred_check_branch
      %1871 = sbr.rel (%p1869) target = $region52
    $region51: #{encoder_forward.7} parent=5 // pred_region
      %s1872 = ssub.s32 %s12, 2
      // Predicated region
      $region53: #{encoder_forward.7} parent=51 // pred_check
        %p1873 = pneg %p217
      $region54: #{encoder_forward.7} parent=51 // pred_check_branch
        %1875 = sbr.rel (%p1873) target = $region56
      $region55: #{encoder_forward.7} parent=51 // pred_region
        %p1876 = scmp.lt.s32.totalorder %s23, 1
        %s1877 = scalar_select %p1876, %s23, 1
        %p1878 = scmp.lt.s32.totalorder %s24, 0
        %s1879 = scalar_select %p1878, %s24, 0
        %s1880 = sadd.s32 %s1879, %s1877
        %s1881 = smul.addr %s1880, 4
        %s1882 = scalar_lea.vmem %s6, %s1881
      $region56: #{encoder_forward.7} parent=51 // pred_fallthru
        _
    $region52: #{encoder_forward.7} parent=5 // pred_fallthru
      _
  $region6: #{encoder_forward.7} parent=0 // loop_footer
    %s16 = sadd.s32 1, %s12
  $region7: #{encoder_forward.7} parent=0 // loop_footer_branch
    %11 = sbr.rel target = $region3
  $region8: #{encoder_forward.7} parent=0 // loop_exit
    _

</llo_original>
